<compile_context>
chip_gen: v7x
topology: tpu7x:2x2x1
jax: 0.10.0
libtpu: 0.0.40
codegen_flags: <defaults>
</compile_context>

<pallas_src>
import jax
import jax.numpy as jnp
from jax.experimental import pallas as pl
from jax.experimental.pallas import tpu as pltpu

# ---------------- synthetic BERT config (small) ----------------
VOCAB = 100
HIDDEN = 32
N_LAYERS = 2
N_HEADS = 2
HEAD_DIM = HIDDEN // N_HEADS
INTERMEDIATE = 64
MAX_POS = 16
NUM_CLASSES = 5
LN_EPS = 1e-12
LANE = 128            # lane-dense padded width for classifier output

BATCH = 2
SEQ = 8


def _layer_norm(x, g, b):
    mu = jnp.mean(x, axis=-1, keepdims=True)
    var = jnp.mean((x - mu) ** 2, axis=-1, keepdims=True)
    return (x - mu) * jax.lax.rsqrt(var + LN_EPS) * g + b


def _gelu(x):
    # tanh-approximate GELU (EUP-friendly).
    # TODO(synk): HF BERT default is erf-based gelu; tanh approximation used here.
    return 0.5 * x * (1.0 + jnp.tanh(0.7978845608028654 * (x + 0.044715 * x * x * x)))


# ---------------- Pallas kernel (whole batch in one grid step) ----------------
def bert_nlu_kernel(lengths_ref,                      # SMEM (B,) int32 (scalar prefetch)
                    x_ref,                            # (B*S, H) flat embedding rows
                    emb_g_ref, emb_b_ref,             # (1, H)
                    wqkv_ref, bqkv_ref,               # (L, H, 3H), (L, 1, 3H)
                    wo_ref, bo_ref,                   # (L, H, H),  (L, 1, H)
                    ln1_g_ref, ln1_b_ref,             # (L, 1, H)
                    wi_ref, bi_ref,                   # (L, H, I),  (L, 1, I)
                    wf_ref, bf_ref,                   # (L, I, H),  (L, 1, H)
                    ln2_g_ref, ln2_b_ref,             # (L, 1, H)
                    pool_w_ref, pool_b_ref,           # (H, H), (1, H)
                    cls_w_ref, cls_b_ref,             # (H, LANE), (1, LANE)
                    logits_ref):                      # (B, LANE)
    S, H, NH, HD = SEQ, HIDDEN, N_HEADS, HEAD_DIM

    # per-sequence key-position bias from the SMEM lengths, built ONCE and reused
    # across all layers / heads.
    kpos = jax.lax.broadcasted_iota(jnp.int32, (1, S), 1)
    neg_bias = [jnp.where(kpos < lengths_ref[b], 0.0, -10000.0).astype(jnp.float32)
                for b in range(BATCH)]                                   # each (1, S)

    # embedding LayerNorm over all B*S rows at once
    x = _layer_norm(x_ref[...], emb_g_ref[...], emb_b_ref[...])          # (B*S, H)

    for l in range(N_LAYERS):
        # fused QKV projection: one (B*S,H)x(H,3H) MXU matmul
        # (attention scale already folded into Wq/bq at parameter-prep time).
        qkv = jnp.dot(x, wqkv_ref[l], preferred_element_type=jnp.float32) + bqkv_ref[l]

        # attention: static per-sequence row slices and per-head lane slices,
        # all plain 2-D contractions (no reshape/transpose relayouts).
        ctx_rows = []
        for b in range(BATCH):
            r0, r1 = b * S, (b + 1) * S
            head_ctx = []
            for h in range(NH):
                c0 = h * HD
                qs = qkv[r0:r1, 0 * H + c0:0 * H + c0 + HD]               # (S, HD)
                ks = qkv[r0:r1, 1 * H + c0:1 * H + c0 + HD]               # (S, HD)
                vs = qkv[r0:r1, 2 * H + c0:2 * H + c0 + HD]               # (S, HD)
                # 'qd,kd->qk' without materializing a transpose
                scores = jax.lax.dot_general(
                    qs, ks, (((1,), (1,)), ((), ())),
                    preferred_element_type=jnp.float32) + neg_bias[b]     # (S, S)
                scores = scores - jnp.max(scores, axis=-1, keepdims=True)
                p = jnp.exp(scores)
                p = p / jnp.sum(p, axis=-1, keepdims=True)                 # exact softmax
                head_ctx.append(jnp.dot(p, vs,
                                        preferred_element_type=jnp.float32))  # (S, HD)
            ctx_rows.append(jnp.concatenate(head_ctx, axis=-1))           # (S, H)
        ctx = jnp.concatenate(ctx_rows, axis=0)                           # (B*S, H)

        attn_out = jnp.dot(ctx, wo_ref[l], preferred_element_type=jnp.float32) + bo_ref[l]
        x = _layer_norm(x + attn_out, ln1_g_ref[l], ln1_b_ref[l])

        hmid = _gelu(jnp.dot(x, wi_ref[l], preferred_element_type=jnp.float32) + bi_ref[l])
        ffn = jnp.dot(hmid, wf_ref[l], preferred_element_type=jnp.float32) + bf_ref[l]
        x = _layer_norm(x + ffn, ln2_g_ref[l], ln2_b_ref[l])

    # BERT pooler: tanh(W * x[CLS] + b) on every sequence's [CLS] row at once,
    # then classifier (Dropout(0.3) is identity at eval).
    cls_rows = jnp.concatenate([x[b * S:b * S + 1, :] for b in range(BATCH)], axis=0)  # (B, H)
    pooled = jnp.tanh(jnp.dot(cls_rows, pool_w_ref[...],
                              preferred_element_type=jnp.float32) + pool_b_ref[...])
    logits_ref[...] = (jnp.dot(pooled, cls_w_ref[...],
                               preferred_element_type=jnp.float32) + cls_b_ref[...])   # (B, LANE)


# ---------------- one-time weight preparation (hoisted out of forward) ----------------
def prepare_weights(params):
    """Fuse / pad / reshape weights once at parameter-load time."""
    H = HIDDEN
    scale = 1.0 / jnp.sqrt(jnp.float32(HEAD_DIM))
    # fuse Q/K/V into one (H, 3H) weight; fold 1/sqrt(head_dim) into Wq/bq
    wqkv = jnp.concatenate([params['wq'] * scale, params['wk'], params['wv']], axis=-1)
    bqkv = jnp.concatenate([params['bq'] * scale, params['bk'], params['bv']],
                           axis=-1)[:, None, :]                           # (L, 1, 3H)
    # lane-dense classifier head: pad out_features 5 -> 128 (sliced back in wrapper)
    cls_w_pad = jnp.zeros((H, LANE), jnp.float32).at[:, :NUM_CLASSES].set(params['cls_w'])
    cls_b_pad = jnp.zeros((1, LANE), jnp.float32).at[:, :NUM_CLASSES].set(params['cls_b'])

    r3 = lambda a: a[:, None, :]   # (L, X) -> (L, 1, X) for clean 2-D broadcast in-kernel
    return dict(
        word_emb=params['word_emb'], pos_emb=params['pos_emb'], type_emb=params['type_emb'],
        emb_g=params['emb_ln_g'], emb_b=params['emb_ln_b'],
        wqkv=wqkv, bqkv=bqkv,
        wo=params['wo'], bo=r3(params['bo']),
        ln1_g=r3(params['ln1_g']), ln1_b=r3(params['ln1_b']),
        wi=params['wi'], bi=r3(params['bi']),
        wf=params['wf'], bf=r3(params['bf']),
        ln2_g=r3(params['ln2_g']), ln2_b=r3(params['ln2_b']),
        pool_w=params['pool_w'], pool_b=params['pool_b'],
        cls_w=cls_w_pad, cls_b=cls_b_pad,
    )


# ---------------- wrapper ----------------
def bert_nlu_forward(w, input_text, text_lengths):
    B, S = input_text.shape
    H, I, L = HIDDEN, INTERMEDIATE, N_LAYERS
    R = B * S

    # embedding gather stays in plain JAX (data-dependent gather); flatten to rows
    x = (jnp.take(w['word_emb'], input_text, axis=0)
         + w['pos_emb'][None, :S, :]
         + w['type_emb'][0][None, None, :]).reshape(R, H)                 # (B*S, H)

    ins = [x,
           w['emb_g'], w['emb_b'],
           w['wqkv'], w['bqkv'],
           w['wo'], w['bo'],
           w['ln1_g'], w['ln1_b'],
           w['wi'], w['bi'],
           w['wf'], w['bf'],
           w['ln2_g'], w['ln2_b'],
           w['pool_w'], w['pool_b'],
           w['cls_w'], w['cls_b']]

    def full_block(a):
        # whole array VMEM-resident for the single grid step
        zeros = (0,) * a.ndim
        return pl.BlockSpec(a.shape, lambda i, lens, _z=zeros: _z)

    # advisory cost estimate so XLA schedules the custom call sensibly
    mm_flops = L * (2 * R * H * 3 * H + 2 * R * H * H + 2 * R * H * I + 2 * R * I * H)
    attn_flops = L * B * N_HEADS * (4 * S * S * HEAD_DIM)
    head_flops = 2 * B * H * H + 2 * B * H * LANE
    transcendentals = L * B * N_HEADS * S * S + L * R * I + B * H
    bytes_accessed = sum(int(a.size) * a.dtype.itemsize for a in ins) + B * LANE * 4 + B * 4
    cost = pl.CostEstimate(flops=mm_flops + attn_flops + head_flops,
                           transcendentals=transcendentals,
                           bytes_accessed=bytes_accessed)

    # TODO(synk): at real BERT-base scale, add an "arbitrary" layer grid axis and
    # stream per-layer weights as bf16 with an explicit vmem_limit_bytes (f32
    # double-buffered layers fit v5e/v6e's 128 MiB but not v7x's 64 MiB VMEM).
    out = pl.pallas_call(
        bert_nlu_kernel,
        out_shape=jax.ShapeDtypeStruct((B, LANE), jnp.float32),
        grid_spec=pltpu.PrefetchScalarGridSpec(
            num_scalar_prefetch=1,
            grid=(1,),                                   # whole batch in one grid step
            in_specs=[full_block(a) for a in ins],
            out_specs=pl.BlockSpec((B, LANE), lambda i, lens: (0, 0)),
        ),
        cost_estimate=cost,
    )(text_lengths.astype(jnp.int32), *ins)

    return out[:, :NUM_CLASSES]


# ---------------- pure-JAX reference (for correctness check) ----------------
def bert_nlu_reference(params, input_text, text_lengths):
    B, S = input_text.shape
    x = (jnp.take(params['word_emb'], input_text, axis=0)
         + params['pos_emb'][None, :S, :]
         + params['type_emb'][0][None, None, :])
    mask = (jnp.arange(S)[None, :] < text_lengths[:, None]).astype(jnp.float32)
    neg_bias = (1.0 - mask) * -10000.0

    x = _layer_norm(x, params['emb_ln_g'], params['emb_ln_b'])
    for l in range(N_LAYERS):
        q = jnp.einsum('bsh,hd->bsd', x, params['wq'][l]) + params['bq'][l]
        k = jnp.einsum('bsh,hd->bsd', x, params['wk'][l]) + params['bk'][l]
        v = jnp.einsum('bsh,hd->bsd', x, params['wv'][l]) + params['bv'][l]
        ctx_heads = []
        for h in range(N_HEADS):
            sl = slice(h * HEAD_DIM, (h + 1) * HEAD_DIM)
            scores = jnp.einsum('bqd,bkd->bqk', q[:, :, sl], k[:, :, sl]) / jnp.sqrt(
                jnp.float32(HEAD_DIM))
            scores = scores + neg_bias[:, None, :]
            p = jax.nn.softmax(scores, axis=-1)
            ctx_heads.append(jnp.einsum('bqk,bkd->bqd', p, v[:, :, sl]))
        ctx = jnp.concatenate(ctx_heads, axis=-1)
        attn_out = jnp.einsum('bsh,hd->bsd', ctx, params['wo'][l]) + params['bo'][l]
        x = _layer_norm(x + attn_out, params['ln1_g'][l], params['ln1_b'][l])
        hmid = _gelu(jnp.einsum('bsh,hi->bsi', x, params['wi'][l]) + params['bi'][l])
        ffn = jnp.einsum('bsi,ih->bsh', hmid, params['wf'][l]) + params['bf'][l]
        x = _layer_norm(x + ffn, params['ln2_g'][l], params['ln2_b'][l])
    pooled = jnp.tanh(x[:, 0, :] @ params['pool_w'] + params['pool_b'])
    return pooled @ params['cls_w'] + params['cls_b']


# ---------------- deterministic param init ----------------
def init_params(key):
    def nrm(k, shape, scale=0.02):
        return scale * jax.random.normal(k, shape, dtype=jnp.float32)

    keys = iter(jax.random.split(key, 16))
    L, H, I, C = N_LAYERS, HIDDEN, INTERMEDIATE, NUM_CLASSES
    return dict(
        word_emb=nrm(next(keys), (VOCAB, H)),
        pos_emb=nrm(next(keys), (MAX_POS, H)),
        type_emb=nrm(next(keys), (2, H)),
        emb_ln_g=jnp.ones((1, H), jnp.float32),
        emb_ln_b=jnp.zeros((1, H), jnp.float32),
        wq=nrm(next(keys), (L, H, H)), bq=jnp.zeros((L, H), jnp.float32),
        wk=nrm(next(keys), (L, H, H)), bk=jnp.zeros((L, H), jnp.float32),
        wv=nrm(next(keys), (L, H, H)), bv=jnp.zeros((L, H), jnp.float32),
        wo=nrm(next(keys), (L, H, H)), bo=jnp.zeros((L, H), jnp.float32),
        ln1_g=jnp.ones((L, H), jnp.float32), ln1_b=jnp.zeros((L, H), jnp.float32),
        wi=nrm(next(keys), (L, H, I)), bi=jnp.zeros((L, I), jnp.float32),
        wf=nrm(next(keys), (L, I, H)), bf=jnp.zeros((L, H), jnp.float32),
        ln2_g=jnp.ones((L, H), jnp.float32), ln2_b=jnp.zeros((L, H), jnp.float32),
        pool_w=nrm(next(keys), (H, H)), pool_b=jnp.zeros((1, H), jnp.float32),
        cls_w=nrm(next(keys), (H, C)), cls_b=jnp.zeros((1, C), jnp.float32),
    )


if __name__ == "__main__":
    root = jax.random.PRNGKey(0)
    k_params, k_ids = jax.random.split(root)
    params = init_params(k_params)
    prepped = prepare_weights(params)        # one-time weight fusion/padding (hoisted)

    input_text = jax.random.randint(k_ids, (BATCH, SEQ), 0, VOCAB, dtype=jnp.int32)
    text_lengths = jnp.array([SEQ, 5], dtype=jnp.int32)

    logits = bert_nlu_forward(prepped, input_text, text_lengths)
    logits = jax.block_until_ready(logits)

    ref = bert_nlu_reference(params, input_text, text_lengths)
    assert logits.shape == (BATCH, NUM_CLASSES)
    assert jnp.allclose(logits, ref, rtol=1e-3, atol=1e-3), (logits, ref)

    print("KERNEL_OK")
</pallas_src>

<mosaic_0001>
module attributes {stable_mosaic.version = 11 : i64} {
  func.func @bert_nlu_kernel(%arg0: i32, %arg1: memref<2xi32, #tpu.memory_space<smem>>, %arg2: memref<16x32xf32, #tpu.memory_space<vmem>>, %arg3: memref<1x32xf32, #tpu.memory_space<vmem>>, %arg4: memref<1x32xf32, #tpu.memory_space<vmem>>, %arg5: memref<2x32x96xf32, #tpu.memory_space<vmem>>, %arg6: memref<2x1x96xf32, #tpu.memory_space<vmem>>, %arg7: memref<2x32x32xf32, #tpu.memory_space<vmem>>, %arg8: memref<2x1x32xf32, #tpu.memory_space<vmem>>, %arg9: memref<2x1x32xf32, #tpu.memory_space<vmem>>, %arg10: memref<2x1x32xf32, #tpu.memory_space<vmem>>, %arg11: memref<2x32x64xf32, #tpu.memory_space<vmem>>, %arg12: memref<2x1x64xf32, #tpu.memory_space<vmem>>, %arg13: memref<2x64x32xf32, #tpu.memory_space<vmem>>, %arg14: memref<2x1x32xf32, #tpu.memory_space<vmem>>, %arg15: memref<2x1x32xf32, #tpu.memory_space<vmem>>, %arg16: memref<2x1x32xf32, #tpu.memory_space<vmem>>, %arg17: memref<32x32xf32, #tpu.memory_space<vmem>>, %arg18: memref<1x32xf32, #tpu.memory_space<vmem>>, %arg19: memref<32x128xf32, #tpu.memory_space<vmem>>, %arg20: memref<1x128xf32, #tpu.memory_space<vmem>>, %arg21: memref<2x128xf32, #tpu.memory_space<vmem>>) attributes {dimension_semantics = [#tpu.dimension_semantics<arbitrary>], iteration_bounds = array<i64: 1>, scalar_prefetch = 1 : i64, scratch_operands = 0 : i64, tpu.core_type = #tpu.core_type<tc>, window_params = [{pipeline_mode = #tpu.pipeline_mode<synchronous>, transform_indices = @transform_0, window_bounds = array<i64: 16, 32>}, {pipeline_mode = #tpu.pipeline_mode<synchronous>, transform_indices = @transform_1, window_bounds = array<i64: 1, 32>}, {pipeline_mode = #tpu.pipeline_mode<synchronous>, transform_indices = @transform_2, window_bounds = array<i64: 1, 32>}, {pipeline_mode = #tpu.pipeline_mode<synchronous>, transform_indices = @transform_3, window_bounds = array<i64: 2, 32, 96>}, {pipeline_mode = #tpu.pipeline_mode<synchronous>, transform_indices = @transform_4, window_bounds = array<i64: 2, 1, 96>}, {pipeline_mode = #tpu.pipeline_mode<synchronous>, transform_indices = @transform_5, window_bounds = array<i64: 2, 32, 32>}, {pipeline_mode = #tpu.pipeline_mode<synchronous>, transform_indices = @transform_6, window_bounds = array<i64: 2, 1, 32>}, {pipeline_mode = #tpu.pipeline_mode<synchronous>, transform_indices = @transform_7, window_bounds = array<i64: 2, 1, 32>}, {pipeline_mode = #tpu.pipeline_mode<synchronous>, transform_indices = @transform_8, window_bounds = array<i64: 2, 1, 32>}, {pipeline_mode = #tpu.pipeline_mode<synchronous>, transform_indices = @transform_9, window_bounds = array<i64: 2, 32, 64>}, {pipeline_mode = #tpu.pipeline_mode<synchronous>, transform_indices = @transform_10, window_bounds = array<i64: 2, 1, 64>}, {pipeline_mode = #tpu.pipeline_mode<synchronous>, transform_indices = @transform_11, window_bounds = array<i64: 2, 64, 32>}, {pipeline_mode = #tpu.pipeline_mode<synchronous>, transform_indices = @transform_12, window_bounds = array<i64: 2, 1, 32>}, {pipeline_mode = #tpu.pipeline_mode<synchronous>, transform_indices = @transform_13, window_bounds = array<i64: 2, 1, 32>}, {pipeline_mode = #tpu.pipeline_mode<synchronous>, transform_indices = @transform_14, window_bounds = array<i64: 2, 1, 32>}, {pipeline_mode = #tpu.pipeline_mode<synchronous>, transform_indices = @transform_15, window_bounds = array<i64: 32, 32>}, {pipeline_mode = #tpu.pipeline_mode<synchronous>, transform_indices = @transform_16, window_bounds = array<i64: 1, 32>}, {pipeline_mode = #tpu.pipeline_mode<synchronous>, transform_indices = @transform_17, window_bounds = array<i64: 32, 128>}, {pipeline_mode = #tpu.pipeline_mode<synchronous>, transform_indices = @transform_18, window_bounds = array<i64: 1, 128>}, {pipeline_mode = #tpu.pipeline_mode<synchronous>, transform_indices = @transform_19, window_bounds = array<i64: 2, 128>}]} {
    %0 = tpu.iota {dimensions = array<i32: 1>} : vector<1x8xi32>
    %c0 = arith.constant 0 : index
    %1 = memref.load %arg1[%c0] : memref<2xi32, #tpu.memory_space<smem>>
    %2 = vector.broadcast %1 : i32 to vector<1x8xi32>
    %3 = arith.cmpi slt, %0, %2 : vector<1x8xi32>
    %cst = arith.constant 0.000000e+00 : f32
    %cst_0 = arith.constant -1.000000e+04 : f32
    %4 = vector.broadcast %cst : f32 to vector<1x8xf32>
    %5 = vector.broadcast %cst_0 : f32 to vector<1x8xf32>
    %6 = arith.select %3, %4, %5 : vector<1x8xi1>, vector<1x8xf32>
    %c1 = arith.constant 1 : index
    %7 = memref.load %arg1[%c1] : memref<2xi32, #tpu.memory_space<smem>>
    %8 = vector.broadcast %7 : i32 to vector<1x8xi32>
    %9 = arith.cmpi slt, %0, %8 : vector<1x8xi32>
    %cst_1 = arith.constant 0.000000e+00 : f32
    %cst_2 = arith.constant -1.000000e+04 : f32
    %10 = vector.broadcast %cst_1 : f32 to vector<1x8xf32>
    %11 = vector.broadcast %cst_2 : f32 to vector<1x8xf32>
    %12 = arith.select %9, %10, %11 : vector<1x8xi1>, vector<1x8xf32>
    %c0_3 = arith.constant 0 : index
    %c0_4 = arith.constant 0 : index
    %13 = vector.load %arg2[%c0_3, %c0_4] : memref<16x32xf32, #tpu.memory_space<vmem>>, vector<16x32xf32>
    %c0_5 = arith.constant 0 : index
    %c0_6 = arith.constant 0 : index
    %14 = vector.load %arg3[%c0_5, %c0_6] : memref<1x32xf32, #tpu.memory_space<vmem>>, vector<1x32xf32>
    %c0_7 = arith.constant 0 : index
    %c0_8 = arith.constant 0 : index
    %15 = vector.load %arg4[%c0_7, %c0_8] : memref<1x32xf32, #tpu.memory_space<vmem>>, vector<1x32xf32>
    %cst_9 = arith.constant dense<0.000000e+00> : vector<16xf32>
    %16 = vector.multi_reduction <add>, %13, %cst_9 [1] : vector<16x32xf32> to vector<16xf32>
    %17 = vector.shape_cast %16 : vector<16xf32> to vector<16x1xf32>
    %cst_10 = arith.constant 3.200000e+01 : f32
    %18 = vector.broadcast %cst_10 : f32 to vector<16x1xf32>
    %19 = arith.divf %17, %18 : vector<16x1xf32>
    %20 = vector.broadcast %19 : vector<16x1xf32> to vector<16x32xf32>
    %21 = arith.subf %13, %20 : vector<16x32xf32>
    %22 = arith.mulf %21, %21 : vector<16x32xf32>
    %cst_11 = arith.constant dense<0.000000e+00> : vector<16xf32>
    %23 = vector.multi_reduction <add>, %22, %cst_11 [1] : vector<16x32xf32> to vector<16xf32>
    %24 = vector.shape_cast %23 : vector<16xf32> to vector<16x1xf32>
    %cst_12 = arith.constant 3.200000e+01 : f32
    %25 = vector.broadcast %cst_12 : f32 to vector<16x1xf32>
    %26 = arith.divf %24, %25 : vector<16x1xf32>
    %27 = vector.broadcast %19 : vector<16x1xf32> to vector<16x32xf32>
    %28 = arith.subf %13, %27 : vector<16x32xf32>
    %cst_13 = arith.constant 9.99999996E-13 : f32
    %29 = vector.broadcast %cst_13 : f32 to vector<16x1xf32>
    %30 = arith.addf %26, %29 : vector<16x1xf32>
    %31 = math.rsqrt %30 : vector<16x1xf32>
    %32 = vector.broadcast %31 : vector<16x1xf32> to vector<16x32xf32>
    %33 = arith.mulf %28, %32 : vector<16x32xf32>
    %34 = vector.broadcast %14 : vector<1x32xf32> to vector<16x32xf32>
    %35 = arith.mulf %33, %34 : vector<16x32xf32>
    %36 = vector.broadcast %15 : vector<1x32xf32> to vector<16x32xf32>
    %37 = arith.addf %35, %36 : vector<16x32xf32>
    %c0_14 = arith.constant 0 : index
    %c0_15 = arith.constant 0 : index
    %c0_16 = arith.constant 0 : index
    %38 = vector.load %arg5[%c0_14, %c0_15, %c0_16] : memref<2x32x96xf32, #tpu.memory_space<vmem>>, vector<1x32x96xf32>
    %39 = vector.shape_cast %38 : vector<1x32x96xf32> to vector<32x96xf32>
    %cst_17 = arith.constant dense<0.000000e+00> : vector<16x96xf32>
    %40 = tpu.matmul %37, %39, %cst_17 {dimension_numbers = #tpu.dot_dimension_numbers<[1], [0], [0], [1], [0, 0, 1, 1], [], []>} : vector<16x32xf32>, vector<32x96xf32>, vector<16x96xf32> -> vector<16x96xf32>
    %c0_18 = arith.constant 0 : index
    %c0_19 = arith.constant 0 : index
    %c0_20 = arith.constant 0 : index
    %41 = vector.load %arg6[%c0_18, %c0_19, %c0_20] : memref<2x1x96xf32, #tpu.memory_space<vmem>>, vector<1x1x96xf32>
    %42 = vector.shape_cast %41 : vector<1x1x96xf32> to vector<1x96xf32>
    %43 = vector.broadcast %42 : vector<1x96xf32> to vector<16x96xf32>
    %44 = arith.addf %40, %43 : vector<16x96xf32>
    %45 = vector.extract_strided_slice %44 {offsets = [0, 0], sizes = [8, 16], strides = [1, 1]} : vector<16x96xf32> to vector<8x16xf32>
    %46 = vector.extract_strided_slice %44 {offsets = [0, 32], sizes = [8, 16], strides = [1, 1]} : vector<16x96xf32> to vector<8x16xf32>
    %47 = vector.extract_strided_slice %44 {offsets = [0, 64], sizes = [8, 16], strides = [1, 1]} : vector<16x96xf32> to vector<8x16xf32>
    %cst_21 = arith.constant dense<0.000000e+00> : vector<8x8xf32>
    %48 = tpu.matmul %45, %46, %cst_21 {dimension_numbers = #tpu.dot_dimension_numbers<[1], [1], [0], [0], [0, 0, 1, 0], [], []>} : vector<8x16xf32>, vector<8x16xf32>, vector<8x8xf32> -> vector<8x8xf32>
    %49 = vector.broadcast %6 : vector<1x8xf32> to vector<8x8xf32>
    %50 = arith.addf %48, %49 : vector<8x8xf32>
    %cst_22 = arith.constant dense<0xFF800000> : vector<8xf32>
    %51 = vector.multi_reduction <maximumf>, %50, %cst_22 [1] : vector<8x8xf32> to vector<8xf32>
    %52 = vector.shape_cast %51 : vector<8xf32> to vector<8x1xf32>
    %53 = vector.broadcast %52 : vector<8x1xf32> to vector<8x8xf32>
    %54 = arith.subf %50, %53 : vector<8x8xf32>
    %55 = math.exp %54 : vector<8x8xf32>
    %cst_23 = arith.constant dense<0.000000e+00> : vector<8xf32>
    %56 = vector.multi_reduction <add>, %55, %cst_23 [1] : vector<8x8xf32> to vector<8xf32>
    %57 = vector.shape_cast %56 : vector<8xf32> to vector<8x1xf32>
    %58 = vector.broadcast %57 : vector<8x1xf32> to vector<8x8xf32>
    %59 = arith.divf %55, %58 : vector<8x8xf32>
    %cst_24 = arith.constant dense<0.000000e+00> : vector<8x16xf32>
    %60 = tpu.matmul %59, %47, %cst_24 {dimension_numbers = #tpu.dot_dimension_numbers<[1], [0], [0], [1], [0, 0, 1, 1], [], []>} : vector<8x8xf32>, vector<8x16xf32>, vector<8x16xf32> -> vector<8x16xf32>
    %61 = vector.extract_strided_slice %44 {offsets = [0, 16], sizes = [8, 16], strides = [1, 1]} : vector<16x96xf32> to vector<8x16xf32>
    %62 = vector.extract_strided_slice %44 {offsets = [0, 48], sizes = [8, 16], strides = [1, 1]} : vector<16x96xf32> to vector<8x16xf32>
    %63 = vector.extract_strided_slice %44 {offsets = [0, 80], sizes = [8, 16], strides = [1, 1]} : vector<16x96xf32> to vector<8x16xf32>
    %cst_25 = arith.constant dense<0.000000e+00> : vector<8x8xf32>
    %64 = tpu.matmul %61, %62, %cst_25 {dimension_numbers = #tpu.dot_dimension_numbers<[1], [1], [0], [0], [0, 0, 1, 0], [], []>} : vector<8x16xf32>, vector<8x16xf32>, vector<8x8xf32> -> vector<8x8xf32>
    %65 = vector.broadcast %6 : vector<1x8xf32> to vector<8x8xf32>
    %66 = arith.addf %64, %65 : vector<8x8xf32>
    %cst_26 = arith.constant dense<0xFF800000> : vector<8xf32>
    %67 = vector.multi_reduction <maximumf>, %66, %cst_26 [1] : vector<8x8xf32> to vector<8xf32>
    %68 = vector.shape_cast %67 : vector<8xf32> to vector<8x1xf32>
    %69 = vector.broadcast %68 : vector<8x1xf32> to vector<8x8xf32>
    %70 = arith.subf %66, %69 : vector<8x8xf32>
    %71 = math.exp %70 : vector<8x8xf32>
    %cst_27 = arith.constant dense<0.000000e+00> : vector<8xf32>
    %72 = vector.multi_reduction <add>, %71, %cst_27 [1] : vector<8x8xf32> to vector<8xf32>
    %73 = vector.shape_cast %72 : vector<8xf32> to vector<8x1xf32>
    %74 = vector.broadcast %73 : vector<8x1xf32> to vector<8x8xf32>
    %75 = arith.divf %71, %74 : vector<8x8xf32>
    %cst_28 = arith.constant dense<0.000000e+00> : vector<8x16xf32>
    %76 = tpu.matmul %75, %63, %cst_28 {dimension_numbers = #tpu.dot_dimension_numbers<[1], [0], [0], [1], [0, 0, 1, 1], [], []>} : vector<8x8xf32>, vector<8x16xf32>, vector<8x16xf32> -> vector<8x16xf32>
    %77 = tpu.concatenate %60, %76 in 1 : vector<8x16xf32>, vector<8x16xf32> -> vector<8x32xf32>
    %78 = vector.extract_strided_slice %44 {offsets = [8, 0], sizes = [8, 16], strides = [1, 1]} : vector<16x96xf32> to vector<8x16xf32>
    %79 = vector.extract_strided_slice %44 {offsets = [8, 32], sizes = [8, 16], strides = [1, 1]} : vector<16x96xf32> to vector<8x16xf32>
    %80 = vector.extract_strided_slice %44 {offsets = [8, 64], sizes = [8, 16], strides = [1, 1]} : vector<16x96xf32> to vector<8x16xf32>
    %cst_29 = arith.constant dense<0.000000e+00> : vector<8x8xf32>
    %81 = tpu.matmul %78, %79, %cst_29 {dimension_numbers = #tpu.dot_dimension_numbers<[1], [1], [0], [0], [0, 0, 1, 0], [], []>} : vector<8x16xf32>, vector<8x16xf32>, vector<8x8xf32> -> vector<8x8xf32>
    %82 = vector.broadcast %12 : vector<1x8xf32> to vector<8x8xf32>
    %83 = arith.addf %81, %82 : vector<8x8xf32>
    %cst_30 = arith.constant dense<0xFF800000> : vector<8xf32>
    %84 = vector.multi_reduction <maximumf>, %83, %cst_30 [1] : vector<8x8xf32> to vector<8xf32>
    %85 = vector.shape_cast %84 : vector<8xf32> to vector<8x1xf32>
    %86 = vector.broadcast %85 : vector<8x1xf32> to vector<8x8xf32>
    %87 = arith.subf %83, %86 : vector<8x8xf32>
    %88 = math.exp %87 : vector<8x8xf32>
    %cst_31 = arith.constant dense<0.000000e+00> : vector<8xf32>
    %89 = vector.multi_reduction <add>, %88, %cst_31 [1] : vector<8x8xf32> to vector<8xf32>
    %90 = vector.shape_cast %89 : vector<8xf32> to vector<8x1xf32>
    %91 = vector.broadcast %90 : vector<8x1xf32> to vector<8x8xf32>
    %92 = arith.divf %88, %91 : vector<8x8xf32>
    %cst_32 = arith.constant dense<0.000000e+00> : vector<8x16xf32>
    %93 = tpu.matmul %92, %80, %cst_32 {dimension_numbers = #tpu.dot_dimension_numbers<[1], [0], [0], [1], [0, 0, 1, 1], [], []>} : vector<8x8xf32>, vector<8x16xf32>, vector<8x16xf32> -> vector<8x16xf32>
    %94 = vector.extract_strided_slice %44 {offsets = [8, 16], sizes = [8, 16], strides = [1, 1]} : vector<16x96xf32> to vector<8x16xf32>
    %95 = vector.extract_strided_slice %44 {offsets = [8, 48], sizes = [8, 16], strides = [1, 1]} : vector<16x96xf32> to vector<8x16xf32>
    %96 = vector.extract_strided_slice %44 {offsets = [8, 80], sizes = [8, 16], strides = [1, 1]} : vector<16x96xf32> to vector<8x16xf32>
    %cst_33 = arith.constant dense<0.000000e+00> : vector<8x8xf32>
    %97 = tpu.matmul %94, %95, %cst_33 {dimension_numbers = #tpu.dot_dimension_numbers<[1], [1], [0], [0], [0, 0, 1, 0], [], []>} : vector<8x16xf32>, vector<8x16xf32>, vector<8x8xf32> -> vector<8x8xf32>
    %98 = vector.broadcast %12 : vector<1x8xf32> to vector<8x8xf32>
    %99 = arith.addf %97, %98 : vector<8x8xf32>
    %cst_34 = arith.constant dense<0xFF800000> : vector<8xf32>
    %100 = vector.multi_reduction <maximumf>, %99, %cst_34 [1] : vector<8x8xf32> to vector<8xf32>
    %101 = vector.shape_cast %100 : vector<8xf32> to vector<8x1xf32>
    %102 = vector.broadcast %101 : vector<8x1xf32> to vector<8x8xf32>
    %103 = arith.subf %99, %102 : vector<8x8xf32>
    %104 = math.exp %103 : vector<8x8xf32>
    %cst_35 = arith.constant dense<0.000000e+00> : vector<8xf32>
    %105 = vector.multi_reduction <add>, %104, %cst_35 [1] : vector<8x8xf32> to vector<8xf32>
    %106 = vector.shape_cast %105 : vector<8xf32> to vector<8x1xf32>
    %107 = vector.broadcast %106 : vector<8x1xf32> to vector<8x8xf32>
    %108 = arith.divf %104, %107 : vector<8x8xf32>
    %cst_36 = arith.constant dense<0.000000e+00> : vector<8x16xf32>
    %109 = tpu.matmul %108, %96, %cst_36 {dimension_numbers = #tpu.dot_dimension_numbers<[1], [0], [0], [1], [0, 0, 1, 1], [], []>} : vector<8x8xf32>, vector<8x16xf32>, vector<8x16xf32> -> vector<8x16xf32>
    %110 = tpu.concatenate %93, %109 in 1 : vector<8x16xf32>, vector<8x16xf32> -> vector<8x32xf32>
    %111 = tpu.concatenate %77, %110 in 0 : vector<8x32xf32>, vector<8x32xf32> -> vector<16x32xf32>
    %c0_37 = arith.constant 0 : index
    %c0_38 = arith.constant 0 : index
    %c0_39 = arith.constant 0 : index
    %112 = vector.load %arg7[%c0_37, %c0_38, %c0_39] : memref<2x32x32xf32, #tpu.memory_space<vmem>>, vector<1x32x32xf32>
    %113 = vector.shape_cast %112 : vector<1x32x32xf32> to vector<32x32xf32>
    %cst_40 = arith.constant dense<0.000000e+00> : vector<16x32xf32>
    %114 = tpu.matmul %111, %113, %cst_40 {dimension_numbers = #tpu.dot_dimension_numbers<[1], [0], [0], [1], [0, 0, 1, 1], [], []>} : vector<16x32xf32>, vector<32x32xf32>, vector<16x32xf32> -> vector<16x32xf32>
    %c0_41 = arith.constant 0 : index
    %c0_42 = arith.constant 0 : index
    %c0_43 = arith.constant 0 : index
    %115 = vector.load %arg8[%c0_41, %c0_42, %c0_43] : memref<2x1x32xf32, #tpu.memory_space<vmem>>, vector<1x1x32xf32>
    %116 = vector.shape_cast %115 : vector<1x1x32xf32> to vector<1x32xf32>
    %117 = vector.broadcast %116 : vector<1x32xf32> to vector<16x32xf32>
    %118 = arith.addf %114, %117 : vector<16x32xf32>
    %119 = arith.addf %37, %118 : vector<16x32xf32>
    %c0_44 = arith.constant 0 : index
    %c0_45 = arith.constant 0 : index
    %c0_46 = arith.constant 0 : index
    %120 = vector.load %arg9[%c0_44, %c0_45, %c0_46] : memref<2x1x32xf32, #tpu.memory_space<vmem>>, vector<1x1x32xf32>
    %121 = vector.shape_cast %120 : vector<1x1x32xf32> to vector<1x32xf32>
    %c0_47 = arith.constant 0 : index
    %c0_48 = arith.constant 0 : index
    %c0_49 = arith.constant 0 : index
    %122 = vector.load %arg10[%c0_47, %c0_48, %c0_49] : memref<2x1x32xf32, #tpu.memory_space<vmem>>, vector<1x1x32xf32>
    %123 = vector.shape_cast %122 : vector<1x1x32xf32> to vector<1x32xf32>
    %cst_50 = arith.constant dense<0.000000e+00> : vector<16xf32>
    %124 = vector.multi_reduction <add>, %119, %cst_50 [1] : vector<16x32xf32> to vector<16xf32>
    %125 = vector.shape_cast %124 : vector<16xf32> to vector<16x1xf32>
    %cst_51 = arith.constant 3.200000e+01 : f32
    %126 = vector.broadcast %cst_51 : f32 to vector<16x1xf32>
    %127 = arith.divf %125, %126 : vector<16x1xf32>
    %128 = vector.broadcast %127 : vector<16x1xf32> to vector<16x32xf32>
    %129 = arith.subf %119, %128 : vector<16x32xf32>
    %130 = arith.mulf %129, %129 : vector<16x32xf32>
    %cst_52 = arith.constant dense<0.000000e+00> : vector<16xf32>
    %131 = vector.multi_reduction <add>, %130, %cst_52 [1] : vector<16x32xf32> to vector<16xf32>
    %132 = vector.shape_cast %131 : vector<16xf32> to vector<16x1xf32>
    %cst_53 = arith.constant 3.200000e+01 : f32
    %133 = vector.broadcast %cst_53 : f32 to vector<16x1xf32>
    %134 = arith.divf %132, %133 : vector<16x1xf32>
    %135 = vector.broadcast %127 : vector<16x1xf32> to vector<16x32xf32>
    %136 = arith.subf %119, %135 : vector<16x32xf32>
    %cst_54 = arith.constant 9.99999996E-13 : f32
    %137 = vector.broadcast %cst_54 : f32 to vector<16x1xf32>
    %138 = arith.addf %134, %137 : vector<16x1xf32>
    %139 = math.rsqrt %138 : vector<16x1xf32>
    %140 = vector.broadcast %139 : vector<16x1xf32> to vector<16x32xf32>
    %141 = arith.mulf %136, %140 : vector<16x32xf32>
    %142 = vector.broadcast %121 : vector<1x32xf32> to vector<16x32xf32>
    %143 = arith.mulf %141, %142 : vector<16x32xf32>
    %144 = vector.broadcast %123 : vector<1x32xf32> to vector<16x32xf32>
    %145 = arith.addf %143, %144 : vector<16x32xf32>
    %c0_55 = arith.constant 0 : index
    %c0_56 = arith.constant 0 : index
    %c0_57 = arith.constant 0 : index
    %146 = vector.load %arg11[%c0_55, %c0_56, %c0_57] : memref<2x32x64xf32, #tpu.memory_space<vmem>>, vector<1x32x64xf32>
    %147 = vector.shape_cast %146 : vector<1x32x64xf32> to vector<32x64xf32>
    %cst_58 = arith.constant dense<0.000000e+00> : vector<16x64xf32>
    %148 = tpu.matmul %145, %147, %cst_58 {dimension_numbers = #tpu.dot_dimension_numbers<[1], [0], [0], [1], [0, 0, 1, 1], [], []>} : vector<16x32xf32>, vector<32x64xf32>, vector<16x64xf32> -> vector<16x64xf32>
    %c0_59 = arith.constant 0 : index
    %c0_60 = arith.constant 0 : index
    %c0_61 = arith.constant 0 : index
    %149 = vector.load %arg12[%c0_59, %c0_60, %c0_61] : memref<2x1x64xf32, #tpu.memory_space<vmem>>, vector<1x1x64xf32>
    %150 = vector.shape_cast %149 : vector<1x1x64xf32> to vector<1x64xf32>
    %151 = vector.broadcast %150 : vector<1x64xf32> to vector<16x64xf32>
    %152 = arith.addf %148, %151 : vector<16x64xf32>
    %cst_62 = arith.constant 5.000000e-01 : f32
    %153 = vector.broadcast %cst_62 : f32 to vector<16x64xf32>
    %154 = arith.mulf %153, %152 : vector<16x64xf32>
    %cst_63 = arith.constant 4.471500e-02 : f32
    %155 = vector.broadcast %cst_63 : f32 to vector<16x64xf32>
    %156 = arith.mulf %155, %152 : vector<16x64xf32>
    %157 = arith.mulf %156, %152 : vector<16x64xf32>
    %158 = arith.mulf %157, %152 : vector<16x64xf32>
    %159 = arith.addf %152, %158 : vector<16x64xf32>
    %cst_64 = arith.constant 0.797884583 : f32
    %160 = vector.broadcast %cst_64 : f32 to vector<16x64xf32>
    %161 = arith.mulf %160, %159 : vector<16x64xf32>
    %162 = math.tanh %161 : vector<16x64xf32>
    %cst_65 = arith.constant 1.000000e+00 : f32
    %163 = vector.broadcast %cst_65 : f32 to vector<16x64xf32>
    %164 = arith.addf %163, %162 : vector<16x64xf32>
    %165 = arith.mulf %154, %164 : vector<16x64xf32>
    %c0_66 = arith.constant 0 : index
    %c0_67 = arith.constant 0 : index
    %c0_68 = arith.constant 0 : index
    %166 = vector.load %arg13[%c0_66, %c0_67, %c0_68] : memref<2x64x32xf32, #tpu.memory_space<vmem>>, vector<1x64x32xf32>
    %167 = vector.shape_cast %166 : vector<1x64x32xf32> to vector<64x32xf32>
    %cst_69 = arith.constant dense<0.000000e+00> : vector<16x32xf32>
    %168 = tpu.matmul %165, %167, %cst_69 {dimension_numbers = #tpu.dot_dimension_numbers<[1], [0], [0], [1], [0, 0, 1, 1], [], []>} : vector<16x64xf32>, vector<64x32xf32>, vector<16x32xf32> -> vector<16x32xf32>
    %c0_70 = arith.constant 0 : index
    %c0_71 = arith.constant 0 : index
    %c0_72 = arith.constant 0 : index
    %169 = vector.load %arg14[%c0_70, %c0_71, %c0_72] : memref<2x1x32xf32, #tpu.memory_space<vmem>>, vector<1x1x32xf32>
    %170 = vector.shape_cast %169 : vector<1x1x32xf32> to vector<1x32xf32>
    %171 = vector.broadcast %170 : vector<1x32xf32> to vector<16x32xf32>
    %172 = arith.addf %168, %171 : vector<16x32xf32>
    %173 = arith.addf %145, %172 : vector<16x32xf32>
    %c0_73 = arith.constant 0 : index
    %c0_74 = arith.constant 0 : index
    %c0_75 = arith.constant 0 : index
    %174 = vector.load %arg15[%c0_73, %c0_74, %c0_75] : memref<2x1x32xf32, #tpu.memory_space<vmem>>, vector<1x1x32xf32>
    %175 = vector.shape_cast %174 : vector<1x1x32xf32> to vector<1x32xf32>
    %c0_76 = arith.constant 0 : index
    %c0_77 = arith.constant 0 : index
    %c0_78 = arith.constant 0 : index
    %176 = vector.load %arg16[%c0_76, %c0_77, %c0_78] : memref<2x1x32xf32, #tpu.memory_space<vmem>>, vector<1x1x32xf32>
    %177 = vector.shape_cast %176 : vector<1x1x32xf32> to vector<1x32xf32>
    %cst_79 = arith.constant dense<0.000000e+00> : vector<16xf32>
    %178 = vector.multi_reduction <add>, %173, %cst_79 [1] : vector<16x32xf32> to vector<16xf32>
    %179 = vector.shape_cast %178 : vector<16xf32> to vector<16x1xf32>
    %cst_80 = arith.constant 3.200000e+01 : f32
    %180 = vector.broadcast %cst_80 : f32 to vector<16x1xf32>
    %181 = arith.divf %179, %180 : vector<16x1xf32>
    %182 = vector.broadcast %181 : vector<16x1xf32> to vector<16x32xf32>
    %183 = arith.subf %173, %182 : vector<16x32xf32>
    %184 = arith.mulf %183, %183 : vector<16x32xf32>
    %cst_81 = arith.constant dense<0.000000e+00> : vector<16xf32>
    %185 = vector.multi_reduction <add>, %184, %cst_81 [1] : vector<16x32xf32> to vector<16xf32>
    %186 = vector.shape_cast %185 : vector<16xf32> to vector<16x1xf32>
    %cst_82 = arith.constant 3.200000e+01 : f32
    %187 = vector.broadcast %cst_82 : f32 to vector<16x1xf32>
    %188 = arith.divf %186, %187 : vector<16x1xf32>
    %189 = vector.broadcast %181 : vector<16x1xf32> to vector<16x32xf32>
    %190 = arith.subf %173, %189 : vector<16x32xf32>
    %cst_83 = arith.constant 9.99999996E-13 : f32
    %191 = vector.broadcast %cst_83 : f32 to vector<16x1xf32>
    %192 = arith.addf %188, %191 : vector<16x1xf32>
    %193 = math.rsqrt %192 : vector<16x1xf32>
    %194 = vector.broadcast %193 : vector<16x1xf32> to vector<16x32xf32>
    %195 = arith.mulf %190, %194 : vector<16x32xf32>
    %196 = vector.broadcast %175 : vector<1x32xf32> to vector<16x32xf32>
    %197 = arith.mulf %195, %196 : vector<16x32xf32>
    %198 = vector.broadcast %177 : vector<1x32xf32> to vector<16x32xf32>
    %199 = arith.addf %197, %198 : vector<16x32xf32>
    %c1_84 = arith.constant 1 : index
    %c0_85 = arith.constant 0 : index
    %c0_86 = arith.constant 0 : index
    %200 = vector.load %arg5[%c1_84, %c0_85, %c0_86] : memref<2x32x96xf32, #tpu.memory_space<vmem>>, vector<1x32x96xf32>
    %201 = vector.shape_cast %200 : vector<1x32x96xf32> to vector<32x96xf32>
    %cst_87 = arith.constant dense<0.000000e+00> : vector<16x96xf32>
    %202 = tpu.matmul %199, %201, %cst_87 {dimension_numbers = #tpu.dot_dimension_numbers<[1], [0], [0], [1], [0, 0, 1, 1], [], []>} : vector<16x32xf32>, vector<32x96xf32>, vector<16x96xf32> -> vector<16x96xf32>
    %c1_88 = arith.constant 1 : index
    %c0_89 = arith.constant 0 : index
    %c0_90 = arith.constant 0 : index
    %203 = vector.load %arg6[%c1_88, %c0_89, %c0_90] : memref<2x1x96xf32, #tpu.memory_space<vmem>>, vector<1x1x96xf32>
    %204 = vector.shape_cast %203 : vector<1x1x96xf32> to vector<1x96xf32>
    %205 = vector.broadcast %204 : vector<1x96xf32> to vector<16x96xf32>
    %206 = arith.addf %202, %205 : vector<16x96xf32>
    %207 = vector.extract_strided_slice %206 {offsets = [0, 0], sizes = [8, 16], strides = [1, 1]} : vector<16x96xf32> to vector<8x16xf32>
    %208 = vector.extract_strided_slice %206 {offsets = [0, 32], sizes = [8, 16], strides = [1, 1]} : vector<16x96xf32> to vector<8x16xf32>
    %209 = vector.extract_strided_slice %206 {offsets = [0, 64], sizes = [8, 16], strides = [1, 1]} : vector<16x96xf32> to vector<8x16xf32>
    %cst_91 = arith.constant dense<0.000000e+00> : vector<8x8xf32>
    %210 = tpu.matmul %207, %208, %cst_91 {dimension_numbers = #tpu.dot_dimension_numbers<[1], [1], [0], [0], [0, 0, 1, 0], [], []>} : vector<8x16xf32>, vector<8x16xf32>, vector<8x8xf32> -> vector<8x8xf32>
    %211 = vector.broadcast %6 : vector<1x8xf32> to vector<8x8xf32>
    %212 = arith.addf %210, %211 : vector<8x8xf32>
    %cst_92 = arith.constant dense<0xFF800000> : vector<8xf32>
    %213 = vector.multi_reduction <maximumf>, %212, %cst_92 [1] : vector<8x8xf32> to vector<8xf32>
    %214 = vector.shape_cast %213 : vector<8xf32> to vector<8x1xf32>
    %215 = vector.broadcast %214 : vector<8x1xf32> to vector<8x8xf32>
    %216 = arith.subf %212, %215 : vector<8x8xf32>
    %217 = math.exp %216 : vector<8x8xf32>
    %cst_93 = arith.constant dense<0.000000e+00> : vector<8xf32>
    %218 = vector.multi_reduction <add>, %217, %cst_93 [1] : vector<8x8xf32> to vector<8xf32>
    %219 = vector.shape_cast %218 : vector<8xf32> to vector<8x1xf32>
    %220 = vector.broadcast %219 : vector<8x1xf32> to vector<8x8xf32>
    %221 = arith.divf %217, %220 : vector<8x8xf32>
    %cst_94 = arith.constant dense<0.000000e+00> : vector<8x16xf32>
    %222 = tpu.matmul %221, %209, %cst_94 {dimension_numbers = #tpu.dot_dimension_numbers<[1], [0], [0], [1], [0, 0, 1, 1], [], []>} : vector<8x8xf32>, vector<8x16xf32>, vector<8x16xf32> -> vector<8x16xf32>
    %223 = vector.extract_strided_slice %206 {offsets = [0, 16], sizes = [8, 16], strides = [1, 1]} : vector<16x96xf32> to vector<8x16xf32>
    %224 = vector.extract_strided_slice %206 {offsets = [0, 48], sizes = [8, 16], strides = [1, 1]} : vector<16x96xf32> to vector<8x16xf32>
    %225 = vector.extract_strided_slice %206 {offsets = [0, 80], sizes = [8, 16], strides = [1, 1]} : vector<16x96xf32> to vector<8x16xf32>
    %cst_95 = arith.constant dense<0.000000e+00> : vector<8x8xf32>
    %226 = tpu.matmul %223, %224, %cst_95 {dimension_numbers = #tpu.dot_dimension_numbers<[1], [1], [0], [0], [0, 0, 1, 0], [], []>} : vector<8x16xf32>, vector<8x16xf32>, vector<8x8xf32> -> vector<8x8xf32>
    %227 = vector.broadcast %6 : vector<1x8xf32> to vector<8x8xf32>
    %228 = arith.addf %226, %227 : vector<8x8xf32>
    %cst_96 = arith.constant dense<0xFF800000> : vector<8xf32>
    %229 = vector.multi_reduction <maximumf>, %228, %cst_96 [1] : vector<8x8xf32> to vector<8xf32>
    %230 = vector.shape_cast %229 : vector<8xf32> to vector<8x1xf32>
    %231 = vector.broadcast %230 : vector<8x1xf32> to vector<8x8xf32>
    %232 = arith.subf %228, %231 : vector<8x8xf32>
    %233 = math.exp %232 : vector<8x8xf32>
    %cst_97 = arith.constant dense<0.000000e+00> : vector<8xf32>
    %234 = vector.multi_reduction <add>, %233, %cst_97 [1] : vector<8x8xf32> to vector<8xf32>
    %235 = vector.shape_cast %234 : vector<8xf32> to vector<8x1xf32>
    %236 = vector.broadcast %235 : vector<8x1xf32> to vector<8x8xf32>
    %237 = arith.divf %233, %236 : vector<8x8xf32>
    %cst_98 = arith.constant dense<0.000000e+00> : vector<8x16xf32>
    %238 = tpu.matmul %237, %225, %cst_98 {dimension_numbers = #tpu.dot_dimension_numbers<[1], [0], [0], [1], [0, 0, 1, 1], [], []>} : vector<8x8xf32>, vector<8x16xf32>, vector<8x16xf32> -> vector<8x16xf32>
    %239 = tpu.concatenate %222, %238 in 1 : vector<8x16xf32>, vector<8x16xf32> -> vector<8x32xf32>
    %240 = vector.extract_strided_slice %206 {offsets = [8, 0], sizes = [8, 16], strides = [1, 1]} : vector<16x96xf32> to vector<8x16xf32>
    %241 = vector.extract_strided_slice %206 {offsets = [8, 32], sizes = [8, 16], strides = [1, 1]} : vector<16x96xf32> to vector<8x16xf32>
    %242 = vector.extract_strided_slice %206 {offsets = [8, 64], sizes = [8, 16], strides = [1, 1]} : vector<16x96xf32> to vector<8x16xf32>
    %cst_99 = arith.constant dense<0.000000e+00> : vector<8x8xf32>
    %243 = tpu.matmul %240, %241, %cst_99 {dimension_numbers = #tpu.dot_dimension_numbers<[1], [1], [0], [0], [0, 0, 1, 0], [], []>} : vector<8x16xf32>, vector<8x16xf32>, vector<8x8xf32> -> vector<8x8xf32>
    %244 = vector.broadcast %12 : vector<1x8xf32> to vector<8x8xf32>
    %245 = arith.addf %243, %244 : vector<8x8xf32>
    %cst_100 = arith.constant dense<0xFF800000> : vector<8xf32>
    %246 = vector.multi_reduction <maximumf>, %245, %cst_100 [1] : vector<8x8xf32> to vector<8xf32>
    %247 = vector.shape_cast %246 : vector<8xf32> to vector<8x1xf32>
    %248 = vector.broadcast %247 : vector<8x1xf32> to vector<8x8xf32>
    %249 = arith.subf %245, %248 : vector<8x8xf32>
    %250 = math.exp %249 : vector<8x8xf32>
    %cst_101 = arith.constant dense<0.000000e+00> : vector<8xf32>
    %251 = vector.multi_reduction <add>, %250, %cst_101 [1] : vector<8x8xf32> to vector<8xf32>
    %252 = vector.shape_cast %251 : vector<8xf32> to vector<8x1xf32>
    %253 = vector.broadcast %252 : vector<8x1xf32> to vector<8x8xf32>
    %254 = arith.divf %250, %253 : vector<8x8xf32>
    %cst_102 = arith.constant dense<0.000000e+00> : vector<8x16xf32>
    %255 = tpu.matmul %254, %242, %cst_102 {dimension_numbers = #tpu.dot_dimension_numbers<[1], [0], [0], [1], [0, 0, 1, 1], [], []>} : vector<8x8xf32>, vector<8x16xf32>, vector<8x16xf32> -> vector<8x16xf32>
    %256 = vector.extract_strided_slice %206 {offsets = [8, 16], sizes = [8, 16], strides = [1, 1]} : vector<16x96xf32> to vector<8x16xf32>
    %257 = vector.extract_strided_slice %206 {offsets = [8, 48], sizes = [8, 16], strides = [1, 1]} : vector<16x96xf32> to vector<8x16xf32>
    %258 = vector.extract_strided_slice %206 {offsets = [8, 80], sizes = [8, 16], strides = [1, 1]} : vector<16x96xf32> to vector<8x16xf32>
    %cst_103 = arith.constant dense<0.000000e+00> : vector<8x8xf32>
    %259 = tpu.matmul %256, %257, %cst_103 {dimension_numbers = #tpu.dot_dimension_numbers<[1], [1], [0], [0], [0, 0, 1, 0], [], []>} : vector<8x16xf32>, vector<8x16xf32>, vector<8x8xf32> -> vector<8x8xf32>
    %260 = vector.broadcast %12 : vector<1x8xf32> to vector<8x8xf32>
    %261 = arith.addf %259, %260 : vector<8x8xf32>
    %cst_104 = arith.constant dense<0xFF800000> : vector<8xf32>
    %262 = vector.multi_reduction <maximumf>, %261, %cst_104 [1] : vector<8x8xf32> to vector<8xf32>
    %263 = vector.shape_cast %262 : vector<8xf32> to vector<8x1xf32>
    %264 = vector.broadcast %263 : vector<8x1xf32> to vector<8x8xf32>
    %265 = arith.subf %261, %264 : vector<8x8xf32>
    %266 = math.exp %265 : vector<8x8xf32>
    %cst_105 = arith.constant dense<0.000000e+00> : vector<8xf32>
    %267 = vector.multi_reduction <add>, %266, %cst_105 [1] : vector<8x8xf32> to vector<8xf32>
    %268 = vector.shape_cast %267 : vector<8xf32> to vector<8x1xf32>
    %269 = vector.broadcast %268 : vector<8x1xf32> to vector<8x8xf32>
    %270 = arith.divf %266, %269 : vector<8x8xf32>
    %cst_106 = arith.constant dense<0.000000e+00> : vector<8x16xf32>
    %271 = tpu.matmul %270, %258, %cst_106 {dimension_numbers = #tpu.dot_dimension_numbers<[1], [0], [0], [1], [0, 0, 1, 1], [], []>} : vector<8x8xf32>, vector<8x16xf32>, vector<8x16xf32> -> vector<8x16xf32>
    %272 = tpu.concatenate %255, %271 in 1 : vector<8x16xf32>, vector<8x16xf32> -> vector<8x32xf32>
    %273 = tpu.concatenate %239, %272 in 0 : vector<8x32xf32>, vector<8x32xf32> -> vector<16x32xf32>
    %c1_107 = arith.constant 1 : index
    %c0_108 = arith.constant 0 : index
    %c0_109 = arith.constant 0 : index
    %274 = vector.load %arg7[%c1_107, %c0_108, %c0_109] : memref<2x32x32xf32, #tpu.memory_space<vmem>>, vector<1x32x32xf32>
    %275 = vector.shape_cast %274 : vector<1x32x32xf32> to vector<32x32xf32>
    %cst_110 = arith.constant dense<0.000000e+00> : vector<16x32xf32>
    %276 = tpu.matmul %273, %275, %cst_110 {dimension_numbers = #tpu.dot_dimension_numbers<[1], [0], [0], [1], [0, 0, 1, 1], [], []>} : vector<16x32xf32>, vector<32x32xf32>, vector<16x32xf32> -> vector<16x32xf32>
    %c1_111 = arith.constant 1 : index
    %c0_112 = arith.constant 0 : index
    %c0_113 = arith.constant 0 : index
    %277 = vector.load %arg8[%c1_111, %c0_112, %c0_113] : memref<2x1x32xf32, #tpu.memory_space<vmem>>, vector<1x1x32xf32>
    %278 = vector.shape_cast %277 : vector<1x1x32xf32> to vector<1x32xf32>
    %279 = vector.broadcast %278 : vector<1x32xf32> to vector<16x32xf32>
    %280 = arith.addf %276, %279 : vector<16x32xf32>
    %281 = arith.addf %199, %280 : vector<16x32xf32>
    %c1_114 = arith.constant 1 : index
    %c0_115 = arith.constant 0 : index
    %c0_116 = arith.constant 0 : index
    %282 = vector.load %arg9[%c1_114, %c0_115, %c0_116] : memref<2x1x32xf32, #tpu.memory_space<vmem>>, vector<1x1x32xf32>
    %283 = vector.shape_cast %282 : vector<1x1x32xf32> to vector<1x32xf32>
    %c1_117 = arith.constant 1 : index
    %c0_118 = arith.constant 0 : index
    %c0_119 = arith.constant 0 : index
    %284 = vector.load %arg10[%c1_117, %c0_118, %c0_119] : memref<2x1x32xf32, #tpu.memory_space<vmem>>, vector<1x1x32xf32>
    %285 = vector.shape_cast %284 : vector<1x1x32xf32> to vector<1x32xf32>
    %cst_120 = arith.constant dense<0.000000e+00> : vector<16xf32>
    %286 = vector.multi_reduction <add>, %281, %cst_120 [1] : vector<16x32xf32> to vector<16xf32>
    %287 = vector.shape_cast %286 : vector<16xf32> to vector<16x1xf32>
    %cst_121 = arith.constant 3.200000e+01 : f32
    %288 = vector.broadcast %cst_121 : f32 to vector<16x1xf32>
    %289 = arith.divf %287, %288 : vector<16x1xf32>
    %290 = vector.broadcast %289 : vector<16x1xf32> to vector<16x32xf32>
    %291 = arith.subf %281, %290 : vector<16x32xf32>
    %292 = arith.mulf %291, %291 : vector<16x32xf32>
    %cst_122 = arith.constant dense<0.000000e+00> : vector<16xf32>
    %293 = vector.multi_reduction <add>, %292, %cst_122 [1] : vector<16x32xf32> to vector<16xf32>
    %294 = vector.shape_cast %293 : vector<16xf32> to vector<16x1xf32>
    %cst_123 = arith.constant 3.200000e+01 : f32
    %295 = vector.broadcast %cst_123 : f32 to vector<16x1xf32>
    %296 = arith.divf %294, %295 : vector<16x1xf32>
    %297 = vector.broadcast %289 : vector<16x1xf32> to vector<16x32xf32>
    %298 = arith.subf %281, %297 : vector<16x32xf32>
    %cst_124 = arith.constant 9.99999996E-13 : f32
    %299 = vector.broadcast %cst_124 : f32 to vector<16x1xf32>
    %300 = arith.addf %296, %299 : vector<16x1xf32>
    %301 = math.rsqrt %300 : vector<16x1xf32>
    %302 = vector.broadcast %301 : vector<16x1xf32> to vector<16x32xf32>
    %303 = arith.mulf %298, %302 : vector<16x32xf32>
    %304 = vector.broadcast %283 : vector<1x32xf32> to vector<16x32xf32>
    %305 = arith.mulf %303, %304 : vector<16x32xf32>
    %306 = vector.broadcast %285 : vector<1x32xf32> to vector<16x32xf32>
    %307 = arith.addf %305, %306 : vector<16x32xf32>
    %c1_125 = arith.constant 1 : index
    %c0_126 = arith.constant 0 : index
    %c0_127 = arith.constant 0 : index
    %308 = vector.load %arg11[%c1_125, %c0_126, %c0_127] : memref<2x32x64xf32, #tpu.memory_space<vmem>>, vector<1x32x64xf32>
    %309 = vector.shape_cast %308 : vector<1x32x64xf32> to vector<32x64xf32>
    %cst_128 = arith.constant dense<0.000000e+00> : vector<16x64xf32>
    %310 = tpu.matmul %307, %309, %cst_128 {dimension_numbers = #tpu.dot_dimension_numbers<[1], [0], [0], [1], [0, 0, 1, 1], [], []>} : vector<16x32xf32>, vector<32x64xf32>, vector<16x64xf32> -> vector<16x64xf32>
    %c1_129 = arith.constant 1 : index
    %c0_130 = arith.constant 0 : index
    %c0_131 = arith.constant 0 : index
    %311 = vector.load %arg12[%c1_129, %c0_130, %c0_131] : memref<2x1x64xf32, #tpu.memory_space<vmem>>, vector<1x1x64xf32>
    %312 = vector.shape_cast %311 : vector<1x1x64xf32> to vector<1x64xf32>
    %313 = vector.broadcast %312 : vector<1x64xf32> to vector<16x64xf32>
    %314 = arith.addf %310, %313 : vector<16x64xf32>
    %cst_132 = arith.constant 5.000000e-01 : f32
    %315 = vector.broadcast %cst_132 : f32 to vector<16x64xf32>
    %316 = arith.mulf %315, %314 : vector<16x64xf32>
    %cst_133 = arith.constant 4.471500e-02 : f32
    %317 = vector.broadcast %cst_133 : f32 to vector<16x64xf32>
    %318 = arith.mulf %317, %314 : vector<16x64xf32>
    %319 = arith.mulf %318, %314 : vector<16x64xf32>
    %320 = arith.mulf %319, %314 : vector<16x64xf32>
    %321 = arith.addf %314, %320 : vector<16x64xf32>
    %cst_134 = arith.constant 0.797884583 : f32
    %322 = vector.broadcast %cst_134 : f32 to vector<16x64xf32>
    %323 = arith.mulf %322, %321 : vector<16x64xf32>
    %324 = math.tanh %323 : vector<16x64xf32>
    %cst_135 = arith.constant 1.000000e+00 : f32
    %325 = vector.broadcast %cst_135 : f32 to vector<16x64xf32>
    %326 = arith.addf %325, %324 : vector<16x64xf32>
    %327 = arith.mulf %316, %326 : vector<16x64xf32>
    %c1_136 = arith.constant 1 : index
    %c0_137 = arith.constant 0 : index
    %c0_138 = arith.constant 0 : index
    %328 = vector.load %arg13[%c1_136, %c0_137, %c0_138] : memref<2x64x32xf32, #tpu.memory_space<vmem>>, vector<1x64x32xf32>
    %329 = vector.shape_cast %328 : vector<1x64x32xf32> to vector<64x32xf32>
    %cst_139 = arith.constant dense<0.000000e+00> : vector<16x32xf32>
    %330 = tpu.matmul %327, %329, %cst_139 {dimension_numbers = #tpu.dot_dimension_numbers<[1], [0], [0], [1], [0, 0, 1, 1], [], []>} : vector<16x64xf32>, vector<64x32xf32>, vector<16x32xf32> -> vector<16x32xf32>
    %c1_140 = arith.constant 1 : index
    %c0_141 = arith.constant 0 : index
    %c0_142 = arith.constant 0 : index
    %331 = vector.load %arg14[%c1_140, %c0_141, %c0_142] : memref<2x1x32xf32, #tpu.memory_space<vmem>>, vector<1x1x32xf32>
    %332 = vector.shape_cast %331 : vector<1x1x32xf32> to vector<1x32xf32>
    %333 = vector.broadcast %332 : vector<1x32xf32> to vector<16x32xf32>
    %334 = arith.addf %330, %333 : vector<16x32xf32>
    %335 = arith.addf %307, %334 : vector<16x32xf32>
    %c1_143 = arith.constant 1 : index
    %c0_144 = arith.constant 0 : index
    %c0_145 = arith.constant 0 : index
    %336 = vector.load %arg15[%c1_143, %c0_144, %c0_145] : memref<2x1x32xf32, #tpu.memory_space<vmem>>, vector<1x1x32xf32>
    %337 = vector.shape_cast %336 : vector<1x1x32xf32> to vector<1x32xf32>
    %c1_146 = arith.constant 1 : index
    %c0_147 = arith.constant 0 : index
    %c0_148 = arith.constant 0 : index
    %338 = vector.load %arg16[%c1_146, %c0_147, %c0_148] : memref<2x1x32xf32, #tpu.memory_space<vmem>>, vector<1x1x32xf32>
    %339 = vector.shape_cast %338 : vector<1x1x32xf32> to vector<1x32xf32>
    %cst_149 = arith.constant dense<0.000000e+00> : vector<16xf32>
    %340 = vector.multi_reduction <add>, %335, %cst_149 [1] : vector<16x32xf32> to vector<16xf32>
    %341 = vector.shape_cast %340 : vector<16xf32> to vector<16x1xf32>
    %cst_150 = arith.constant 3.200000e+01 : f32
    %342 = vector.broadcast %cst_150 : f32 to vector<16x1xf32>
    %343 = arith.divf %341, %342 : vector<16x1xf32>
    %344 = vector.broadcast %343 : vector<16x1xf32> to vector<16x32xf32>
    %345 = arith.subf %335, %344 : vector<16x32xf32>
    %346 = arith.mulf %345, %345 : vector<16x32xf32>
    %cst_151 = arith.constant dense<0.000000e+00> : vector<16xf32>
    %347 = vector.multi_reduction <add>, %346, %cst_151 [1] : vector<16x32xf32> to vector<16xf32>
    %348 = vector.shape_cast %347 : vector<16xf32> to vector<16x1xf32>
    %cst_152 = arith.constant 3.200000e+01 : f32
    %349 = vector.broadcast %cst_152 : f32 to vector<16x1xf32>
    %350 = arith.divf %348, %349 : vector<16x1xf32>
    %351 = vector.broadcast %343 : vector<16x1xf32> to vector<16x32xf32>
    %352 = arith.subf %335, %351 : vector<16x32xf32>
    %cst_153 = arith.constant 9.99999996E-13 : f32
    %353 = vector.broadcast %cst_153 : f32 to vector<16x1xf32>
    %354 = arith.addf %350, %353 : vector<16x1xf32>
    %355 = math.rsqrt %354 : vector<16x1xf32>
    %356 = vector.broadcast %355 : vector<16x1xf32> to vector<16x32xf32>
    %357 = arith.mulf %352, %356 : vector<16x32xf32>
    %358 = vector.broadcast %337 : vector<1x32xf32> to vector<16x32xf32>
    %359 = arith.mulf %357, %358 : vector<16x32xf32>
    %360 = vector.broadcast %339 : vector<1x32xf32> to vector<16x32xf32>
    %361 = arith.addf %359, %360 : vector<16x32xf32>
    %362 = vector.extract_strided_slice %361 {offsets = [0, 0], sizes = [1, 32], strides = [1, 1]} : vector<16x32xf32> to vector<1x32xf32>
    %363 = vector.extract_strided_slice %361 {offsets = [8, 0], sizes = [1, 32], strides = [1, 1]} : vector<16x32xf32> to vector<1x32xf32>
    %364 = tpu.concatenate %362, %363 in 0 : vector<1x32xf32>, vector<1x32xf32> -> vector<2x32xf32>
    %c0_154 = arith.constant 0 : index
    %c0_155 = arith.constant 0 : index
    %365 = vector.load %arg17[%c0_154, %c0_155] : memref<32x32xf32, #tpu.memory_space<vmem>>, vector<32x32xf32>
    %cst_156 = arith.constant dense<0.000000e+00> : vector<2x32xf32>
    %366 = tpu.matmul %364, %365, %cst_156 {dimension_numbers = #tpu.dot_dimension_numbers<[1], [0], [0], [1], [0, 0, 1, 1], [], []>} : vector<2x32xf32>, vector<32x32xf32>, vector<2x32xf32> -> vector<2x32xf32>
    %c0_157 = arith.constant 0 : index
    %c0_158 = arith.constant 0 : index
    %367 = vector.load %arg18[%c0_157, %c0_158] : memref<1x32xf32, #tpu.memory_space<vmem>>, vector<1x32xf32>
    %368 = vector.broadcast %367 : vector<1x32xf32> to vector<2x32xf32>
    %369 = arith.addf %366, %368 : vector<2x32xf32>
    %370 = math.tanh %369 : vector<2x32xf32>
    %c0_159 = arith.constant 0 : index
    %c0_160 = arith.constant 0 : index
    %371 = vector.load %arg19[%c0_159, %c0_160] : memref<32x128xf32, #tpu.memory_space<vmem>>, vector<32x128xf32>
    %cst_161 = arith.constant dense<0.000000e+00> : vector<2x128xf32>
    %372 = tpu.matmul %370, %371, %cst_161 {dimension_numbers = #tpu.dot_dimension_numbers<[1], [0], [0], [1], [0, 0, 1, 1], [], []>} : vector<2x32xf32>, vector<32x128xf32>, vector<2x128xf32> -> vector<2x128xf32>
    %c0_162 = arith.constant 0 : index
    %c0_163 = arith.constant 0 : index
    %373 = vector.load %arg20[%c0_162, %c0_163] : memref<1x128xf32, #tpu.memory_space<vmem>>, vector<1x128xf32>
    %374 = vector.broadcast %373 : vector<1x128xf32> to vector<2x128xf32>
    %375 = arith.addf %372, %374 : vector<2x128xf32>
    %c0_164 = arith.constant 0 : index
    %c0_165 = arith.constant 0 : index
    %376 = vector.load %arg21[%c0_164, %c0_165] : memref<2x128xf32, #tpu.memory_space<vmem>>, vector<2x128xf32>
    tpu.vector_store %arg21[%c0_164, %c0_165], %375 {strides = array<i32>} : memref<2x128xf32, #tpu.memory_space<vmem>>, vector<2x128xf32>,
    return
  }
  func.func @transform_0(%arg0: i32, %arg1: memref<2xi32, #tpu.memory_space<smem>>) -> (i32, i32) {
    %c0_i32 = arith.constant 0 : i32
    %c0_i32_0 = arith.constant 0 : i32
    %c0_i32_1 = arith.constant 0 : i32
    return %c0_i32, %c0_i32_0 : i32, i32
  }
  func.func @transform_1(%arg0: i32, %arg1: memref<2xi32, #tpu.memory_space<smem>>) -> (i32, i32) {
    %c0_i32 = arith.constant 0 : i32
    %c0_i32_0 = arith.constant 0 : i32
    %c0_i32_1 = arith.constant 0 : i32
    return %c0_i32, %c0_i32_0 : i32, i32
  }
  func.func @transform_2(%arg0: i32, %arg1: memref<2xi32, #tpu.memory_space<smem>>) -> (i32, i32) {
    %c0_i32 = arith.constant 0 : i32
    %c0_i32_0 = arith.constant 0 : i32
    %c0_i32_1 = arith.constant 0 : i32
    return %c0_i32, %c0_i32_0 : i32, i32
  }
  func.func @transform_3(%arg0: i32, %arg1: memref<2xi32, #tpu.memory_space<smem>>) -> (i32, i32, i32) {
    %c0_i32 = arith.constant 0 : i32
    %c0_i32_0 = arith.constant 0 : i32
    %c0_i32_1 = arith.constant 0 : i32
    %c0_i32_2 = arith.constant 0 : i32
    return %c0_i32, %c0_i32_0, %c0_i32_1 : i32, i32, i32
  }
  func.func @transform_4(%arg0: i32, %arg1: memref<2xi32, #tpu.memory_space<smem>>) -> (i32, i32, i32) {
    %c0_i32 = arith.constant 0 : i32
    %c0_i32_0 = arith.constant 0 : i32
    %c0_i32_1 = arith.constant 0 : i32
    %c0_i32_2 = arith.constant 0 : i32
    return %c0_i32, %c0_i32_0, %c0_i32_1 : i32, i32, i32
  }
  func.func @transform_5(%arg0: i32, %arg1: memref<2xi32, #tpu.memory_space<smem>>) -> (i32, i32, i32) {
    %c0_i32 = arith.constant 0 : i32
    %c0_i32_0 = arith.constant 0 : i32
    %c0_i32_1 = arith.constant 0 : i32
    %c0_i32_2 = arith.constant 0 : i32
    return %c0_i32, %c0_i32_0, %c0_i32_1 : i32, i32, i32
  }
  func.func @transform_6(%arg0: i32, %arg1: memref<2xi32, #tpu.memory_space<smem>>) -> (i32, i32, i32) {
    %c0_i32 = arith.constant 0 : i32
    %c0_i32_0 = arith.constant 0 : i32
    %c0_i32_1 = arith.constant 0 : i32
    %c0_i32_2 = arith.constant 0 : i32
    return %c0_i32, %c0_i32_0, %c0_i32_1 : i32, i32, i32
  }
  func.func @transform_7(%arg0: i32, %arg1: memref<2xi32, #tpu.memory_space<smem>>) -> (i32, i32, i32) {
    %c0_i32 = arith.constant 0 : i32
    %c0_i32_0 = arith.constant 0 : i32
    %c0_i32_1 = arith.constant 0 : i32
    %c0_i32_2 = arith.constant 0 : i32
    return %c0_i32, %c0_i32_0, %c0_i32_1 : i32, i32, i32
  }
  func.func @transform_8(%arg0: i32, %arg1: memref<2xi32, #tpu.memory_space<smem>>) -> (i32, i32, i32) {
    %c0_i32 = arith.constant 0 : i32
    %c0_i32_0 = arith.constant 0 : i32
    %c0_i32_1 = arith.constant 0 : i32
    %c0_i32_2 = arith.constant 0 : i32
    return %c0_i32, %c0_i32_0, %c0_i32_1 : i32, i32, i32
  }
  func.func @transform_9(%arg0: i32, %arg1: memref<2xi32, #tpu.memory_space<smem>>) -> (i32, i32, i32) {
    %c0_i32 = arith.constant 0 : i32
    %c0_i32_0 = arith.constant 0 : i32
    %c0_i32_1 = arith.constant 0 : i32
    %c0_i32_2 = arith.constant 0 : i32
    return %c0_i32, %c0_i32_0, %c0_i32_1 : i32, i32, i32
  }
  func.func @transform_10(%arg0: i32, %arg1: memref<2xi32, #tpu.memory_space<smem>>) -> (i32, i32, i32) {
    %c0_i32 = arith.constant 0 : i32
    %c0_i32_0 = arith.constant 0 : i32
    %c0_i32_1 = arith.constant 0 : i32
    %c0_i32_2 = arith.constant 0 : i32
    return %c0_i32, %c0_i32_0, %c0_i32_1 : i32, i32, i32
  }
  func.func @transform_11(%arg0: i32, %arg1: memref<2xi32, #tpu.memory_space<smem>>) -> (i32, i32, i32) {
    %c0_i32 = arith.constant 0 : i32
    %c0_i32_0 = arith.constant 0 : i32
    %c0_i32_1 = arith.constant 0 : i32
    %c0_i32_2 = arith.constant 0 : i32
    return %c0_i32, %c0_i32_0, %c0_i32_1 : i32, i32, i32
  }
  func.func @transform_12(%arg0: i32, %arg1: memref<2xi32, #tpu.memory_space<smem>>) -> (i32, i32, i32) {
    %c0_i32 = arith.constant 0 : i32
    %c0_i32_0 = arith.constant 0 : i32
    %c0_i32_1 = arith.constant 0 : i32
    %c0_i32_2 = arith.constant 0 : i32
    return %c0_i32, %c0_i32_0, %c0_i32_1 : i32, i32, i32
  }
  func.func @transform_13(%arg0: i32, %arg1: memref<2xi32, #tpu.memory_space<smem>>) -> (i32, i32, i32) {
    %c0_i32 = arith.constant 0 : i32
    %c0_i32_0 = arith.constant 0 : i32
    %c0_i32_1 = arith.constant 0 : i32
    %c0_i32_2 = arith.constant 0 : i32
    return %c0_i32, %c0_i32_0, %c0_i32_1 : i32, i32, i32
  }
  func.func @transform_14(%arg0: i32, %arg1: memref<2xi32, #tpu.memory_space<smem>>) -> (i32, i32, i32) {
    %c0_i32 = arith.constant 0 : i32
    %c0_i32_0 = arith.constant 0 : i32
    %c0_i32_1 = arith.constant 0 : i32
    %c0_i32_2 = arith.constant 0 : i32
    return %c0_i32, %c0_i32_0, %c0_i32_1 : i32, i32, i32
  }
  func.func @transform_15(%arg0: i32, %arg1: memref<2xi32, #tpu.memory_space<smem>>) -> (i32, i32) {
    %c0_i32 = arith.constant 0 : i32
    %c0_i32_0 = arith.constant 0 : i32
    %c0_i32_1 = arith.constant 0 : i32
    return %c0_i32, %c0_i32_0 : i32, i32
  }
  func.func @transform_16(%arg0: i32, %arg1: memref<2xi32, #tpu.memory_space<smem>>) -> (i32, i32) {
    %c0_i32 = arith.constant 0 : i32
    %c0_i32_0 = arith.constant 0 : i32
    %c0_i32_1 = arith.constant 0 : i32
    return %c0_i32, %c0_i32_0 : i32, i32
  }
  func.func @transform_17(%arg0: i32, %arg1: memref<2xi32, #tpu.memory_space<smem>>) -> (i32, i32) {
    %c0_i32 = arith.constant 0 : i32
    %c0_i32_0 = arith.constant 0 : i32
    %c0_i32_1 = arith.constant 0 : i32
    return %c0_i32, %c0_i32_0 : i32, i32
  }
  func.func @transform_18(%arg0: i32, %arg1: memref<2xi32, #tpu.memory_space<smem>>) -> (i32, i32) {
    %c0_i32 = arith.constant 0 : i32
    %c0_i32_0 = arith.constant 0 : i32
    %c0_i32_1 = arith.constant 0 : i32
    return %c0_i32, %c0_i32_0 : i32, i32
  }
  func.func @transform_19(%arg0: i32, %arg1: memref<2xi32, #tpu.memory_space<smem>>) -> (i32, i32) {
    %c0_i32 = arith.constant 0 : i32
    %c0_i32_0 = arith.constant 0 : i32
    %c0_i32_1 = arith.constant 0 : i32
    return %c0_i32, %c0_i32_0 : i32, i32
  }
}

</mosaic_0001>

<llo_original>
// kernel: tpu_custom_call.1
$region0: #{tpu_custom_call.1}
  #allocation0 [shape = 'u32[]', space=smem, size = 0x4, offset = 0x4, fixed_abs, tag = 'smem constant byte address 0x4 - core index']
  #allocation1 [shape = 'u32[144,128]{1,0:T(1,128)}', space=vmem, size = 0x12000, scoped, tag = 'internal scratch']
  #allocation2 [shape = 's32[1]{0}', space=sflag, size = 0x4, scoped, tag = 'scoped memory for tpu_custom_call.1']
  #allocation3 [shape = 'u8[512]{0}', space=smem, size = 0x200, scoped, tag = 'prefetched SMEM operand 0']
  %s0 = inlined_call_operand.hbm [shape: s32[2], index: 0, kind: input, shape index: {}]
  %s1 = inlined_call_operand.hbm [shape: f32[16,32], index: 1, kind: input, shape index: {}]
  %s2 = inlined_call_operand.hbm [shape: f32[1,32], index: 2, kind: input, shape index: {}]
  %s3 = inlined_call_operand.hbm [shape: f32[1,32], index: 3, kind: input, shape index: {}]
  %s4 = inlined_call_operand.vmem [shape: f32[2,32,96], index: 4, kind: input, shape index: {}]
  %s5 = inlined_call_operand.hbm [shape: f32[2,1,96], index: 5, kind: input, shape index: {}]
  %s6 = inlined_call_operand.vmem [shape: f32[2,32,32], index: 6, kind: input, shape index: {}]
  %s7 = inlined_call_operand.hbm [shape: f32[2,1,32], index: 7, kind: input, shape index: {}]
  %s8 = inlined_call_operand.hbm [shape: f32[2,1,32], index: 8, kind: input, shape index: {}]
  %s9 = inlined_call_operand.hbm [shape: f32[2,1,32], index: 9, kind: input, shape index: {}]
  %s10 = inlined_call_operand.vmem [shape: f32[2,32,64], index: 10, kind: input, shape index: {}]
  %s11 = inlined_call_operand.hbm [shape: f32[2,1,64], index: 11, kind: input, shape index: {}]
  %s12 = inlined_call_operand.vmem [shape: f32[2,64,32], index: 12, kind: input, shape index: {}]
  %s13 = inlined_call_operand.hbm [shape: f32[2,1,32], index: 13, kind: input, shape index: {}]
  %s14 = inlined_call_operand.hbm [shape: f32[2,1,32], index: 14, kind: input, shape index: {}]
  %s15 = inlined_call_operand.hbm [shape: f32[2,1,32], index: 15, kind: input, shape index: {}]
  %s16 = inlined_call_operand.vmem [shape: f32[32,32], index: 16, kind: input, shape index: {}]
  %s17 = inlined_call_operand.hbm [shape: f32[1,32], index: 17, kind: input, shape index: {}]
  %s18 = inlined_call_operand.vmem [shape: f32[32,128], index: 18, kind: input, shape index: {}]
  %s19 = inlined_call_operand.vmem [shape: f32[1,128], index: 19, kind: input, shape index: {}]
  %s20 = inlined_call_operand.hbm [shape: f32[2,128], index: 20, kind: output, shape index: {}]
  %s21 = sld [smem:[#allocation0]]
  $region134: #{tpu_custom_call.1} parent=0
    _
  %s23 = ssub.s32 1, %s21
  %s24 = scalar_select 0, %s23, %s21
  %26 = dma.hbm_to_smem %s0, 16, [#allocation3], [#allocation2]
  %27 = dma.done [#allocation2], 16
  %28 = sfence
  $region1: #{tpu_custom_call.1} parent=0
    #allocation4 [shape = 'u8[8192]{0}', space=vmem, size = 0x2000, scoped, tag = 'input window, operand 1, single buffered']
    #allocation5 [shape = 's32[1]{0}', space=sflag, size = 0x4, scoped, tag = 'scoped memory for tpu_custom_call.1']
    #allocation6 [shape = 's32[1]{0}', space=sflag, size = 0x4, scoped, tag = 'scoped memory for tpu_custom_call.1']
    #allocation7 [shape = 'u8[512]{0}', space=vmem, size = 0x400, scoped, tag = 'input window, operand 2, single buffered']
    #allocation8 [shape = 's32[1]{0}', space=sflag, size = 0x4, scoped, tag = 'scoped memory for tpu_custom_call.1']
    #allocation9 [shape = 'u8[512]{0}', space=vmem, size = 0x400, scoped, tag = 'input window, operand 3, single buffered']
    #allocation10 [shape = 'u8[1024]{0}', space=vmem, size = 0x400, scoped, tag = 'input window, operand 5, single buffered']
    #allocation11 [shape = 's32[1]{0}', space=sflag, size = 0x4, scoped, tag = 'scoped memory for tpu_custom_call.1']
    #allocation12 [shape = 'u8[1024]{0}', space=vmem, size = 0x400, scoped, tag = 'input window, operand 7, single buffered']
    #allocation13 [shape = 'u8[1024]{0}', space=vmem, size = 0x400, scoped, tag = 'input window, operand 8, single buffered']
    #allocation14 [shape = 's32[1]{0}', space=sflag, size = 0x4, scoped, tag = 'scoped memory for tpu_custom_call.1']
    #allocation15 [shape = 'u8[1024]{0}', space=vmem, size = 0x400, scoped, tag = 'input window, operand 9, single buffered']
    #allocation16 [shape = 'u8[1024]{0}', space=vmem, size = 0x400, scoped, tag = 'input window, operand 11, single buffered']
    #allocation17 [shape = 's32[1]{0}', space=sflag, size = 0x4, scoped, tag = 'scoped memory for tpu_custom_call.1']
    #allocation18 [shape = 'u8[1024]{0}', space=vmem, size = 0x400, scoped, tag = 'input window, operand 13, single buffered']
    #allocation19 [shape = 'u8[1024]{0}', space=vmem, size = 0x400, scoped, tag = 'input window, operand 14, single buffered']
    #allocation20 [shape = 's32[1]{0}', space=sflag, size = 0x4, scoped, tag = 'scoped memory for tpu_custom_call.1']
    #allocation21 [shape = 'u8[1024]{0}', space=vmem, size = 0x400, scoped, tag = 'input window, operand 15, single buffered']
    #allocation22 [shape = 'u8[512]{0}', space=vmem, size = 0x400, scoped, tag = 'input window, operand 17, single buffered']
    #allocation23 [shape = 's32[1]{0}', space=sflag, size = 0x4, scoped, tag = 'scoped memory for tpu_custom_call.1']
    #allocation24 [shape = 'u8[1024]{0}', space=vmem, size = 0x400, scoped, tag = 'output window, operand 0, single buffered']
    %29 = vsyncpa [#allocation5], 0
    %30 = vsyncpa [#allocation8], 0
    %31 = vsyncpa [#allocation11], 0
    %32 = vsyncpa [#allocation14], 0
    %33 = vsyncpa [#allocation17], 0
    %34 = vsyncpa [#allocation20], 0
    %35 = vsyncpa [#allocation23], 0
    %36 = vsyncpa [#allocation6], 0
    // Predicated region
    $region2: #{tpu_custom_call.1} parent=1 // pred_check
      _
    $region3: #{tpu_custom_call.1} parent=1 // pred_check_branch
      %38 = sbr.rel (0) target = $region5
    $region4: #{tpu_custom_call.1} parent=1 // pred_region
      %s40 = ssub.s32 256, 256
      %41 = vsyncadd [#allocation5], %s40
      %s42 = sshll.u32 [#allocation4], 4
      %s43 = int_to_ptr.vmem [resolvable:$true] %s42
      %48 = dma.hbm_to_vmem [thread:$0]  %s1, 256, %s43, [#allocation5], 128, 128, 8
    $region5: #{tpu_custom_call.1} parent=1 // pred_fallthru
      _
    // Predicated region
    $region6: #{tpu_custom_call.1} parent=1 // pred_check
      _
    $region7: #{tpu_custom_call.1} parent=1 // pred_check_branch
      %50 = sbr.rel (0) target = $region9
    $region8: #{tpu_custom_call.1} parent=1 // pred_region
      %s52 = ssub.s32 16, 16
      %53 = vsyncadd [#allocation8], %s52
      %s55 = sshll.u32 [#allocation7], 4
      %s56 = int_to_ptr.vmem [resolvable:$true] %s55
      %58 = dma.hbm_to_vmem [thread:$0]  %s2, 16, %s56, [#allocation8]
    $region9: #{tpu_custom_call.1} parent=1 // pred_fallthru
      _
    // Predicated region
    $region10: #{tpu_custom_call.1} parent=1 // pred_check
      _
    $region11: #{tpu_custom_call.1} parent=1 // pred_check_branch
      %60 = sbr.rel (0) target = $region13
    $region12: #{tpu_custom_call.1} parent=1 // pred_region
      %s62 = ssub.s32 16, 16
      %63 = vsyncadd [#allocation8], %s62
      %s65 = sshll.u32 [#allocation9], 4
      %s66 = int_to_ptr.vmem [resolvable:$true] %s65
      %68 = dma.hbm_to_vmem [thread:$0]  %s3, 16, %s66, [#allocation8]
    $region13: #{tpu_custom_call.1} parent=1 // pred_fallthru
      _
    // Predicated region
    $region14: #{tpu_custom_call.1} parent=1 // pred_check
      _
    $region15: #{tpu_custom_call.1} parent=1 // pred_check_branch
      %70 = sbr.rel (0) target = $region17
    $region16: #{tpu_custom_call.1} parent=1 // pred_region
      _
    $region17: #{tpu_custom_call.1} parent=1 // pred_fallthru
      _
    // Predicated region
    $region18: #{tpu_custom_call.1} parent=1 // pred_check
      _
    $region19: #{tpu_custom_call.1} parent=1 // pred_check_branch
      %72 = sbr.rel (0) target = $region21
    $region20: #{tpu_custom_call.1} parent=1 // pred_region
      %s74 = ssub.s32 32, 32
      %75 = vsyncadd [#allocation11], %s74
      %s76 = sshll.u32 [#allocation10], 4
      %s77 = int_to_ptr.vmem [resolvable:$true] %s76
      %82 = dma.hbm_to_vmem [thread:$0]  %s5, 32, %s77, [#allocation11], 16, 16, 1
    $region21: #{tpu_custom_call.1} parent=1 // pred_fallthru
      _
    // Predicated region
    $region22: #{tpu_custom_call.1} parent=1 // pred_check
      _
    $region23: #{tpu_custom_call.1} parent=1 // pred_check_branch
      %84 = sbr.rel (0) target = $region25
    $region24: #{tpu_custom_call.1} parent=1 // pred_region
      _
    $region25: #{tpu_custom_call.1} parent=1 // pred_fallthru
      _
    // Predicated region
    $region26: #{tpu_custom_call.1} parent=1 // pred_check
      _
    $region27: #{tpu_custom_call.1} parent=1 // pred_check_branch
      %86 = sbr.rel (0) target = $region29
    $region28: #{tpu_custom_call.1} parent=1 // pred_region
      %s88 = ssub.s32 32, 32
      %89 = vsyncadd [#allocation11], %s88
      %s90 = sshll.u32 [#allocation12], 4
      %s91 = int_to_ptr.vmem [resolvable:$true] %s90
      %96 = dma.hbm_to_vmem [thread:$0]  %s7, 32, %s91, [#allocation11], 16, 16, 1
    $region29: #{tpu_custom_call.1} parent=1 // pred_fallthru
      _
    // Predicated region
    $region30: #{tpu_custom_call.1} parent=1 // pred_check
      _
    $region31: #{tpu_custom_call.1} parent=1 // pred_check_branch
      %98 = sbr.rel (0) target = $region33
    $region32: #{tpu_custom_call.1} parent=1 // pred_region
      %s100 = ssub.s32 32, 32
      %101 = vsyncadd [#allocation14], %s100
      %s102 = sshll.u32 [#allocation13], 4
      %s103 = int_to_ptr.vmem [resolvable:$true] %s102
      %108 = dma.hbm_to_vmem [thread:$0]  %s8, 32, %s103, [#allocation14], 16, 16, 1
    $region33: #{tpu_custom_call.1} parent=1 // pred_fallthru
      _
    // Predicated region
    $region34: #{tpu_custom_call.1} parent=1 // pred_check
      _
    $region35: #{tpu_custom_call.1} parent=1 // pred_check_branch
      %110 = sbr.rel (0) target = $region37
    $region36: #{tpu_custom_call.1} parent=1 // pred_region
      %s112 = ssub.s32 32, 32
      %113 = vsyncadd [#allocation14], %s112
      %s114 = sshll.u32 [#allocation15], 4
      %s115 = int_to_ptr.vmem [resolvable:$true] %s114
      %120 = dma.hbm_to_vmem [thread:$0]  %s9, 32, %s115, [#allocation14], 16, 16, 1
    $region37: #{tpu_custom_call.1} parent=1 // pred_fallthru
      _
    // Predicated region
    $region38: #{tpu_custom_call.1} parent=1 // pred_check
      _
    $region39: #{tpu_custom_call.1} parent=1 // pred_check_branch
      %122 = sbr.rel (0) target = $region41
    $region40: #{tpu_custom_call.1} parent=1 // pred_region
      _
    $region41: #{tpu_custom_call.1} parent=1 // pred_fallthru
      _
    // Predicated region
    $region42: #{tpu_custom_call.1} parent=1 // pred_check
      _
    $region43: #{tpu_custom_call.1} parent=1 // pred_check_branch
      %124 = sbr.rel (0) target = $region45
    $region44: #{tpu_custom_call.1} parent=1 // pred_region
      %s126 = ssub.s32 32, 32
      %127 = vsyncadd [#allocation17], %s126
      %s128 = sshll.u32 [#allocation16], 4
      %s129 = int_to_ptr.vmem [resolvable:$true] %s128
      %134 = dma.hbm_to_vmem [thread:$0]  %s11, 32, %s129, [#allocation17], 16, 16, 1
    $region45: #{tpu_custom_call.1} parent=1 // pred_fallthru
      _
    // Predicated region
    $region46: #{tpu_custom_call.1} parent=1 // pred_check
      _
    $region47: #{tpu_custom_call.1} parent=1 // pred_check_branch
      %136 = sbr.rel (0) target = $region49
    $region48: #{tpu_custom_call.1} parent=1 // pred_region
      _
    $region49: #{tpu_custom_call.1} parent=1 // pred_fallthru
      _
    // Predicated region
    $region50: #{tpu_custom_call.1} parent=1 // pred_check
      _
    $region51: #{tpu_custom_call.1} parent=1 // pred_check_branch
      %138 = sbr.rel (0) target = $region53
    $region52: #{tpu_custom_call.1} parent=1 // pred_region
      %s140 = ssub.s32 32, 32
      %141 = vsyncadd [#allocation17], %s140
      %s142 = sshll.u32 [#allocation18], 4
      %s143 = int_to_ptr.vmem [resolvable:$true] %s142
      %148 = dma.hbm_to_vmem [thread:$0]  %s13, 32, %s143, [#allocation17], 16, 16, 1
    $region53: #{tpu_custom_call.1} parent=1 // pred_fallthru
      _
    // Predicated region
    $region54: #{tpu_custom_call.1} parent=1 // pred_check
      _
    $region55: #{tpu_custom_call.1} parent=1 // pred_check_branch
      %150 = sbr.rel (0) target = $region57
    $region56: #{tpu_custom_call.1} parent=1 // pred_region
      %s152 = ssub.s32 32, 32
      %153 = vsyncadd [#allocation20], %s152
      %s154 = sshll.u32 [#allocation19], 4
      %s155 = int_to_ptr.vmem [resolvable:$true] %s154
      %160 = dma.hbm_to_vmem [thread:$0]  %s14, 32, %s155, [#allocation20], 16, 16, 1
    $region57: #{tpu_custom_call.1} parent=1 // pred_fallthru
      _
    // Predicated region
    $region58: #{tpu_custom_call.1} parent=1 // pred_check
      _
    $region59: #{tpu_custom_call.1} parent=1 // pred_check_branch
      %162 = sbr.rel (0) target = $region61
    $region60: #{tpu_custom_call.1} parent=1 // pred_region
      %s164 = ssub.s32 32, 32
      %165 = vsyncadd [#allocation20], %s164
      %s166 = sshll.u32 [#allocation21], 4
      %s167 = int_to_ptr.vmem [resolvable:$true] %s166
      %172 = dma.hbm_to_vmem [thread:$0]  %s15, 32, %s167, [#allocation20], 16, 16, 1
    $region61: #{tpu_custom_call.1} parent=1 // pred_fallthru
      _
    // Predicated region
    $region62: #{tpu_custom_call.1} parent=1 // pred_check
      _
    $region63: #{tpu_custom_call.1} parent=1 // pred_check_branch
      %174 = sbr.rel (0) target = $region65
    $region64: #{tpu_custom_call.1} parent=1 // pred_region
      _
    $region65: #{tpu_custom_call.1} parent=1 // pred_fallthru
      _
    // Predicated region
    $region66: #{tpu_custom_call.1} parent=1 // pred_check
      _
    $region67: #{tpu_custom_call.1} parent=1 // pred_check_branch
      %176 = sbr.rel (0) target = $region69
    $region68: #{tpu_custom_call.1} parent=1 // pred_region
      %s178 = ssub.s32 16, 16
      %179 = vsyncadd [#allocation23], %s178
      %s181 = sshll.u32 [#allocation22], 4
      %s182 = int_to_ptr.vmem [resolvable:$true] %s181
      %184 = dma.hbm_to_vmem [thread:$0]  %s17, 16, %s182, [#allocation23]
    $region69: #{tpu_custom_call.1} parent=1 // pred_fallthru
      _
    // Predicated region
    $region70: #{tpu_custom_call.1} parent=1 // pred_check
      _
    $region71: #{tpu_custom_call.1} parent=1 // pred_check_branch
      %186 = sbr.rel (0) target = $region73
    $region72: #{tpu_custom_call.1} parent=1 // pred_region
      _
    $region73: #{tpu_custom_call.1} parent=1 // pred_fallthru
      _
    // Predicated region
    $region74: #{tpu_custom_call.1} parent=1 // pred_check
      _
    $region75: #{tpu_custom_call.1} parent=1 // pred_check_branch
      %188 = sbr.rel (0) target = $region77
    $region76: #{tpu_custom_call.1} parent=1 // pred_region
      _
    $region77: #{tpu_custom_call.1} parent=1 // pred_fallthru
      _
    // Predicated region
    $region78: #{tpu_custom_call.1} parent=1 // pred_check
      _
    $region79: #{tpu_custom_call.1} parent=1 // pred_check_branch
      %190 = sbr.rel (0) target = $region81
    $region80: #{tpu_custom_call.1} parent=1 // pred_region
      %191 = dma.done [#allocation5], 256
    $region81: #{tpu_custom_call.1} parent=1 // pred_fallthru
      _
    // Predicated region
    $region82: #{tpu_custom_call.1} parent=1 // pred_check
      _
    $region83: #{tpu_custom_call.1} parent=1 // pred_check_branch
      %193 = sbr.rel (0) target = $region85
    $region84: #{tpu_custom_call.1} parent=1 // pred_region
      %194 = dma.done [#allocation8], 16
    $region85: #{tpu_custom_call.1} parent=1 // pred_fallthru
      _
    // Predicated region
    $region86: #{tpu_custom_call.1} parent=1 // pred_check
      _
    $region87: #{tpu_custom_call.1} parent=1 // pred_check_branch
      %196 = sbr.rel (0) target = $region89
    $region88: #{tpu_custom_call.1} parent=1 // pred_region
      %197 = dma.done [#allocation8], 16
    $region89: #{tpu_custom_call.1} parent=1 // pred_fallthru
      _
    // Predicated region
    $region90: #{tpu_custom_call.1} parent=1 // pred_check
      _
    $region91: #{tpu_custom_call.1} parent=1 // pred_check_branch
      %199 = sbr.rel (0) target = $region93
    $region92: #{tpu_custom_call.1} parent=1 // pred_region
      %200 = dma.done [#allocation11], 32
    $region93: #{tpu_custom_call.1} parent=1 // pred_fallthru
      _
    // Predicated region
    $region94: #{tpu_custom_call.1} parent=1 // pred_check
      _
    $region95: #{tpu_custom_call.1} parent=1 // pred_check_branch
      %202 = sbr.rel (0) target = $region97
    $region96: #{tpu_custom_call.1} parent=1 // pred_region
      %203 = dma.done [#allocation11], 32
    $region97: #{tpu_custom_call.1} parent=1 // pred_fallthru
      _
    // Predicated region
    $region98: #{tpu_custom_call.1} parent=1 // pred_check
      _
    $region99: #{tpu_custom_call.1} parent=1 // pred_check_branch
      %205 = sbr.rel (0) target = $region101
    $region100: #{tpu_custom_call.1} parent=1 // pred_region
      %206 = dma.done [#allocation14], 32
    $region101: #{tpu_custom_call.1} parent=1 // pred_fallthru
      _
    // Predicated region
    $region102: #{tpu_custom_call.1} parent=1 // pred_check
      _
    $region103: #{tpu_custom_call.1} parent=1 // pred_check_branch
      %208 = sbr.rel (0) target = $region105
    $region104: #{tpu_custom_call.1} parent=1 // pred_region
      %209 = dma.done [#allocation14], 32
    $region105: #{tpu_custom_call.1} parent=1 // pred_fallthru
      _
    // Predicated region
    $region106: #{tpu_custom_call.1} parent=1 // pred_check
      _
    $region107: #{tpu_custom_call.1} parent=1 // pred_check_branch
      %211 = sbr.rel (0) target = $region109
    $region108: #{tpu_custom_call.1} parent=1 // pred_region
      %212 = dma.done [#allocation17], 32
    $region109: #{tpu_custom_call.1} parent=1 // pred_fallthru
      _
    // Predicated region
    $region110: #{tpu_custom_call.1} parent=1 // pred_check
      _
    $region111: #{tpu_custom_call.1} parent=1 // pred_check_branch
      %214 = sbr.rel (0) target = $region113
    $region112: #{tpu_custom_call.1} parent=1 // pred_region
      %215 = dma.done [#allocation17], 32
    $region113: #{tpu_custom_call.1} parent=1 // pred_fallthru
      _
    // Predicated region
    $region114: #{tpu_custom_call.1} parent=1 // pred_check
      _
    $region115: #{tpu_custom_call.1} parent=1 // pred_check_branch
      %217 = sbr.rel (0) target = $region117
    $region116: #{tpu_custom_call.1} parent=1 // pred_region
      %218 = dma.done [#allocation20], 32
    $region117: #{tpu_custom_call.1} parent=1 // pred_fallthru
      _
    // Predicated region
    $region118: #{tpu_custom_call.1} parent=1 // pred_check
      _
    $region119: #{tpu_custom_call.1} parent=1 // pred_check_branch
      %220 = sbr.rel (0) target = $region121
    $region120: #{tpu_custom_call.1} parent=1 // pred_region
      %221 = dma.done [#allocation20], 32
    $region121: #{tpu_custom_call.1} parent=1 // pred_fallthru
      _
    // Predicated region
    $region122: #{tpu_custom_call.1} parent=1 // pred_check
      _
    $region123: #{tpu_custom_call.1} parent=1 // pred_check_branch
      %223 = sbr.rel (0) target = $region125
    $region124: #{tpu_custom_call.1} parent=1 // pred_region
      %224 = dma.done [#allocation23], 16
    $region125: #{tpu_custom_call.1} parent=1 // pred_fallthru
      _
    %v225 = vlaneseq
    %v226 = vand.u32 %v225, 127
    %s227 = sld [smem:[#allocation3]]
    %v228 = vstv %s227
    %vm229 = vcmp.lt.s32.totalorder %v226, %v228
    %v230 = vsel %vm229, 0.0, -10000.0
    %s231 = sld [smem:[#allocation3 + $0x1]]
    %v232 = vstv %s231
    %vm233 = vcmp.lt.s32.totalorder %v226, %v232
    %v234 = vsel %vm233, 0.0, -10000.0
    %v235 = vld [vmem:[#allocation4] sm:$0xff]
    %v236 = vld [vmem:[#allocation4 + $0x8] sm:$0xff]
    %v237 = vld [vmem:[#allocation7] sm:$0x1]
    %v238 = vld [vmem:[#allocation9] sm:$0x1]
    %vm239 = vcmask 261120
    %v240 = vsel %vm239, %v235, 0.0
    %241 = vadd.xlane.f32.xlu0 %v240
    %v242 = vpop.xlane.xlu0 %241
    %v243 = vsel %vm239, %v236, 0.0
    %244 = vadd.xlane.f32.xlu0 %v243
    %v245 = vpop.xlane.xlu0 %244
    %v246 = vrcp.pop 32.0
    %v247 = vmul.f32 %v242, %v246
    %v248 = vmul.f32 %v245, %v246
    %v249 = vsub.f32 %v235, %v247
    %v250 = vsub.f32 %v236, %v248
    %v251 = vmul.f32 %v249, %v249
    %v252 = vmul.f32 %v250, %v250
    %v253 = vsel %vm239, %v251, 0.0
    %254 = vadd.xlane.f32.xlu0 %v253
    %v255 = vpop.xlane.xlu0 %254
    %v256 = vsel %vm239, %v252, 0.0
    %257 = vadd.xlane.f32.xlu0 %v256
    %v258 = vpop.xlane.xlu0 %257
    %v259 = vmul.f32 %v255, %v246
    %v260 = vmul.f32 %v258, %v246
    %v261 = vadd.f32 %v259, 1e-12
    %v262 = vadd.f32 %v260, 1e-12
    %v263 = vrsqrt.pop %v261
    %v264 = vrsqrt.pop %v262
    %v265 = vmul.f32 %v249, %v263
    %v266 = vmul.f32 %v250, %v264
    %v268 = vlaneseq
    %v269 = vshrl.u32 %v268, 7
    %v270 = vsub.s32 0, %v269
    %v271 = vrot.slane %v237, %v270
    %v273 = vmul.f32 %v265, %v271
    %v274 = vmul.f32 %v266, %v271
    %v276 = vlaneseq
    %v277 = vshrl.u32 %v276, 7
    %v278 = vsub.s32 0, %v277
    %v279 = vrot.slane %v238, %v278
    %v281 = vadd.f32 %v273, %v279
    %v282 = vadd.f32 %v274, %v279
    %v283 = vld [vmem:[%s4] sm:$0xff]
    %v284 = vld [vmem:[%s4 + $0x8] sm:$0xff]
    %v285 = vld [vmem:[%s4 + $0x10] sm:$0xff]
    %v286 = vld [vmem:[%s4 + $0x18] sm:$0xff]
    %v287 = vld [vmem:[#allocation10] sm:$0x1]
    %v289 = vlaneseq
    %v290 = vshrl.u32 %v289, 7
    %v291 = vsub.s32 0, %v290
    %v292 = vrot.slane %v287, %v291
    %v295 = vsel %vm239, %v281, 0
    %v298 = vsel %vm239, %v282, 0
    %300 = vmatprep.subr.mxu0 0.0
    %301 = vmatpush1.msra.mxu0 %v283
    %302 = vmatprep.subr.mxu0 0.0
    %303 = vmatpush1.msra.mxu0 %v284
    %304 = vmatprep.subr.mxu0 0.0
    %305 = vmatpush1.msra.mxu0 %v285
    %306 = vmatprep.subr.mxu0 0.0
    %307 = vmatpush1.msra.mxu0 %v286
    %308 = vmatprep.subr.mxu0 0.0
    %309 = vmatpush1.msra.mxu0 0.0
    %310 = vmatprep.subr.mxu0 0.0
    %311 = vmatpush1.msra.mxu0 0.0
    %312 = vmatprep.subr.mxu0 0.0
    %313 = vmatpush1.msra.mxu0 0.0
    %314 = vmatprep.subr.mxu0 0.0
    %315 = vmatpush1.msra.mxu0 0.0
    %316 = vmatprep.subr.mxu0 0.0
    %317 = vmatpush1.msra.mxu0 0.0
    %318 = vmatprep.subr.mxu0 0.0
    %319 = vmatpush1.msra.mxu0 0.0
    %320 = vmatprep.subr.mxu0 0.0
    %321 = vmatpush1.msra.mxu0 0.0
    %322 = vmatprep.subr.mxu0 0.0
    %323 = vmatpush1.msra.mxu0 0.0
    %324 = vmatprep.subr.mxu0 0.0
    %325 = vmatpush1.msra.mxu0 0.0
    %326 = vmatprep.subr.mxu0 0.0
    %327 = vmatpush1.msra.mxu0 0.0
    %328 = vmatprep.subr.mxu0 0.0
    %329 = vmatpush1.msra.mxu0 0.0
    %330 = vmatprep.subr.mxu0 0.0
    %331 = vmatpush1.msra.mxu0 0.0
    %332 = vmatprep.subr.mxu0 0.0
    %333 = vmatpush1.msra.mxu0 0.0
    %334 = vmatprep.subr.mxu0 0.0
    %335 = vmatpush1.msra.mxu0 0.0
    %336 = vmatprep.subr.mxu0 0.0
    %337 = vmatpush1.msra.mxu0 0.0
    %338 = vmatprep.subr.mxu0 0.0
    %339 = vmatpush1.msra.mxu0 0.0
    %340 = vmatprep.subr.mxu0 0.0
    %341 = vmatpush1.msra.mxu0 0.0
    %342 = vmatprep.subr.mxu0 0.0
    %343 = vmatpush1.msra.mxu0 0.0
    %344 = vmatprep.subr.mxu0 0.0
    %345 = vmatpush1.msra.mxu0 0.0
    %346 = vmatprep.subr.mxu0 0.0
    %347 = vmatpush1.msra.mxu0 0.0
    %348 = vmatprep.subr.mxu0 0.0
    %349 = vmatpush1.msra.mxu0 0.0
    %350 = vmatprep.subr.mxu0 0.0
    %351 = vmatpush1.msra.mxu0 0.0
    %352 = vmatprep.subr.mxu0 0.0
    %353 = vmatpush1.msra.mxu0 0.0
    %354 = vmatprep.subr.mxu0 0.0
    %355 = vmatpush1.msra.mxu0 0.0
    %356 = vmatprep.subr.mxu0 0.0
    %357 = vmatpush1.msra.mxu0 0.0
    %358 = vmatprep.subr.mxu0 0.0
    %359 = vmatpush1.msra.mxu0 0.0
    %360 = vmatprep.subr.mxu0 0.0
    %361 = vmatpush1.msra.mxu0 0.0
    %362 = vmatprep.subr.mxu0 0.0
    %363 = vmatpush1.msra.mxu0 0.0
    %364 = vmatprep.mubr.f32.mxu0 0.0
    %365 = vmatmul.mubr.f32.gmra.mrb[0].mxu0 %v295
    %v366 = vpop.f32.mrb[0].mxu0
    %v367 = vadd.f32 %v292, %v366
    %v368 = vpop.f32.mrb[0].mxu0
    %369 = vmatprep.mubr.f32.mxu0 0.0
    %370 = vmatmul.mubr.f32.gmra.mrb[0].mxu0 %v298
    %v371 = vpop.f32.mrb[0].mxu0
    %v372 = vadd.f32 %v292, %v371
    %v373 = vpop.f32.mrb[0].mxu0
    %374 = vdwg.mxu0
    %376 = vrot.lane.b32.xlu0 %v367, 96
    %v377 = vpop.permute.xlu0 %376
    %vm378 = vcmask 130048
    %v379 = vsel %vm378, %v367, 0
    %v381 = vsel %vm378, %v377, 0
    %383 = vmatprep.subr.mxu0 0.0
    %384 = vmatpush1.xpose.msra.mxu0 %v381
    %385 = vmatprep.subr.mxu0 0.0
    %386 = vmatpush1.xpose.msra.mxu0 0.0
    %387 = vmatprep.subr.mxu0 0.0
    %388 = vmatpush1.xpose.msra.mxu0 0.0
    %389 = vmatprep.subr.mxu0 0.0
    %390 = vmatpush1.xpose.msra.mxu0 0.0
    %391 = vmatprep.subr.mxu0 0.0
    %392 = vmatpush1.xpose.msra.mxu0 0.0
    %393 = vmatprep.subr.mxu0 0.0
    %394 = vmatpush1.xpose.msra.mxu0 0.0
    %395 = vmatprep.subr.mxu0 0.0
    %396 = vmatpush1.xpose.msra.mxu0 0.0
    %397 = vmatprep.subr.mxu0 0.0
    %398 = vmatpush1.xpose.msra.mxu0 0.0
    %399 = vmatprep.subr.mxu0 0.0
    %400 = vmatpush1.xpose.msra.mxu0 0.0
    %401 = vmatprep.subr.mxu0 0.0
    %402 = vmatpush1.xpose.msra.mxu0 0.0
    %403 = vmatprep.subr.mxu0 0.0
    %404 = vmatpush1.xpose.msra.mxu0 0.0
    %405 = vmatprep.subr.mxu0 0.0
    %406 = vmatpush1.xpose.msra.mxu0 0.0
    %407 = vmatprep.subr.mxu0 0.0
    %408 = vmatpush1.xpose.msra.mxu0 0.0
    %409 = vmatprep.subr.mxu0 0.0
    %410 = vmatpush1.xpose.msra.mxu0 0.0
    %411 = vmatprep.subr.mxu0 0.0
    %412 = vmatpush1.xpose.msra.mxu0 0.0
    %413 = vmatprep.subr.mxu0 0.0
    %414 = vmatpush1.xpose.msra.mxu0 0.0
    %415 = vmatprep.subr.mxu0 0.0
    %416 = vmatpush1.xpose.msra.mxu0 0.0
    %417 = vmatprep.subr.mxu0 0.0
    %418 = vmatpush1.xpose.msra.mxu0 0.0
    %419 = vmatprep.subr.mxu0 0.0
    %420 = vmatpush1.xpose.msra.mxu0 0.0
    %421 = vmatprep.subr.mxu0 0.0
    %422 = vmatpush1.xpose.msra.mxu0 0.0
    %423 = vmatprep.subr.mxu0 0.0
    %424 = vmatpush1.xpose.msra.mxu0 0.0
    %425 = vmatprep.subr.mxu0 0.0
    %426 = vmatpush1.xpose.msra.mxu0 0.0
    %427 = vmatprep.subr.mxu0 0.0
    %428 = vmatpush1.xpose.msra.mxu0 0.0
    %429 = vmatprep.subr.mxu0 0.0
    %430 = vmatpush1.xpose.msra.mxu0 0.0
    %431 = vmatprep.subr.mxu0 0.0
    %432 = vmatpush1.xpose.msra.mxu0 0.0
    %433 = vmatprep.subr.mxu0 0.0
    %434 = vmatpush1.xpose.msra.mxu0 0.0
    %435 = vmatprep.subr.mxu0 0.0
    %436 = vmatpush1.xpose.msra.mxu0 0.0
    %437 = vmatprep.subr.mxu0 0.0
    %438 = vmatpush1.xpose.msra.mxu0 0.0
    %439 = vmatprep.subr.mxu0 0.0
    %440 = vmatpush1.xpose.msra.mxu0 0.0
    %441 = vmatprep.subr.mxu0 0.0
    %442 = vmatpush1.xpose.msra.mxu0 0.0
    %443 = vmatprep.subr.mxu0 0.0
    %444 = vmatpush1.xpose.msra.mxu0 0.0
    %445 = vmatprep.subr.mxu0 0.0
    %446 = vmatpush1.xpose.msra.mxu0 0.0
    %447 = vmatprep.mubr.f32.mxu0 0.0
    %448 = vmatmul.mubr.f32.gmra.mrb[0].mxu0 %v379
    %v449 = vpop.f32.mrb[0].mxu0
    %v450 = vadd.f32 %v230, %v449
    %v451 = vpop.f32.mrb[0].mxu0
    %452 = vdwg.mxu0
    %vm453 = vcmask 64512
    %v454 = vsel %vm453, %v450, -inf
    %455 = vmax.xlane.f32.xlu0 %v454
    %v456 = vpop.xlane.xlu0 %455
    %v457 = vsub.f32 %v450, %v456
    %v458 = vmul.f32 %v457, 1.442695
    %v459 = vpow.pop %v458
    %v460 = vsel %vm453, %v459, 0.0
    %461 = vadd.xlane.f32.xlu0 %v460
    %v462 = vpop.xlane.xlu0 %461
    %v463 = vrcp.pop %v462
    %v464 = vmul.f32 %v459, %v463
    %465 = vrot.lane.b32.xlu0 %v367, 64
    %v466 = vpop.permute.xlu0 %465
    %v469 = vsel %vm453, %v464, 0
    %471 = vmatprep.subr.mxu0 0.0
    %472 = vmatpush1.msra.mxu0 %v466
    %473 = vmatprep.subr.mxu0 0.0
    %474 = vmatpush1.msra.mxu0 0.0
    %475 = vmatprep.subr.mxu0 0.0
    %476 = vmatpush1.msra.mxu0 0.0
    %477 = vmatprep.subr.mxu0 0.0
    %478 = vmatpush1.msra.mxu0 0.0
    %479 = vmatprep.subr.mxu0 0.0
    %480 = vmatpush1.msra.mxu0 0.0
    %481 = vmatprep.subr.mxu0 0.0
    %482 = vmatpush1.msra.mxu0 0.0
    %483 = vmatprep.subr.mxu0 0.0
    %484 = vmatpush1.msra.mxu0 0.0
    %485 = vmatprep.subr.mxu0 0.0
    %486 = vmatpush1.msra.mxu0 0.0
    %487 = vmatprep.subr.mxu0 0.0
    %488 = vmatpush1.msra.mxu0 0.0
    %489 = vmatprep.subr.mxu0 0.0
    %490 = vmatpush1.msra.mxu0 0.0
    %491 = vmatprep.subr.mxu0 0.0
    %492 = vmatpush1.msra.mxu0 0.0
    %493 = vmatprep.subr.mxu0 0.0
    %494 = vmatpush1.msra.mxu0 0.0
    %495 = vmatprep.subr.mxu0 0.0
    %496 = vmatpush1.msra.mxu0 0.0
    %497 = vmatprep.subr.mxu0 0.0
    %498 = vmatpush1.msra.mxu0 0.0
    %499 = vmatprep.subr.mxu0 0.0
    %500 = vmatpush1.msra.mxu0 0.0
    %501 = vmatprep.subr.mxu0 0.0
    %502 = vmatpush1.msra.mxu0 0.0
    %503 = vmatprep.subr.mxu0 0.0
    %504 = vmatpush1.msra.mxu0 0.0
    %505 = vmatprep.subr.mxu0 0.0
    %506 = vmatpush1.msra.mxu0 0.0
    %507 = vmatprep.subr.mxu0 0.0
    %508 = vmatpush1.msra.mxu0 0.0
    %509 = vmatprep.subr.mxu0 0.0
    %510 = vmatpush1.msra.mxu0 0.0
    %511 = vmatprep.subr.mxu0 0.0
    %512 = vmatpush1.msra.mxu0 0.0
    %513 = vmatprep.subr.mxu0 0.0
    %514 = vmatpush1.msra.mxu0 0.0
    %515 = vmatprep.subr.mxu0 0.0
    %516 = vmatpush1.msra.mxu0 0.0
    %517 = vmatprep.subr.mxu0 0.0
    %518 = vmatpush1.msra.mxu0 0.0
    %519 = vmatprep.subr.mxu0 0.0
    %520 = vmatpush1.msra.mxu0 0.0
    %521 = vmatprep.subr.mxu0 0.0
    %522 = vmatpush1.msra.mxu0 0.0
    %523 = vmatprep.subr.mxu0 0.0
    %524 = vmatpush1.msra.mxu0 0.0
    %525 = vmatprep.subr.mxu0 0.0
    %526 = vmatpush1.msra.mxu0 0.0
    %527 = vmatprep.subr.mxu0 0.0
    %528 = vmatpush1.msra.mxu0 0.0
    %529 = vmatprep.subr.mxu0 0.0
    %530 = vmatpush1.msra.mxu0 0.0
    %531 = vmatprep.subr.mxu0 0.0
    %532 = vmatpush1.msra.mxu0 0.0
    %533 = vmatprep.subr.mxu0 0.0
    %534 = vmatpush1.msra.mxu0 0.0
    %535 = vmatprep.mubr.f32.mxu0 0.0
    %536 = vmatmul.mubr.f32.gmra.mrb[0].mxu0 %v469
    %v537 = vpop.f32.mrb[0].mxu0
    %v538 = vadd.f32 0.0, %v537
    %v539 = vpop.f32.mrb[0].mxu0
    %540 = vdwg.mxu0
    %541 = vrot.lane.b32.xlu0 %v367, 112
    %v542 = vpop.permute.xlu0 %541
    %543 = vrot.lane.b32.xlu0 %v367, 80
    %v544 = vpop.permute.xlu0 %543
    %v545 = vsel %vm378, %v542, 0
    %v547 = vsel %vm378, %v544, 0
    %549 = vmatprep.subr.mxu0 0.0
    %550 = vmatpush1.xpose.msra.mxu0 %v547
    %551 = vmatprep.subr.mxu0 0.0
    %552 = vmatpush1.xpose.msra.mxu0 0.0
    %553 = vmatprep.subr.mxu0 0.0
    %554 = vmatpush1.xpose.msra.mxu0 0.0
    %555 = vmatprep.subr.mxu0 0.0
    %556 = vmatpush1.xpose.msra.mxu0 0.0
    %557 = vmatprep.subr.mxu0 0.0
    %558 = vmatpush1.xpose.msra.mxu0 0.0
    %559 = vmatprep.subr.mxu0 0.0
    %560 = vmatpush1.xpose.msra.mxu0 0.0
    %561 = vmatprep.subr.mxu0 0.0
    %562 = vmatpush1.xpose.msra.mxu0 0.0
    %563 = vmatprep.subr.mxu0 0.0
    %564 = vmatpush1.xpose.msra.mxu0 0.0
    %565 = vmatprep.subr.mxu0 0.0
    %566 = vmatpush1.xpose.msra.mxu0 0.0
    %567 = vmatprep.subr.mxu0 0.0
    %568 = vmatpush1.xpose.msra.mxu0 0.0
    %569 = vmatprep.subr.mxu0 0.0
    %570 = vmatpush1.xpose.msra.mxu0 0.0
    %571 = vmatprep.subr.mxu0 0.0
    %572 = vmatpush1.xpose.msra.mxu0 0.0
    %573 = vmatprep.subr.mxu0 0.0
    %574 = vmatpush1.xpose.msra.mxu0 0.0
    %575 = vmatprep.subr.mxu0 0.0
    %576 = vmatpush1.xpose.msra.mxu0 0.0
    %577 = vmatprep.subr.mxu0 0.0
    %578 = vmatpush1.xpose.msra.mxu0 0.0
    %579 = vmatprep.subr.mxu0 0.0
    %580 = vmatpush1.xpose.msra.mxu0 0.0
    %581 = vmatprep.subr.mxu0 0.0
    %582 = vmatpush1.xpose.msra.mxu0 0.0
    %583 = vmatprep.subr.mxu0 0.0
    %584 = vmatpush1.xpose.msra.mxu0 0.0
    %585 = vmatprep.subr.mxu0 0.0
    %586 = vmatpush1.xpose.msra.mxu0 0.0
    %587 = vmatprep.subr.mxu0 0.0
    %588 = vmatpush1.xpose.msra.mxu0 0.0
    %589 = vmatprep.subr.mxu0 0.0
    %590 = vmatpush1.xpose.msra.mxu0 0.0
    %591 = vmatprep.subr.mxu0 0.0
    %592 = vmatpush1.xpose.msra.mxu0 0.0
    %593 = vmatprep.subr.mxu0 0.0
    %594 = vmatpush1.xpose.msra.mxu0 0.0
    %595 = vmatprep.subr.mxu0 0.0
    %596 = vmatpush1.xpose.msra.mxu0 0.0
    %597 = vmatprep.subr.mxu0 0.0
    %598 = vmatpush1.xpose.msra.mxu0 0.0
    %599 = vmatprep.subr.mxu0 0.0
    %600 = vmatpush1.xpose.msra.mxu0 0.0
    %601 = vmatprep.subr.mxu0 0.0
    %602 = vmatpush1.xpose.msra.mxu0 0.0
    %603 = vmatprep.subr.mxu0 0.0
    %604 = vmatpush1.xpose.msra.mxu0 0.0
    %605 = vmatprep.subr.mxu0 0.0
    %606 = vmatpush1.xpose.msra.mxu0 0.0
    %607 = vmatprep.subr.mxu0 0.0
    %608 = vmatpush1.xpose.msra.mxu0 0.0
    %609 = vmatprep.subr.mxu0 0.0
    %610 = vmatpush1.xpose.msra.mxu0 0.0
    %611 = vmatprep.subr.mxu0 0.0
    %612 = vmatpush1.xpose.msra.mxu0 0.0
    %613 = vmatprep.mubr.f32.mxu0 0.0
    %614 = vmatmul.mubr.f32.gmra.mrb[0].mxu0 %v545
    %v615 = vpop.f32.mrb[0].mxu0
    %v616 = vadd.f32 %v230, %v615
    %v617 = vpop.f32.mrb[0].mxu0
    %618 = vdwg.mxu0
    %v619 = vsel %vm453, %v616, -inf
    %620 = vmax.xlane.f32.xlu0 %v619
    %v621 = vpop.xlane.xlu0 %620
    %v622 = vsub.f32 %v616, %v621
    %v623 = vmul.f32 %v622, 1.442695
    %v624 = vpow.pop %v623
    %v625 = vsel %vm453, %v624, 0.0
    %626 = vadd.xlane.f32.xlu0 %v625
    %v627 = vpop.xlane.xlu0 %626
    %v628 = vrcp.pop %v627
    %v629 = vmul.f32 %v624, %v628
    %630 = vrot.lane.b32.xlu0 %v367, 48
    %v631 = vpop.permute.xlu0 %630
    %v634 = vsel %vm453, %v629, 0
    %636 = vmatprep.subr.mxu0 0.0
    %637 = vmatpush1.msra.mxu0 %v631
    %638 = vmatprep.subr.mxu0 0.0
    %639 = vmatpush1.msra.mxu0 0.0
    %640 = vmatprep.subr.mxu0 0.0
    %641 = vmatpush1.msra.mxu0 0.0
    %642 = vmatprep.subr.mxu0 0.0
    %643 = vmatpush1.msra.mxu0 0.0
    %644 = vmatprep.subr.mxu0 0.0
    %645 = vmatpush1.msra.mxu0 0.0
    %646 = vmatprep.subr.mxu0 0.0
    %647 = vmatpush1.msra.mxu0 0.0
    %648 = vmatprep.subr.mxu0 0.0
    %649 = vmatpush1.msra.mxu0 0.0
    %650 = vmatprep.subr.mxu0 0.0
    %651 = vmatpush1.msra.mxu0 0.0
    %652 = vmatprep.subr.mxu0 0.0
    %653 = vmatpush1.msra.mxu0 0.0
    %654 = vmatprep.subr.mxu0 0.0
    %655 = vmatpush1.msra.mxu0 0.0
    %656 = vmatprep.subr.mxu0 0.0
    %657 = vmatpush1.msra.mxu0 0.0
    %658 = vmatprep.subr.mxu0 0.0
    %659 = vmatpush1.msra.mxu0 0.0
    %660 = vmatprep.subr.mxu0 0.0
    %661 = vmatpush1.msra.mxu0 0.0
    %662 = vmatprep.subr.mxu0 0.0
    %663 = vmatpush1.msra.mxu0 0.0
    %664 = vmatprep.subr.mxu0 0.0
    %665 = vmatpush1.msra.mxu0 0.0
    %666 = vmatprep.subr.mxu0 0.0
    %667 = vmatpush1.msra.mxu0 0.0
    %668 = vmatprep.subr.mxu0 0.0
    %669 = vmatpush1.msra.mxu0 0.0
    %670 = vmatprep.subr.mxu0 0.0
    %671 = vmatpush1.msra.mxu0 0.0
    %672 = vmatprep.subr.mxu0 0.0
    %673 = vmatpush1.msra.mxu0 0.0
    %674 = vmatprep.subr.mxu0 0.0
    %675 = vmatpush1.msra.mxu0 0.0
    %676 = vmatprep.subr.mxu0 0.0
    %677 = vmatpush1.msra.mxu0 0.0
    %678 = vmatprep.subr.mxu0 0.0
    %679 = vmatpush1.msra.mxu0 0.0
    %680 = vmatprep.subr.mxu0 0.0
    %681 = vmatpush1.msra.mxu0 0.0
    %682 = vmatprep.subr.mxu0 0.0
    %683 = vmatpush1.msra.mxu0 0.0
    %684 = vmatprep.subr.mxu0 0.0
    %685 = vmatpush1.msra.mxu0 0.0
    %686 = vmatprep.subr.mxu0 0.0
    %687 = vmatpush1.msra.mxu0 0.0
    %688 = vmatprep.subr.mxu0 0.0
    %689 = vmatpush1.msra.mxu0 0.0
    %690 = vmatprep.subr.mxu0 0.0
    %691 = vmatpush1.msra.mxu0 0.0
    %692 = vmatprep.subr.mxu0 0.0
    %693 = vmatpush1.msra.mxu0 0.0
    %694 = vmatprep.subr.mxu0 0.0
    %695 = vmatpush1.msra.mxu0 0.0
    %696 = vmatprep.subr.mxu0 0.0
    %697 = vmatpush1.msra.mxu0 0.0
    %698 = vmatprep.subr.mxu0 0.0
    %699 = vmatpush1.msra.mxu0 0.0
    %700 = vmatprep.mubr.f32.mxu0 0.0
    %701 = vmatmul.mubr.f32.gmra.mrb[0].mxu0 %v634
    %v702 = vpop.f32.mrb[0].mxu0
    %v703 = vadd.f32 0.0, %v702
    %v704 = vpop.f32.mrb[0].mxu0
    %705 = vdwg.mxu0
    %707 = vrot.lane.b32.xlu0 %v703, 16
    %v708 = vpop.permute.xlu0 %707
    %v710 = vsel %vm378, %v538, %v708
    %712 = vrot.lane.b32.xlu0 %v372, 96
    %v713 = vpop.permute.xlu0 %712
    %v714 = vsel %vm378, %v372, 0
    %v716 = vsel %vm378, %v713, 0
    %718 = vmatprep.subr.mxu0 0.0
    %719 = vmatpush1.xpose.msra.mxu0 %v716
    %720 = vmatprep.subr.mxu0 0.0
    %721 = vmatpush1.xpose.msra.mxu0 0.0
    %722 = vmatprep.subr.mxu0 0.0
    %723 = vmatpush1.xpose.msra.mxu0 0.0
    %724 = vmatprep.subr.mxu0 0.0
    %725 = vmatpush1.xpose.msra.mxu0 0.0
    %726 = vmatprep.subr.mxu0 0.0
    %727 = vmatpush1.xpose.msra.mxu0 0.0
    %728 = vmatprep.subr.mxu0 0.0
    %729 = vmatpush1.xpose.msra.mxu0 0.0
    %730 = vmatprep.subr.mxu0 0.0
    %731 = vmatpush1.xpose.msra.mxu0 0.0
    %732 = vmatprep.subr.mxu0 0.0
    %733 = vmatpush1.xpose.msra.mxu0 0.0
    %734 = vmatprep.subr.mxu0 0.0
    %735 = vmatpush1.xpose.msra.mxu0 0.0
    %736 = vmatprep.subr.mxu0 0.0
    %737 = vmatpush1.xpose.msra.mxu0 0.0
    %738 = vmatprep.subr.mxu0 0.0
    %739 = vmatpush1.xpose.msra.mxu0 0.0
    %740 = vmatprep.subr.mxu0 0.0
    %741 = vmatpush1.xpose.msra.mxu0 0.0
    %742 = vmatprep.subr.mxu0 0.0
    %743 = vmatpush1.xpose.msra.mxu0 0.0
    %744 = vmatprep.subr.mxu0 0.0
    %745 = vmatpush1.xpose.msra.mxu0 0.0
    %746 = vmatprep.subr.mxu0 0.0
    %747 = vmatpush1.xpose.msra.mxu0 0.0
    %748 = vmatprep.subr.mxu0 0.0
    %749 = vmatpush1.xpose.msra.mxu0 0.0
    %750 = vmatprep.subr.mxu0 0.0
    %751 = vmatpush1.xpose.msra.mxu0 0.0
    %752 = vmatprep.subr.mxu0 0.0
    %753 = vmatpush1.xpose.msra.mxu0 0.0
    %754 = vmatprep.subr.mxu0 0.0
    %755 = vmatpush1.xpose.msra.mxu0 0.0
    %756 = vmatprep.subr.mxu0 0.0
    %757 = vmatpush1.xpose.msra.mxu0 0.0
    %758 = vmatprep.subr.mxu0 0.0
    %759 = vmatpush1.xpose.msra.mxu0 0.0
    %760 = vmatprep.subr.mxu0 0.0
    %761 = vmatpush1.xpose.msra.mxu0 0.0
    %762 = vmatprep.subr.mxu0 0.0
    %763 = vmatpush1.xpose.msra.mxu0 0.0
    %764 = vmatprep.subr.mxu0 0.0
    %765 = vmatpush1.xpose.msra.mxu0 0.0
    %766 = vmatprep.subr.mxu0 0.0
    %767 = vmatpush1.xpose.msra.mxu0 0.0
    %768 = vmatprep.subr.mxu0 0.0
    %769 = vmatpush1.xpose.msra.mxu0 0.0
    %770 = vmatprep.subr.mxu0 0.0
    %771 = vmatpush1.xpose.msra.mxu0 0.0
    %772 = vmatprep.subr.mxu0 0.0
    %773 = vmatpush1.xpose.msra.mxu0 0.0
    %774 = vmatprep.subr.mxu0 0.0
    %775 = vmatpush1.xpose.msra.mxu0 0.0
    %776 = vmatprep.subr.mxu0 0.0
    %777 = vmatpush1.xpose.msra.mxu0 0.0
    %778 = vmatprep.subr.mxu0 0.0
    %779 = vmatpush1.xpose.msra.mxu0 0.0
    %780 = vmatprep.subr.mxu0 0.0
    %781 = vmatpush1.xpose.msra.mxu0 0.0
    %782 = vmatprep.mubr.f32.mxu0 0.0
    %783 = vmatmul.mubr.f32.gmra.mrb[0].mxu0 %v714
    %v784 = vpop.f32.mrb[0].mxu0
    %v785 = vadd.f32 %v234, %v784
    %v786 = vpop.f32.mrb[0].mxu0
    %787 = vdwg.mxu0
    %v788 = vsel %vm453, %v785, -inf
    %789 = vmax.xlane.f32.xlu0 %v788
    %v790 = vpop.xlane.xlu0 %789
    %v791 = vsub.f32 %v785, %v790
    %v792 = vmul.f32 %v791, 1.442695
    %v793 = vpow.pop %v792
    %v794 = vsel %vm453, %v793, 0.0
    %795 = vadd.xlane.f32.xlu0 %v794
    %v796 = vpop.xlane.xlu0 %795
    %v797 = vrcp.pop %v796
    %v798 = vmul.f32 %v793, %v797
    %799 = vrot.lane.b32.xlu0 %v372, 64
    %v800 = vpop.permute.xlu0 %799
    %v803 = vsel %vm453, %v798, 0
    %805 = vmatprep.subr.mxu0 0.0
    %806 = vmatpush1.msra.mxu0 %v800
    %807 = vmatprep.subr.mxu0 0.0
    %808 = vmatpush1.msra.mxu0 0.0
    %809 = vmatprep.subr.mxu0 0.0
    %810 = vmatpush1.msra.mxu0 0.0
    %811 = vmatprep.subr.mxu0 0.0
    %812 = vmatpush1.msra.mxu0 0.0
    %813 = vmatprep.subr.mxu0 0.0
    %814 = vmatpush1.msra.mxu0 0.0
    %815 = vmatprep.subr.mxu0 0.0
    %816 = vmatpush1.msra.mxu0 0.0
    %817 = vmatprep.subr.mxu0 0.0
    %818 = vmatpush1.msra.mxu0 0.0
    %819 = vmatprep.subr.mxu0 0.0
    %820 = vmatpush1.msra.mxu0 0.0
    %821 = vmatprep.subr.mxu0 0.0
    %822 = vmatpush1.msra.mxu0 0.0
    %823 = vmatprep.subr.mxu0 0.0
    %824 = vmatpush1.msra.mxu0 0.0
    %825 = vmatprep.subr.mxu0 0.0
    %826 = vmatpush1.msra.mxu0 0.0
    %827 = vmatprep.subr.mxu0 0.0
    %828 = vmatpush1.msra.mxu0 0.0
    %829 = vmatprep.subr.mxu0 0.0
    %830 = vmatpush1.msra.mxu0 0.0
    %831 = vmatprep.subr.mxu0 0.0
    %832 = vmatpush1.msra.mxu0 0.0
    %833 = vmatprep.subr.mxu0 0.0
    %834 = vmatpush1.msra.mxu0 0.0
    %835 = vmatprep.subr.mxu0 0.0
    %836 = vmatpush1.msra.mxu0 0.0
    %837 = vmatprep.subr.mxu0 0.0
    %838 = vmatpush1.msra.mxu0 0.0
    %839 = vmatprep.subr.mxu0 0.0
    %840 = vmatpush1.msra.mxu0 0.0
    %841 = vmatprep.subr.mxu0 0.0
    %842 = vmatpush1.msra.mxu0 0.0
    %843 = vmatprep.subr.mxu0 0.0
    %844 = vmatpush1.msra.mxu0 0.0
    %845 = vmatprep.subr.mxu0 0.0
    %846 = vmatpush1.msra.mxu0 0.0
    %847 = vmatprep.subr.mxu0 0.0
    %848 = vmatpush1.msra.mxu0 0.0
    %849 = vmatprep.subr.mxu0 0.0
    %850 = vmatpush1.msra.mxu0 0.0
    %851 = vmatprep.subr.mxu0 0.0
    %852 = vmatpush1.msra.mxu0 0.0
    %853 = vmatprep.subr.mxu0 0.0
    %854 = vmatpush1.msra.mxu0 0.0
    %855 = vmatprep.subr.mxu0 0.0
    %856 = vmatpush1.msra.mxu0 0.0
    %857 = vmatprep.subr.mxu0 0.0
    %858 = vmatpush1.msra.mxu0 0.0
    %859 = vmatprep.subr.mxu0 0.0
    %860 = vmatpush1.msra.mxu0 0.0
    %861 = vmatprep.subr.mxu0 0.0
    %862 = vmatpush1.msra.mxu0 0.0
    %863 = vmatprep.subr.mxu0 0.0
    %864 = vmatpush1.msra.mxu0 0.0
    %865 = vmatprep.subr.mxu0 0.0
    %866 = vmatpush1.msra.mxu0 0.0
    %867 = vmatprep.subr.mxu0 0.0
    %868 = vmatpush1.msra.mxu0 0.0
    %869 = vmatprep.mubr.f32.mxu0 0.0
    %870 = vmatmul.mubr.f32.gmra.mrb[0].mxu0 %v803
    %v871 = vpop.f32.mrb[0].mxu0
    %v872 = vadd.f32 0.0, %v871
    %v873 = vpop.f32.mrb[0].mxu0
    %874 = vdwg.mxu0
    %875 = vrot.lane.b32.xlu0 %v372, 112
    %v876 = vpop.permute.xlu0 %875
    %877 = vrot.lane.b32.xlu0 %v372, 80
    %v878 = vpop.permute.xlu0 %877
    %v879 = vsel %vm378, %v876, 0
    %v881 = vsel %vm378, %v878, 0
    %883 = vmatprep.subr.mxu0 0.0
    %884 = vmatpush1.xpose.msra.mxu0 %v881
    %885 = vmatprep.subr.mxu0 0.0
    %886 = vmatpush1.xpose.msra.mxu0 0.0
    %887 = vmatprep.subr.mxu0 0.0
    %888 = vmatpush1.xpose.msra.mxu0 0.0
    %889 = vmatprep.subr.mxu0 0.0
    %890 = vmatpush1.xpose.msra.mxu0 0.0
    %891 = vmatprep.subr.mxu0 0.0
    %892 = vmatpush1.xpose.msra.mxu0 0.0
    %893 = vmatprep.subr.mxu0 0.0
    %894 = vmatpush1.xpose.msra.mxu0 0.0
    %895 = vmatprep.subr.mxu0 0.0
    %896 = vmatpush1.xpose.msra.mxu0 0.0
    %897 = vmatprep.subr.mxu0 0.0
    %898 = vmatpush1.xpose.msra.mxu0 0.0
    %899 = vmatprep.subr.mxu0 0.0
    %900 = vmatpush1.xpose.msra.mxu0 0.0
    %901 = vmatprep.subr.mxu0 0.0
    %902 = vmatpush1.xpose.msra.mxu0 0.0
    %903 = vmatprep.subr.mxu0 0.0
    %904 = vmatpush1.xpose.msra.mxu0 0.0
    %905 = vmatprep.subr.mxu0 0.0
    %906 = vmatpush1.xpose.msra.mxu0 0.0
    %907 = vmatprep.subr.mxu0 0.0
    %908 = vmatpush1.xpose.msra.mxu0 0.0
    %909 = vmatprep.subr.mxu0 0.0
    %910 = vmatpush1.xpose.msra.mxu0 0.0
    %911 = vmatprep.subr.mxu0 0.0
    %912 = vmatpush1.xpose.msra.mxu0 0.0
    %913 = vmatprep.subr.mxu0 0.0
    %914 = vmatpush1.xpose.msra.mxu0 0.0
    %915 = vmatprep.subr.mxu0 0.0
    %916 = vmatpush1.xpose.msra.mxu0 0.0
    %917 = vmatprep.subr.mxu0 0.0
    %918 = vmatpush1.xpose.msra.mxu0 0.0
    %919 = vmatprep.subr.mxu0 0.0
    %920 = vmatpush1.xpose.msra.mxu0 0.0
    %921 = vmatprep.subr.mxu0 0.0
    %922 = vmatpush1.xpose.msra.mxu0 0.0
    %923 = vmatprep.subr.mxu0 0.0
    %924 = vmatpush1.xpose.msra.mxu0 0.0
    %925 = vmatprep.subr.mxu0 0.0
    %926 = vmatpush1.xpose.msra.mxu0 0.0
    %927 = vmatprep.subr.mxu0 0.0
    %928 = vmatpush1.xpose.msra.mxu0 0.0
    %929 = vmatprep.subr.mxu0 0.0
    %930 = vmatpush1.xpose.msra.mxu0 0.0
    %931 = vmatprep.subr.mxu0 0.0
    %932 = vmatpush1.xpose.msra.mxu0 0.0
    %933 = vmatprep.subr.mxu0 0.0
    %934 = vmatpush1.xpose.msra.mxu0 0.0
    %935 = vmatprep.subr.mxu0 0.0
    %936 = vmatpush1.xpose.msra.mxu0 0.0
    %937 = vmatprep.subr.mxu0 0.0
    %938 = vmatpush1.xpose.msra.mxu0 0.0
    %939 = vmatprep.subr.mxu0 0.0
    %940 = vmatpush1.xpose.msra.mxu0 0.0
    %941 = vmatprep.subr.mxu0 0.0
    %942 = vmatpush1.xpose.msra.mxu0 0.0
    %943 = vmatprep.subr.mxu0 0.0
    %944 = vmatpush1.xpose.msra.mxu0 0.0
    %945 = vmatprep.subr.mxu0 0.0
    %946 = vmatpush1.xpose.msra.mxu0 0.0
    %947 = vmatprep.mubr.f32.mxu0 0.0
    %948 = vmatmul.mubr.f32.gmra.mrb[0].mxu0 %v879
    %v949 = vpop.f32.mrb[0].mxu0
    %v950 = vadd.f32 %v234, %v949
    %v951 = vpop.f32.mrb[0].mxu0
    %952 = vdwg.mxu0
    %v953 = vsel %vm453, %v950, -inf
    %954 = vmax.xlane.f32.xlu0 %v953
    %v955 = vpop.xlane.xlu0 %954
    %v956 = vsub.f32 %v950, %v955
    %v957 = vmul.f32 %v956, 1.442695
    %v958 = vpow.pop %v957
    %v959 = vsel %vm453, %v958, 0.0
    %960 = vadd.xlane.f32.xlu0 %v959
    %v961 = vpop.xlane.xlu0 %960
    %v962 = vrcp.pop %v961
    %v963 = vmul.f32 %v958, %v962
    %964 = vrot.lane.b32.xlu0 %v372, 48
    %v965 = vpop.permute.xlu0 %964
    %v968 = vsel %vm453, %v963, 0
    %970 = vmatprep.subr.mxu0 0.0
    %971 = vmatpush1.msra.mxu0 %v965
    %972 = vmatprep.subr.mxu0 0.0
    %973 = vmatpush1.msra.mxu0 0.0
    %974 = vmatprep.subr.mxu0 0.0
    %975 = vmatpush1.msra.mxu0 0.0
    %976 = vmatprep.subr.mxu0 0.0
    %977 = vmatpush1.msra.mxu0 0.0
    %978 = vmatprep.subr.mxu0 0.0
    %979 = vmatpush1.msra.mxu0 0.0
    %980 = vmatprep.subr.mxu0 0.0
    %981 = vmatpush1.msra.mxu0 0.0
    %982 = vmatprep.subr.mxu0 0.0
    %983 = vmatpush1.msra.mxu0 0.0
    %984 = vmatprep.subr.mxu0 0.0
    %985 = vmatpush1.msra.mxu0 0.0
    %986 = vmatprep.subr.mxu0 0.0
    %987 = vmatpush1.msra.mxu0 0.0
    %988 = vmatprep.subr.mxu0 0.0
    %989 = vmatpush1.msra.mxu0 0.0
    %990 = vmatprep.subr.mxu0 0.0
    %991 = vmatpush1.msra.mxu0 0.0
    %992 = vmatprep.subr.mxu0 0.0
    %993 = vmatpush1.msra.mxu0 0.0
    %994 = vmatprep.subr.mxu0 0.0
    %995 = vmatpush1.msra.mxu0 0.0
    %996 = vmatprep.subr.mxu0 0.0
    %997 = vmatpush1.msra.mxu0 0.0
    %998 = vmatprep.subr.mxu0 0.0
    %999 = vmatpush1.msra.mxu0 0.0
    %1000 = vmatprep.subr.mxu0 0.0
    %1001 = vmatpush1.msra.mxu0 0.0
    %1002 = vmatprep.subr.mxu0 0.0
    %1003 = vmatpush1.msra.mxu0 0.0
    %1004 = vmatprep.subr.mxu0 0.0
    %1005 = vmatpush1.msra.mxu0 0.0
    %1006 = vmatprep.subr.mxu0 0.0
    %1007 = vmatpush1.msra.mxu0 0.0
    %1008 = vmatprep.subr.mxu0 0.0
    %1009 = vmatpush1.msra.mxu0 0.0
    %1010 = vmatprep.subr.mxu0 0.0
    %1011 = vmatpush1.msra.mxu0 0.0
    %1012 = vmatprep.subr.mxu0 0.0
    %1013 = vmatpush1.msra.mxu0 0.0
    %1014 = vmatprep.subr.mxu0 0.0
    %1015 = vmatpush1.msra.mxu0 0.0
    %1016 = vmatprep.subr.mxu0 0.0
    %1017 = vmatpush1.msra.mxu0 0.0
    %1018 = vmatprep.subr.mxu0 0.0
    %1019 = vmatpush1.msra.mxu0 0.0
    %1020 = vmatprep.subr.mxu0 0.0
    %1021 = vmatpush1.msra.mxu0 0.0
    %1022 = vmatprep.subr.mxu0 0.0
    %1023 = vmatpush1.msra.mxu0 0.0
    %1024 = vmatprep.subr.mxu0 0.0
    %1025 = vmatpush1.msra.mxu0 0.0
    %1026 = vmatprep.subr.mxu0 0.0
    %1027 = vmatpush1.msra.mxu0 0.0
    %1028 = vmatprep.subr.mxu0 0.0
    %1029 = vmatpush1.msra.mxu0 0.0
    %1030 = vmatprep.subr.mxu0 0.0
    %1031 = vmatpush1.msra.mxu0 0.0
    %1032 = vmatprep.subr.mxu0 0.0
    %1033 = vmatpush1.msra.mxu0 0.0
    %1034 = vmatprep.mubr.f32.mxu0 0.0
    %1035 = vmatmul.mubr.f32.gmra.mrb[0].mxu0 %v968
    %v1036 = vpop.f32.mrb[0].mxu0
    %v1037 = vadd.f32 0.0, %v1036
    %v1038 = vpop.f32.mrb[0].mxu0
    %1039 = vdwg.mxu0
    %1041 = vrot.lane.b32.xlu0 %v1037, 16
    %v1042 = vpop.permute.xlu0 %1041
    %v1044 = vsel %vm378, %v872, %v1042
    %v1045 = vld [vmem:[%s6] sm:$0xff]
    %v1046 = vld [vmem:[%s6 + $0x8] sm:$0xff]
    %v1047 = vld [vmem:[%s6 + $0x10] sm:$0xff]
    %v1048 = vld [vmem:[%s6 + $0x18] sm:$0xff]
    %v1049 = vld [vmem:[#allocation12] sm:$0x1]
    %v1051 = vlaneseq
    %v1052 = vshrl.u32 %v1051, 7
    %v1053 = vsub.s32 0, %v1052
    %v1054 = vrot.slane %v1049, %v1053
    %v1057 = vsel %vm239, %v710, 0
    %v1060 = vsel %vm239, %v1044, 0
    %1062 = vmatprep.subr.mxu0 0.0
    %1063 = vmatpush1.msra.mxu0 %v1045
    %1064 = vmatprep.subr.mxu0 0.0
    %1065 = vmatpush1.msra.mxu0 %v1046
    %1066 = vmatprep.subr.mxu0 0.0
    %1067 = vmatpush1.msra.mxu0 %v1047
    %1068 = vmatprep.subr.mxu0 0.0
    %1069 = vmatpush1.msra.mxu0 %v1048
    %1070 = vmatprep.subr.mxu0 0.0
    %1071 = vmatpush1.msra.mxu0 0.0
    %1072 = vmatprep.subr.mxu0 0.0
    %1073 = vmatpush1.msra.mxu0 0.0
    %1074 = vmatprep.subr.mxu0 0.0
    %1075 = vmatpush1.msra.mxu0 0.0
    %1076 = vmatprep.subr.mxu0 0.0
    %1077 = vmatpush1.msra.mxu0 0.0
    %1078 = vmatprep.subr.mxu0 0.0
    %1079 = vmatpush1.msra.mxu0 0.0
    %1080 = vmatprep.subr.mxu0 0.0
    %1081 = vmatpush1.msra.mxu0 0.0
    %1082 = vmatprep.subr.mxu0 0.0
    %1083 = vmatpush1.msra.mxu0 0.0
    %1084 = vmatprep.subr.mxu0 0.0
    %1085 = vmatpush1.msra.mxu0 0.0
    %1086 = vmatprep.subr.mxu0 0.0
    %1087 = vmatpush1.msra.mxu0 0.0
    %1088 = vmatprep.subr.mxu0 0.0
    %1089 = vmatpush1.msra.mxu0 0.0
    %1090 = vmatprep.subr.mxu0 0.0
    %1091 = vmatpush1.msra.mxu0 0.0
    %1092 = vmatprep.subr.mxu0 0.0
    %1093 = vmatpush1.msra.mxu0 0.0
    %1094 = vmatprep.subr.mxu0 0.0
    %1095 = vmatpush1.msra.mxu0 0.0
    %1096 = vmatprep.subr.mxu0 0.0
    %1097 = vmatpush1.msra.mxu0 0.0
    %1098 = vmatprep.subr.mxu0 0.0
    %1099 = vmatpush1.msra.mxu0 0.0
    %1100 = vmatprep.subr.mxu0 0.0
    %1101 = vmatpush1.msra.mxu0 0.0
    %1102 = vmatprep.subr.mxu0 0.0
    %1103 = vmatpush1.msra.mxu0 0.0
    %1104 = vmatprep.subr.mxu0 0.0
    %1105 = vmatpush1.msra.mxu0 0.0
    %1106 = vmatprep.subr.mxu0 0.0
    %1107 = vmatpush1.msra.mxu0 0.0
    %1108 = vmatprep.subr.mxu0 0.0
    %1109 = vmatpush1.msra.mxu0 0.0
    %1110 = vmatprep.subr.mxu0 0.0
    %1111 = vmatpush1.msra.mxu0 0.0
    %1112 = vmatprep.subr.mxu0 0.0
    %1113 = vmatpush1.msra.mxu0 0.0
    %1114 = vmatprep.subr.mxu0 0.0
    %1115 = vmatpush1.msra.mxu0 0.0
    %1116 = vmatprep.subr.mxu0 0.0
    %1117 = vmatpush1.msra.mxu0 0.0
    %1118 = vmatprep.subr.mxu0 0.0
    %1119 = vmatpush1.msra.mxu0 0.0
    %1120 = vmatprep.subr.mxu0 0.0
    %1121 = vmatpush1.msra.mxu0 0.0
    %1122 = vmatprep.subr.mxu0 0.0
    %1123 = vmatpush1.msra.mxu0 0.0
    %1124 = vmatprep.subr.mxu0 0.0
    %1125 = vmatpush1.msra.mxu0 0.0
    %1126 = vmatprep.mubr.f32.mxu0 0.0
    %1127 = vmatmul.mubr.f32.gmra.mrb[0].mxu0 %v1057
    %v1128 = vpop.f32.mrb[0].mxu0
    %v1129 = vadd.f32 %v1054, %v1128
    %v1130 = vpop.f32.mrb[0].mxu0
    %1131 = vmatprep.mubr.f32.mxu0 0.0
    %1132 = vmatmul.mubr.f32.gmra.mrb[0].mxu0 %v1060
    %v1133 = vpop.f32.mrb[0].mxu0
    %v1134 = vadd.f32 %v1054, %v1133
    %v1135 = vpop.f32.mrb[0].mxu0
    %1136 = vdwg.mxu0
    %v1137 = vadd.f32 %v281, %v1129
    %v1138 = vadd.f32 %v282, %v1134
    %v1139 = vld [vmem:[#allocation13] sm:$0x1]
    %v1140 = vld [vmem:[#allocation15] sm:$0x1]
    %v1141 = vsel %vm239, %v1137, 0.0
    %1142 = vadd.xlane.f32.xlu0 %v1141
    %v1143 = vpop.xlane.xlu0 %1142
    %v1144 = vsel %vm239, %v1138, 0.0
    %1145 = vadd.xlane.f32.xlu0 %v1144
    %v1146 = vpop.xlane.xlu0 %1145
    %v1147 = vmul.f32 %v1143, %v246
    %v1148 = vmul.f32 %v1146, %v246
    %v1149 = vsub.f32 %v1137, %v1147
    %v1150 = vsub.f32 %v1138, %v1148
    %v1151 = vmul.f32 %v1149, %v1149
    %v1152 = vmul.f32 %v1150, %v1150
    %v1153 = vsel %vm239, %v1151, 0.0
    %1154 = vadd.xlane.f32.xlu0 %v1153
    %v1155 = vpop.xlane.xlu0 %1154
    %v1156 = vsel %vm239, %v1152, 0.0
    %1157 = vadd.xlane.f32.xlu0 %v1156
    %v1158 = vpop.xlane.xlu0 %1157
    %v1159 = vmul.f32 %v1155, %v246
    %v1160 = vmul.f32 %v1158, %v246
    %v1161 = vadd.f32 %v1159, 1e-12
    %v1162 = vadd.f32 %v1160, 1e-12
    %v1163 = vrsqrt.pop %v1161
    %v1164 = vrsqrt.pop %v1162
    %v1165 = vmul.f32 %v1149, %v1163
    %v1166 = vmul.f32 %v1150, %v1164
    %v1168 = vlaneseq
    %v1169 = vshrl.u32 %v1168, 7
    %v1170 = vsub.s32 0, %v1169
    %v1171 = vrot.slane %v1139, %v1170
    %v1173 = vmul.f32 %v1165, %v1171
    %v1174 = vmul.f32 %v1166, %v1171
    %v1176 = vlaneseq
    %v1177 = vshrl.u32 %v1176, 7
    %v1178 = vsub.s32 0, %v1177
    %v1179 = vrot.slane %v1140, %v1178
    %v1181 = vadd.f32 %v1173, %v1179
    %v1182 = vadd.f32 %v1174, %v1179
    %v1183 = vld [vmem:[%s10] sm:$0xff]
    %v1184 = vld [vmem:[%s10 + $0x8] sm:$0xff]
    %v1185 = vld [vmem:[%s10 + $0x10] sm:$0xff]
    %v1186 = vld [vmem:[%s10 + $0x18] sm:$0xff]
    %v1187 = vld [vmem:[#allocation16] sm:$0x1]
    %v1189 = vlaneseq
    %v1190 = vshrl.u32 %v1189, 7
    %v1191 = vsub.s32 0, %v1190
    %v1192 = vrot.slane %v1187, %v1191
    %v1195 = vsel %vm239, %v1181, 0
    %v1198 = vsel %vm239, %v1182, 0
    %1200 = vmatprep.subr.mxu0 0.0
    %1201 = vmatpush1.msra.mxu0 %v1183
    %1202 = vmatprep.subr.mxu0 0.0
    %1203 = vmatpush1.msra.mxu0 %v1184
    %1204 = vmatprep.subr.mxu0 0.0
    %1205 = vmatpush1.msra.mxu0 %v1185
    %1206 = vmatprep.subr.mxu0 0.0
    %1207 = vmatpush1.msra.mxu0 %v1186
    %1208 = vmatprep.subr.mxu0 0.0
    %1209 = vmatpush1.msra.mxu0 0.0
    %1210 = vmatprep.subr.mxu0 0.0
    %1211 = vmatpush1.msra.mxu0 0.0
    %1212 = vmatprep.subr.mxu0 0.0
    %1213 = vmatpush1.msra.mxu0 0.0
    %1214 = vmatprep.subr.mxu0 0.0
    %1215 = vmatpush1.msra.mxu0 0.0
    %1216 = vmatprep.subr.mxu0 0.0
    %1217 = vmatpush1.msra.mxu0 0.0
    %1218 = vmatprep.subr.mxu0 0.0
    %1219 = vmatpush1.msra.mxu0 0.0
    %1220 = vmatprep.subr.mxu0 0.0
    %1221 = vmatpush1.msra.mxu0 0.0
    %1222 = vmatprep.subr.mxu0 0.0
    %1223 = vmatpush1.msra.mxu0 0.0
    %1224 = vmatprep.subr.mxu0 0.0
    %1225 = vmatpush1.msra.mxu0 0.0
    %1226 = vmatprep.subr.mxu0 0.0
    %1227 = vmatpush1.msra.mxu0 0.0
    %1228 = vmatprep.subr.mxu0 0.0
    %1229 = vmatpush1.msra.mxu0 0.0
    %1230 = vmatprep.subr.mxu0 0.0
    %1231 = vmatpush1.msra.mxu0 0.0
    %1232 = vmatprep.subr.mxu0 0.0
    %1233 = vmatpush1.msra.mxu0 0.0
    %1234 = vmatprep.subr.mxu0 0.0
    %1235 = vmatpush1.msra.mxu0 0.0
    %1236 = vmatprep.subr.mxu0 0.0
    %1237 = vmatpush1.msra.mxu0 0.0
    %1238 = vmatprep.subr.mxu0 0.0
    %1239 = vmatpush1.msra.mxu0 0.0
    %1240 = vmatprep.subr.mxu0 0.0
    %1241 = vmatpush1.msra.mxu0 0.0
    %1242 = vmatprep.subr.mxu0 0.0
    %1243 = vmatpush1.msra.mxu0 0.0
    %1244 = vmatprep.subr.mxu0 0.0
    %1245 = vmatpush1.msra.mxu0 0.0
    %1246 = vmatprep.subr.mxu0 0.0
    %1247 = vmatpush1.msra.mxu0 0.0
    %1248 = vmatprep.subr.mxu0 0.0
    %1249 = vmatpush1.msra.mxu0 0.0
    %1250 = vmatprep.subr.mxu0 0.0
    %1251 = vmatpush1.msra.mxu0 0.0
    %1252 = vmatprep.subr.mxu0 0.0
    %1253 = vmatpush1.msra.mxu0 0.0
    %1254 = vmatprep.subr.mxu0 0.0
    %1255 = vmatpush1.msra.mxu0 0.0
    %1256 = vmatprep.subr.mxu0 0.0
    %1257 = vmatpush1.msra.mxu0 0.0
    %1258 = vmatprep.subr.mxu0 0.0
    %1259 = vmatpush1.msra.mxu0 0.0
    %1260 = vmatprep.subr.mxu0 0.0
    %1261 = vmatpush1.msra.mxu0 0.0
    %1262 = vmatprep.subr.mxu0 0.0
    %1263 = vmatpush1.msra.mxu0 0.0
    %1264 = vmatprep.mubr.f32.mxu0 0.0
    %1265 = vmatmul.mubr.f32.gmra.mrb[0].mxu0 %v1195
    %v1266 = vpop.f32.mrb[0].mxu0
    %v1267 = vadd.f32 %v1192, %v1266
    %v1268 = vpop.f32.mrb[0].mxu0
    %1269 = vmatprep.mubr.f32.mxu0 0.0
    %1270 = vmatmul.mubr.f32.gmra.mrb[0].mxu0 %v1198
    %v1271 = vpop.f32.mrb[0].mxu0
    %v1272 = vadd.f32 %v1192, %v1271
    %v1273 = vpop.f32.mrb[0].mxu0
    %1274 = vdwg.mxu0
    %v1275 = vmul.f32 %v1267, 0.5
    %v1276 = vmul.f32 %v1272, 0.5
    %v1277 = vmul.f32 %v1267, 0.044715
    %v1278 = vmul.f32 %v1272, 0.044715
    %v1279 = vmul.f32 %v1277, %v1267
    %v1280 = vmul.f32 %v1278, %v1272
    %v1281 = vmul.f32 %v1279, %v1267
    %v1282 = vmul.f32 %v1280, %v1272
    %v1283 = vadd.f32 %v1267, %v1281
    %v1284 = vadd.f32 %v1272, %v1282
    %v1285 = vmul.f32 %v1283, 0.7978846
    %v1286 = vmul.f32 %v1284, 0.7978846
    %v1287 = vtanh.pop %v1285
    %v1288 = vtanh.pop %v1286
    %v1289 = vadd.f32 %v1287, 1.0
    %v1290 = vadd.f32 %v1288, 1.0
    %v1291 = vmul.f32 %v1275, %v1289
    %v1292 = vmul.f32 %v1276, %v1290
    %v1293 = vld [vmem:[%s12] sm:$0xff]
    %v1294 = vld [vmem:[%s12 + $0x8] sm:$0xff]
    %v1295 = vld [vmem:[%s12 + $0x10] sm:$0xff]
    %v1296 = vld [vmem:[%s12 + $0x18] sm:$0xff]
    %v1297 = vld [vmem:[%s12 + $0x20] sm:$0xff]
    %v1298 = vld [vmem:[%s12 + $0x28] sm:$0xff]
    %v1299 = vld [vmem:[%s12 + $0x30] sm:$0xff]
    %v1300 = vld [vmem:[%s12 + $0x38] sm:$0xff]
    %v1301 = vld [vmem:[#allocation18] sm:$0x1]
    %v1303 = vlaneseq
    %v1304 = vshrl.u32 %v1303, 7
    %v1305 = vsub.s32 0, %v1304
    %v1306 = vrot.slane %v1301, %v1305
    %vm1308 = vcmask 523264
    %v1310 = vsel %vm1308, %v1291, 0
    %v1313 = vsel %vm1308, %v1292, 0
    %1315 = vmatprep.subr.mxu0 0.0
    %1316 = vmatpush1.msra.mxu0 %v1293
    %1317 = vmatprep.subr.mxu0 0.0
    %1318 = vmatpush1.msra.mxu0 %v1294
    %1319 = vmatprep.subr.mxu0 0.0
    %1320 = vmatpush1.msra.mxu0 %v1295
    %1321 = vmatprep.subr.mxu0 0.0
    %1322 = vmatpush1.msra.mxu0 %v1296
    %1323 = vmatprep.subr.mxu0 0.0
    %1324 = vmatpush1.msra.mxu0 %v1297
    %1325 = vmatprep.subr.mxu0 0.0
    %1326 = vmatpush1.msra.mxu0 %v1298
    %1327 = vmatprep.subr.mxu0 0.0
    %1328 = vmatpush1.msra.mxu0 %v1299
    %1329 = vmatprep.subr.mxu0 0.0
    %1330 = vmatpush1.msra.mxu0 %v1300
    %1331 = vmatprep.subr.mxu0 0.0
    %1332 = vmatpush1.msra.mxu0 0.0
    %1333 = vmatprep.subr.mxu0 0.0
    %1334 = vmatpush1.msra.mxu0 0.0
    %1335 = vmatprep.subr.mxu0 0.0
    %1336 = vmatpush1.msra.mxu0 0.0
    %1337 = vmatprep.subr.mxu0 0.0
    %1338 = vmatpush1.msra.mxu0 0.0
    %1339 = vmatprep.subr.mxu0 0.0
    %1340 = vmatpush1.msra.mxu0 0.0
    %1341 = vmatprep.subr.mxu0 0.0
    %1342 = vmatpush1.msra.mxu0 0.0
    %1343 = vmatprep.subr.mxu0 0.0
    %1344 = vmatpush1.msra.mxu0 0.0
    %1345 = vmatprep.subr.mxu0 0.0
    %1346 = vmatpush1.msra.mxu0 0.0
    %1347 = vmatprep.subr.mxu0 0.0
    %1348 = vmatpush1.msra.mxu0 0.0
    %1349 = vmatprep.subr.mxu0 0.0
    %1350 = vmatpush1.msra.mxu0 0.0
    %1351 = vmatprep.subr.mxu0 0.0
    %1352 = vmatpush1.msra.mxu0 0.0
    %1353 = vmatprep.subr.mxu0 0.0
    %1354 = vmatpush1.msra.mxu0 0.0
    %1355 = vmatprep.subr.mxu0 0.0
    %1356 = vmatpush1.msra.mxu0 0.0
    %1357 = vmatprep.subr.mxu0 0.0
    %1358 = vmatpush1.msra.mxu0 0.0
    %1359 = vmatprep.subr.mxu0 0.0
    %1360 = vmatpush1.msra.mxu0 0.0
    %1361 = vmatprep.subr.mxu0 0.0
    %1362 = vmatpush1.msra.mxu0 0.0
    %1363 = vmatprep.subr.mxu0 0.0
    %1364 = vmatpush1.msra.mxu0 0.0
    %1365 = vmatprep.subr.mxu0 0.0
    %1366 = vmatpush1.msra.mxu0 0.0
    %1367 = vmatprep.subr.mxu0 0.0
    %1368 = vmatpush1.msra.mxu0 0.0
    %1369 = vmatprep.subr.mxu0 0.0
    %1370 = vmatpush1.msra.mxu0 0.0
    %1371 = vmatprep.subr.mxu0 0.0
    %1372 = vmatpush1.msra.mxu0 0.0
    %1373 = vmatprep.subr.mxu0 0.0
    %1374 = vmatpush1.msra.mxu0 0.0
    %1375 = vmatprep.subr.mxu0 0.0
    %1376 = vmatpush1.msra.mxu0 0.0
    %1377 = vmatprep.subr.mxu0 0.0
    %1378 = vmatpush1.msra.mxu0 0.0
    %1379 = vmatprep.mubr.f32.mxu0 0.0
    %1380 = vmatmul.mubr.f32.gmra.mrb[0].mxu0 %v1310
    %v1381 = vpop.f32.mrb[0].mxu0
    %v1382 = vadd.f32 %v1306, %v1381
    %v1383 = vpop.f32.mrb[0].mxu0
    %1384 = vmatprep.mubr.f32.mxu0 0.0
    %1385 = vmatmul.mubr.f32.gmra.mrb[0].mxu0 %v1313
    %v1386 = vpop.f32.mrb[0].mxu0
    %v1387 = vadd.f32 %v1306, %v1386
    %v1388 = vpop.f32.mrb[0].mxu0
    %1389 = vdwg.mxu0
    %v1390 = vadd.f32 %v1181, %v1382
    %v1391 = vadd.f32 %v1182, %v1387
    %v1392 = vld [vmem:[#allocation19] sm:$0x1]
    %v1393 = vld [vmem:[#allocation21] sm:$0x1]
    %v1394 = vsel %vm239, %v1390, 0.0
    %1395 = vadd.xlane.f32.xlu0 %v1394
    %v1396 = vpop.xlane.xlu0 %1395
    %v1397 = vsel %vm239, %v1391, 0.0
    %1398 = vadd.xlane.f32.xlu0 %v1397
    %v1399 = vpop.xlane.xlu0 %1398
    %v1400 = vmul.f32 %v1396, %v246
    %v1401 = vmul.f32 %v1399, %v246
    %v1402 = vsub.f32 %v1390, %v1400
    %v1403 = vsub.f32 %v1391, %v1401
    %v1404 = vmul.f32 %v1402, %v1402
    %v1405 = vmul.f32 %v1403, %v1403
    %v1406 = vsel %vm239, %v1404, 0.0
    %1407 = vadd.xlane.f32.xlu0 %v1406
    %v1408 = vpop.xlane.xlu0 %1407
    %v1409 = vsel %vm239, %v1405, 0.0
    %1410 = vadd.xlane.f32.xlu0 %v1409
    %v1411 = vpop.xlane.xlu0 %1410
    %v1412 = vmul.f32 %v1408, %v246
    %v1413 = vmul.f32 %v1411, %v246
    %v1414 = vadd.f32 %v1412, 1e-12
    %v1415 = vadd.f32 %v1413, 1e-12
    %v1416 = vrsqrt.pop %v1414
    %v1417 = vrsqrt.pop %v1415
    %v1418 = vmul.f32 %v1402, %v1416
    %v1419 = vmul.f32 %v1403, %v1417
    %v1421 = vlaneseq
    %v1422 = vshrl.u32 %v1421, 7
    %v1423 = vsub.s32 0, %v1422
    %v1424 = vrot.slane %v1392, %v1423
    %v1426 = vmul.f32 %v1418, %v1424
    %v1427 = vmul.f32 %v1419, %v1424
    %v1429 = vlaneseq
    %v1430 = vshrl.u32 %v1429, 7
    %v1431 = vsub.s32 0, %v1430
    %v1432 = vrot.slane %v1393, %v1431
    %v1434 = vadd.f32 %v1426, %v1432
    %v1435 = vadd.f32 %v1427, %v1432
    %s1436 = scalar_lea.vmem %s4, 32
    %v1437 = vld [vmem:[%s1436] sm:$0xff]
    %v1438 = vld [vmem:[%s1436 + $0x8] sm:$0xff]
    %v1439 = vld [vmem:[%s1436 + $0x10] sm:$0xff]
    %v1440 = vld [vmem:[%s1436 + $0x18] sm:$0xff]
    %s1441 = scalar_lea.vmem [#allocation10], 1
    %v1442 = vld [vmem:[%s1441] sm:$0x1]
    %v1444 = vlaneseq
    %v1445 = vshrl.u32 %v1444, 7
    %v1446 = vsub.s32 0, %v1445
    %v1447 = vrot.slane %v1442, %v1446
    %v1450 = vsel %vm239, %v1434, 0
    %v1453 = vsel %vm239, %v1435, 0
    %1455 = vmatprep.subr.mxu0 0.0
    %1456 = vmatpush1.msra.mxu0 %v1437
    %1457 = vmatprep.subr.mxu0 0.0
    %1458 = vmatpush1.msra.mxu0 %v1438
    %1459 = vmatprep.subr.mxu0 0.0
    %1460 = vmatpush1.msra.mxu0 %v1439
    %1461 = vmatprep.subr.mxu0 0.0
    %1462 = vmatpush1.msra.mxu0 %v1440
    %1463 = vmatprep.subr.mxu0 0.0
    %1464 = vmatpush1.msra.mxu0 0.0
    %1465 = vmatprep.subr.mxu0 0.0
    %1466 = vmatpush1.msra.mxu0 0.0
    %1467 = vmatprep.subr.mxu0 0.0
    %1468 = vmatpush1.msra.mxu0 0.0
    %1469 = vmatprep.subr.mxu0 0.0
    %1470 = vmatpush1.msra.mxu0 0.0
    %1471 = vmatprep.subr.mxu0 0.0
    %1472 = vmatpush1.msra.mxu0 0.0
    %1473 = vmatprep.subr.mxu0 0.0
    %1474 = vmatpush1.msra.mxu0 0.0
    %1475 = vmatprep.subr.mxu0 0.0
    %1476 = vmatpush1.msra.mxu0 0.0
    %1477 = vmatprep.subr.mxu0 0.0
    %1478 = vmatpush1.msra.mxu0 0.0
    %1479 = vmatprep.subr.mxu0 0.0
    %1480 = vmatpush1.msra.mxu0 0.0
    %1481 = vmatprep.subr.mxu0 0.0
    %1482 = vmatpush1.msra.mxu0 0.0
    %1483 = vmatprep.subr.mxu0 0.0
    %1484 = vmatpush1.msra.mxu0 0.0
    %1485 = vmatprep.subr.mxu0 0.0
    %1486 = vmatpush1.msra.mxu0 0.0
    %1487 = vmatprep.subr.mxu0 0.0
    %1488 = vmatpush1.msra.mxu0 0.0
    %1489 = vmatprep.subr.mxu0 0.0
    %1490 = vmatpush1.msra.mxu0 0.0
    %1491 = vmatprep.subr.mxu0 0.0
    %1492 = vmatpush1.msra.mxu0 0.0
    %1493 = vmatprep.subr.mxu0 0.0
    %1494 = vmatpush1.msra.mxu0 0.0
    %1495 = vmatprep.subr.mxu0 0.0
    %1496 = vmatpush1.msra.mxu0 0.0
    %1497 = vmatprep.subr.mxu0 0.0
    %1498 = vmatpush1.msra.mxu0 0.0
    %1499 = vmatprep.subr.mxu0 0.0
    %1500 = vmatpush1.msra.mxu0 0.0
    %1501 = vmatprep.subr.mxu0 0.0
    %1502 = vmatpush1.msra.mxu0 0.0
    %1503 = vmatprep.subr.mxu0 0.0
    %1504 = vmatpush1.msra.mxu0 0.0
    %1505 = vmatprep.subr.mxu0 0.0
    %1506 = vmatpush1.msra.mxu0 0.0
    %1507 = vmatprep.subr.mxu0 0.0
    %1508 = vmatpush1.msra.mxu0 0.0
    %1509 = vmatprep.subr.mxu0 0.0
    %1510 = vmatpush1.msra.mxu0 0.0
    %1511 = vmatprep.subr.mxu0 0.0
    %1512 = vmatpush1.msra.mxu0 0.0
    %1513 = vmatprep.subr.mxu0 0.0
    %1514 = vmatpush1.msra.mxu0 0.0
    %1515 = vmatprep.subr.mxu0 0.0
    %1516 = vmatpush1.msra.mxu0 0.0
    %1517 = vmatprep.subr.mxu0 0.0
    %1518 = vmatpush1.msra.mxu0 0.0
    %1519 = vmatprep.mubr.f32.mxu0 0.0
    %1520 = vmatmul.mubr.f32.gmra.mrb[0].mxu0 %v1450
    %v1521 = vpop.f32.mrb[0].mxu0
    %v1522 = vadd.f32 %v1447, %v1521
    %v1523 = vpop.f32.mrb[0].mxu0
    %1524 = vmatprep.mubr.f32.mxu0 0.0
    %1525 = vmatmul.mubr.f32.gmra.mrb[0].mxu0 %v1453
    %v1526 = vpop.f32.mrb[0].mxu0
    %v1527 = vadd.f32 %v1447, %v1526
    %v1528 = vpop.f32.mrb[0].mxu0
    %1529 = vdwg.mxu0
    %1531 = vrot.lane.b32.xlu0 %v1522, 96
    %v1532 = vpop.permute.xlu0 %1531
    %v1533 = vsel %vm378, %v1522, 0
    %v1535 = vsel %vm378, %v1532, 0
    %1537 = vmatprep.subr.mxu0 0.0
    %1538 = vmatpush1.xpose.msra.mxu0 %v1535
    %1539 = vmatprep.subr.mxu0 0.0
    %1540 = vmatpush1.xpose.msra.mxu0 0.0
    %1541 = vmatprep.subr.mxu0 0.0
    %1542 = vmatpush1.xpose.msra.mxu0 0.0
    %1543 = vmatprep.subr.mxu0 0.0
    %1544 = vmatpush1.xpose.msra.mxu0 0.0
    %1545 = vmatprep.subr.mxu0 0.0
    %1546 = vmatpush1.xpose.msra.mxu0 0.0
    %1547 = vmatprep.subr.mxu0 0.0
    %1548 = vmatpush1.xpose.msra.mxu0 0.0
    %1549 = vmatprep.subr.mxu0 0.0
    %1550 = vmatpush1.xpose.msra.mxu0 0.0
    %1551 = vmatprep.subr.mxu0 0.0
    %1552 = vmatpush1.xpose.msra.mxu0 0.0
    %1553 = vmatprep.subr.mxu0 0.0
    %1554 = vmatpush1.xpose.msra.mxu0 0.0
    %1555 = vmatprep.subr.mxu0 0.0
    %1556 = vmatpush1.xpose.msra.mxu0 0.0
    %1557 = vmatprep.subr.mxu0 0.0
    %1558 = vmatpush1.xpose.msra.mxu0 0.0
    %1559 = vmatprep.subr.mxu0 0.0
    %1560 = vmatpush1.xpose.msra.mxu0 0.0
    %1561 = vmatprep.subr.mxu0 0.0
    %1562 = vmatpush1.xpose.msra.mxu0 0.0
    %1563 = vmatprep.subr.mxu0 0.0
    %1564 = vmatpush1.xpose.msra.mxu0 0.0
    %1565 = vmatprep.subr.mxu0 0.0
    %1566 = vmatpush1.xpose.msra.mxu0 0.0
    %1567 = vmatprep.subr.mxu0 0.0
    %1568 = vmatpush1.xpose.msra.mxu0 0.0
    %1569 = vmatprep.subr.mxu0 0.0
    %1570 = vmatpush1.xpose.msra.mxu0 0.0
    %1571 = vmatprep.subr.mxu0 0.0
    %1572 = vmatpush1.xpose.msra.mxu0 0.0
    %1573 = vmatprep.subr.mxu0 0.0
    %1574 = vmatpush1.xpose.msra.mxu0 0.0
    %1575 = vmatprep.subr.mxu0 0.0
    %1576 = vmatpush1.xpose.msra.mxu0 0.0
    %1577 = vmatprep.subr.mxu0 0.0
    %1578 = vmatpush1.xpose.msra.mxu0 0.0
    %1579 = vmatprep.subr.mxu0 0.0
    %1580 = vmatpush1.xpose.msra.mxu0 0.0
    %1581 = vmatprep.subr.mxu0 0.0
    %1582 = vmatpush1.xpose.msra.mxu0 0.0
    %1583 = vmatprep.subr.mxu0 0.0
    %1584 = vmatpush1.xpose.msra.mxu0 0.0
    %1585 = vmatprep.subr.mxu0 0.0
    %1586 = vmatpush1.xpose.msra.mxu0 0.0
    %1587 = vmatprep.subr.mxu0 0.0
    %1588 = vmatpush1.xpose.msra.mxu0 0.0
    %1589 = vmatprep.subr.mxu0 0.0
    %1590 = vmatpush1.xpose.msra.mxu0 0.0
    %1591 = vmatprep.subr.mxu0 0.0
    %1592 = vmatpush1.xpose.msra.mxu0 0.0
    %1593 = vmatprep.subr.mxu0 0.0
    %1594 = vmatpush1.xpose.msra.mxu0 0.0
    %1595 = vmatprep.subr.mxu0 0.0
    %1596 = vmatpush1.xpose.msra.mxu0 0.0
    %1597 = vmatprep.subr.mxu0 0.0
    %1598 = vmatpush1.xpose.msra.mxu0 0.0
    %1599 = vmatprep.subr.mxu0 0.0
    %1600 = vmatpush1.xpose.msra.mxu0 0.0
    %1601 = vmatprep.mubr.f32.mxu0 0.0
    %1602 = vmatmul.mubr.f32.gmra.mrb[0].mxu0 %v1533
    %v1603 = vpop.f32.mrb[0].mxu0
    %v1604 = vadd.f32 %v230, %v1603
    %v1605 = vpop.f32.mrb[0].mxu0
    %1606 = vdwg.mxu0
    %v1607 = vsel %vm453, %v1604, -inf
    %1608 = vmax.xlane.f32.xlu0 %v1607
    %v1609 = vpop.xlane.xlu0 %1608
    %v1610 = vsub.f32 %v1604, %v1609
    %v1611 = vmul.f32 %v1610, 1.442695
    %v1612 = vpow.pop %v1611
    %v1613 = vsel %vm453, %v1612, 0.0
    %1614 = vadd.xlane.f32.xlu0 %v1613
    %v1615 = vpop.xlane.xlu0 %1614
    %v1616 = vrcp.pop %v1615
    %v1617 = vmul.f32 %v1612, %v1616
    %1618 = vrot.lane.b32.xlu0 %v1522, 64
    %v1619 = vpop.permute.xlu0 %1618
    %v1622 = vsel %vm453, %v1617, 0
    %1624 = vmatprep.subr.mxu0 0.0
    %1625 = vmatpush1.msra.mxu0 %v1619
    %1626 = vmatprep.subr.mxu0 0.0
    %1627 = vmatpush1.msra.mxu0 0.0
    %1628 = vmatprep.subr.mxu0 0.0
    %1629 = vmatpush1.msra.mxu0 0.0
    %1630 = vmatprep.subr.mxu0 0.0
    %1631 = vmatpush1.msra.mxu0 0.0
    %1632 = vmatprep.subr.mxu0 0.0
    %1633 = vmatpush1.msra.mxu0 0.0
    %1634 = vmatprep.subr.mxu0 0.0
    %1635 = vmatpush1.msra.mxu0 0.0
    %1636 = vmatprep.subr.mxu0 0.0
    %1637 = vmatpush1.msra.mxu0 0.0
    %1638 = vmatprep.subr.mxu0 0.0
    %1639 = vmatpush1.msra.mxu0 0.0
    %1640 = vmatprep.subr.mxu0 0.0
    %1641 = vmatpush1.msra.mxu0 0.0
    %1642 = vmatprep.subr.mxu0 0.0
    %1643 = vmatpush1.msra.mxu0 0.0
    %1644 = vmatprep.subr.mxu0 0.0
    %1645 = vmatpush1.msra.mxu0 0.0
    %1646 = vmatprep.subr.mxu0 0.0
    %1647 = vmatpush1.msra.mxu0 0.0
    %1648 = vmatprep.subr.mxu0 0.0
    %1649 = vmatpush1.msra.mxu0 0.0
    %1650 = vmatprep.subr.mxu0 0.0
    %1651 = vmatpush1.msra.mxu0 0.0
    %1652 = vmatprep.subr.mxu0 0.0
    %1653 = vmatpush1.msra.mxu0 0.0
    %1654 = vmatprep.subr.mxu0 0.0
    %1655 = vmatpush1.msra.mxu0 0.0
    %1656 = vmatprep.subr.mxu0 0.0
    %1657 = vmatpush1.msra.mxu0 0.0
    %1658 = vmatprep.subr.mxu0 0.0
    %1659 = vmatpush1.msra.mxu0 0.0
    %1660 = vmatprep.subr.mxu0 0.0
    %1661 = vmatpush1.msra.mxu0 0.0
    %1662 = vmatprep.subr.mxu0 0.0
    %1663 = vmatpush1.msra.mxu0 0.0
    %1664 = vmatprep.subr.mxu0 0.0
    %1665 = vmatpush1.msra.mxu0 0.0
    %1666 = vmatprep.subr.mxu0 0.0
    %1667 = vmatpush1.msra.mxu0 0.0
    %1668 = vmatprep.subr.mxu0 0.0
    %1669 = vmatpush1.msra.mxu0 0.0
    %1670 = vmatprep.subr.mxu0 0.0
    %1671 = vmatpush1.msra.mxu0 0.0
    %1672 = vmatprep.subr.mxu0 0.0
    %1673 = vmatpush1.msra.mxu0 0.0
    %1674 = vmatprep.subr.mxu0 0.0
    %1675 = vmatpush1.msra.mxu0 0.0
    %1676 = vmatprep.subr.mxu0 0.0
    %1677 = vmatpush1.msra.mxu0 0.0
    %1678 = vmatprep.subr.mxu0 0.0
    %1679 = vmatpush1.msra.mxu0 0.0
    %1680 = vmatprep.subr.mxu0 0.0
    %1681 = vmatpush1.msra.mxu0 0.0
    %1682 = vmatprep.subr.mxu0 0.0
    %1683 = vmatpush1.msra.mxu0 0.0
    %1684 = vmatprep.subr.mxu0 0.0
    %1685 = vmatpush1.msra.mxu0 0.0
    %1686 = vmatprep.subr.mxu0 0.0
    %1687 = vmatpush1.msra.mxu0 0.0
    %1688 = vmatprep.mubr.f32.mxu0 0.0
    %1689 = vmatmul.mubr.f32.gmra.mrb[0].mxu0 %v1622
    %v1690 = vpop.f32.mrb[0].mxu0
    %v1691 = vadd.f32 0.0, %v1690
    %v1692 = vpop.f32.mrb[0].mxu0
    %1693 = vdwg.mxu0
    %1694 = vrot.lane.b32.xlu0 %v1522, 112
    %v1695 = vpop.permute.xlu0 %1694
    %1696 = vrot.lane.b32.xlu0 %v1522, 80
    %v1697 = vpop.permute.xlu0 %1696
    %v1698 = vsel %vm378, %v1695, 0
    %v1700 = vsel %vm378, %v1697, 0
    %1702 = vmatprep.subr.mxu0 0.0
    %1703 = vmatpush1.xpose.msra.mxu0 %v1700
    %1704 = vmatprep.subr.mxu0 0.0
    %1705 = vmatpush1.xpose.msra.mxu0 0.0
    %1706 = vmatprep.subr.mxu0 0.0
    %1707 = vmatpush1.xpose.msra.mxu0 0.0
    %1708 = vmatprep.subr.mxu0 0.0
    %1709 = vmatpush1.xpose.msra.mxu0 0.0
    %1710 = vmatprep.subr.mxu0 0.0
    %1711 = vmatpush1.xpose.msra.mxu0 0.0
    %1712 = vmatprep.subr.mxu0 0.0
    %1713 = vmatpush1.xpose.msra.mxu0 0.0
    %1714 = vmatprep.subr.mxu0 0.0
    %1715 = vmatpush1.xpose.msra.mxu0 0.0
    %1716 = vmatprep.subr.mxu0 0.0
    %1717 = vmatpush1.xpose.msra.mxu0 0.0
    %1718 = vmatprep.subr.mxu0 0.0
    %1719 = vmatpush1.xpose.msra.mxu0 0.0
    %1720 = vmatprep.subr.mxu0 0.0
    %1721 = vmatpush1.xpose.msra.mxu0 0.0
    %1722 = vmatprep.subr.mxu0 0.0
    %1723 = vmatpush1.xpose.msra.mxu0 0.0
    %1724 = vmatprep.subr.mxu0 0.0
    %1725 = vmatpush1.xpose.msra.mxu0 0.0
    %1726 = vmatprep.subr.mxu0 0.0
    %1727 = vmatpush1.xpose.msra.mxu0 0.0
    %1728 = vmatprep.subr.mxu0 0.0
    %1729 = vmatpush1.xpose.msra.mxu0 0.0
    %1730 = vmatprep.subr.mxu0 0.0
    %1731 = vmatpush1.xpose.msra.mxu0 0.0
    %1732 = vmatprep.subr.mxu0 0.0
    %1733 = vmatpush1.xpose.msra.mxu0 0.0
    %1734 = vmatprep.subr.mxu0 0.0
    %1735 = vmatpush1.xpose.msra.mxu0 0.0
    %1736 = vmatprep.subr.mxu0 0.0
    %1737 = vmatpush1.xpose.msra.mxu0 0.0
    %1738 = vmatprep.subr.mxu0 0.0
    %1739 = vmatpush1.xpose.msra.mxu0 0.0
    %1740 = vmatprep.subr.mxu0 0.0
    %1741 = vmatpush1.xpose.msra.mxu0 0.0
    %1742 = vmatprep.subr.mxu0 0.0
    %1743 = vmatpush1.xpose.msra.mxu0 0.0
    %1744 = vmatprep.subr.mxu0 0.0
    %1745 = vmatpush1.xpose.msra.mxu0 0.0
    %1746 = vmatprep.subr.mxu0 0.0
    %1747 = vmatpush1.xpose.msra.mxu0 0.0
    %1748 = vmatprep.subr.mxu0 0.0
    %1749 = vmatpush1.xpose.msra.mxu0 0.0
    %1750 = vmatprep.subr.mxu0 0.0
    %1751 = vmatpush1.xpose.msra.mxu0 0.0
    %1752 = vmatprep.subr.mxu0 0.0
    %1753 = vmatpush1.xpose.msra.mxu0 0.0
    %1754 = vmatprep.subr.mxu0 0.0
    %1755 = vmatpush1.xpose.msra.mxu0 0.0
    %1756 = vmatprep.subr.mxu0 0.0
    %1757 = vmatpush1.xpose.msra.mxu0 0.0
    %1758 = vmatprep.subr.mxu0 0.0
    %1759 = vmatpush1.xpose.msra.mxu0 0.0
    %1760 = vmatprep.subr.mxu0 0.0
    %1761 = vmatpush1.xpose.msra.mxu0 0.0
    %1762 = vmatprep.subr.mxu0 0.0
    %1763 = vmatpush1.xpose.msra.mxu0 0.0
    %1764 = vmatprep.subr.mxu0 0.0
    %1765 = vmatpush1.xpose.msra.mxu0 0.0
    %1766 = vmatprep.mubr.f32.mxu0 0.0
    %1767 = vmatmul.mubr.f32.gmra.mrb[0].mxu0 %v1698
    %v1768 = vpop.f32.mrb[0].mxu0
    %v1769 = vadd.f32 %v230, %v1768
    %v1770 = vpop.f32.mrb[0].mxu0
    %1771 = vdwg.mxu0
    %v1772 = vsel %vm453, %v1769, -inf
    %1773 = vmax.xlane.f32.xlu0 %v1772
    %v1774 = vpop.xlane.xlu0 %1773
    %v1775 = vsub.f32 %v1769, %v1774
    %v1776 = vmul.f32 %v1775, 1.442695
    %v1777 = vpow.pop %v1776
    %v1778 = vsel %vm453, %v1777, 0.0
    %1779 = vadd.xlane.f32.xlu0 %v1778
    %v1780 = vpop.xlane.xlu0 %1779
    %v1781 = vrcp.pop %v1780
    %v1782 = vmul.f32 %v1777, %v1781
    %1783 = vrot.lane.b32.xlu0 %v1522, 48
    %v1784 = vpop.permute.xlu0 %1783
    %v1787 = vsel %vm453, %v1782, 0
    %1789 = vmatprep.subr.mxu0 0.0
    %1790 = vmatpush1.msra.mxu0 %v1784
    %1791 = vmatprep.subr.mxu0 0.0
    %1792 = vmatpush1.msra.mxu0 0.0
    %1793 = vmatprep.subr.mxu0 0.0
    %1794 = vmatpush1.msra.mxu0 0.0
    %1795 = vmatprep.subr.mxu0 0.0
    %1796 = vmatpush1.msra.mxu0 0.0
    %1797 = vmatprep.subr.mxu0 0.0
    %1798 = vmatpush1.msra.mxu0 0.0
    %1799 = vmatprep.subr.mxu0 0.0
    %1800 = vmatpush1.msra.mxu0 0.0
    %1801 = vmatprep.subr.mxu0 0.0
    %1802 = vmatpush1.msra.mxu0 0.0
    %1803 = vmatprep.subr.mxu0 0.0
    %1804 = vmatpush1.msra.mxu0 0.0
    %1805 = vmatprep.subr.mxu0 0.0
    %1806 = vmatpush1.msra.mxu0 0.0
    %1807 = vmatprep.subr.mxu0 0.0
    %1808 = vmatpush1.msra.mxu0 0.0
    %1809 = vmatprep.subr.mxu0 0.0
    %1810 = vmatpush1.msra.mxu0 0.0
    %1811 = vmatprep.subr.mxu0 0.0
    %1812 = vmatpush1.msra.mxu0 0.0
    %1813 = vmatprep.subr.mxu0 0.0
    %1814 = vmatpush1.msra.mxu0 0.0
    %1815 = vmatprep.subr.mxu0 0.0
    %1816 = vmatpush1.msra.mxu0 0.0
    %1817 = vmatprep.subr.mxu0 0.0
    %1818 = vmatpush1.msra.mxu0 0.0
    %1819 = vmatprep.subr.mxu0 0.0
    %1820 = vmatpush1.msra.mxu0 0.0
    %1821 = vmatprep.subr.mxu0 0.0
    %1822 = vmatpush1.msra.mxu0 0.0
    %1823 = vmatprep.subr.mxu0 0.0
    %1824 = vmatpush1.msra.mxu0 0.0
    %1825 = vmatprep.subr.mxu0 0.0
    %1826 = vmatpush1.msra.mxu0 0.0
    %1827 = vmatprep.subr.mxu0 0.0
    %1828 = vmatpush1.msra.mxu0 0.0
    %1829 = vmatprep.subr.mxu0 0.0
    %1830 = vmatpush1.msra.mxu0 0.0
    %1831 = vmatprep.subr.mxu0 0.0
    %1832 = vmatpush1.msra.mxu0 0.0
    %1833 = vmatprep.subr.mxu0 0.0
    %1834 = vmatpush1.msra.mxu0 0.0
    %1835 = vmatprep.subr.mxu0 0.0
    %1836 = vmatpush1.msra.mxu0 0.0
    %1837 = vmatprep.subr.mxu0 0.0
    %1838 = vmatpush1.msra.mxu0 0.0
    %1839 = vmatprep.subr.mxu0 0.0
    %1840 = vmatpush1.msra.mxu0 0.0
    %1841 = vmatprep.subr.mxu0 0.0
    %1842 = vmatpush1.msra.mxu0 0.0
    %1843 = vmatprep.subr.mxu0 0.0
    %1844 = vmatpush1.msra.mxu0 0.0
    %1845 = vmatprep.subr.mxu0 0.0
    %1846 = vmatpush1.msra.mxu0 0.0
    %1847 = vmatprep.subr.mxu0 0.0
    %1848 = vmatpush1.msra.mxu0 0.0
    %1849 = vmatprep.subr.mxu0 0.0
    %1850 = vmatpush1.msra.mxu0 0.0
    %1851 = vmatprep.subr.mxu0 0.0
    %1852 = vmatpush1.msra.mxu0 0.0
    %1853 = vmatprep.mubr.f32.mxu0 0.0
    %1854 = vmatmul.mubr.f32.gmra.mrb[0].mxu0 %v1787
    %v1855 = vpop.f32.mrb[0].mxu0
    %v1856 = vadd.f32 0.0, %v1855
    %v1857 = vpop.f32.mrb[0].mxu0
    %1858 = vdwg.mxu0
    %1860 = vrot.lane.b32.xlu0 %v1856, 16
    %v1861 = vpop.permute.xlu0 %1860
    %v1863 = vsel %vm378, %v1691, %v1861
    %1865 = vrot.lane.b32.xlu0 %v1527, 96
    %v1866 = vpop.permute.xlu0 %1865
    %v1867 = vsel %vm378, %v1527, 0
    %v1869 = vsel %vm378, %v1866, 0
    %1871 = vmatprep.subr.mxu0 0.0
    %1872 = vmatpush1.xpose.msra.mxu0 %v1869
    %1873 = vmatprep.subr.mxu0 0.0
    %1874 = vmatpush1.xpose.msra.mxu0 0.0
    %1875 = vmatprep.subr.mxu0 0.0
    %1876 = vmatpush1.xpose.msra.mxu0 0.0
    %1877 = vmatprep.subr.mxu0 0.0
    %1878 = vmatpush1.xpose.msra.mxu0 0.0
    %1879 = vmatprep.subr.mxu0 0.0
    %1880 = vmatpush1.xpose.msra.mxu0 0.0
    %1881 = vmatprep.subr.mxu0 0.0
    %1882 = vmatpush1.xpose.msra.mxu0 0.0
    %1883 = vmatprep.subr.mxu0 0.0
    %1884 = vmatpush1.xpose.msra.mxu0 0.0
    %1885 = vmatprep.subr.mxu0 0.0
    %1886 = vmatpush1.xpose.msra.mxu0 0.0
    %1887 = vmatprep.subr.mxu0 0.0
    %1888 = vmatpush1.xpose.msra.mxu0 0.0
    %1889 = vmatprep.subr.mxu0 0.0
    %1890 = vmatpush1.xpose.msra.mxu0 0.0
    %1891 = vmatprep.subr.mxu0 0.0
    %1892 = vmatpush1.xpose.msra.mxu0 0.0
    %1893 = vmatprep.subr.mxu0 0.0
    %1894 = vmatpush1.xpose.msra.mxu0 0.0
    %1895 = vmatprep.subr.mxu0 0.0
    %1896 = vmatpush1.xpose.msra.mxu0 0.0
    %1897 = vmatprep.subr.mxu0 0.0
    %1898 = vmatpush1.xpose.msra.mxu0 0.0
    %1899 = vmatprep.subr.mxu0 0.0
    %1900 = vmatpush1.xpose.msra.mxu0 0.0
    %1901 = vmatprep.subr.mxu0 0.0
    %1902 = vmatpush1.xpose.msra.mxu0 0.0
    %1903 = vmatprep.subr.mxu0 0.0
    %1904 = vmatpush1.xpose.msra.mxu0 0.0
    %1905 = vmatprep.subr.mxu0 0.0
    %1906 = vmatpush1.xpose.msra.mxu0 0.0
    %1907 = vmatprep.subr.mxu0 0.0
    %1908 = vmatpush1.xpose.msra.mxu0 0.0
    %1909 = vmatprep.subr.mxu0 0.0
    %1910 = vmatpush1.xpose.msra.mxu0 0.0
    %1911 = vmatprep.subr.mxu0 0.0
    %1912 = vmatpush1.xpose.msra.mxu0 0.0
    %1913 = vmatprep.subr.mxu0 0.0
    %1914 = vmatpush1.xpose.msra.mxu0 0.0
    %1915 = vmatprep.subr.mxu0 0.0
    %1916 = vmatpush1.xpose.msra.mxu0 0.0
    %1917 = vmatprep.subr.mxu0 0.0
    %1918 = vmatpush1.xpose.msra.mxu0 0.0
    %1919 = vmatprep.subr.mxu0 0.0
    %1920 = vmatpush1.xpose.msra.mxu0 0.0
    %1921 = vmatprep.subr.mxu0 0.0
    %1922 = vmatpush1.xpose.msra.mxu0 0.0
    %1923 = vmatprep.subr.mxu0 0.0
    %1924 = vmatpush1.xpose.msra.mxu0 0.0
    %1925 = vmatprep.subr.mxu0 0.0
    %1926 = vmatpush1.xpose.msra.mxu0 0.0
    %1927 = vmatprep.subr.mxu0 0.0
    %1928 = vmatpush1.xpose.msra.mxu0 0.0
    %1929 = vmatprep.subr.mxu0 0.0
    %1930 = vmatpush1.xpose.msra.mxu0 0.0
    %1931 = vmatprep.subr.mxu0 0.0
    %1932 = vmatpush1.xpose.msra.mxu0 0.0
    %1933 = vmatprep.subr.mxu0 0.0
    %1934 = vmatpush1.xpose.msra.mxu0 0.0
    %1935 = vmatprep.mubr.f32.mxu0 0.0
    %1936 = vmatmul.mubr.f32.gmra.mrb[0].mxu0 %v1867
    %v1937 = vpop.f32.mrb[0].mxu0
    %v1938 = vadd.f32 %v234, %v1937
    %v1939 = vpop.f32.mrb[0].mxu0
    %1940 = vdwg.mxu0
    %v1941 = vsel %vm453, %v1938, -inf
    %1942 = vmax.xlane.f32.xlu0 %v1941
    %v1943 = vpop.xlane.xlu0 %1942
    %v1944 = vsub.f32 %v1938, %v1943
    %v1945 = vmul.f32 %v1944, 1.442695
    %v1946 = vpow.pop %v1945
    %v1947 = vsel %vm453, %v1946, 0.0
    %1948 = vadd.xlane.f32.xlu0 %v1947
    %v1949 = vpop.xlane.xlu0 %1948
    %v1950 = vrcp.pop %v1949
    %v1951 = vmul.f32 %v1946, %v1950
    %1952 = vrot.lane.b32.xlu0 %v1527, 64
    %v1953 = vpop.permute.xlu0 %1952
    %v1956 = vsel %vm453, %v1951, 0
    %1958 = vmatprep.subr.mxu0 0.0
    %1959 = vmatpush1.msra.mxu0 %v1953
    %1960 = vmatprep.subr.mxu0 0.0
    %1961 = vmatpush1.msra.mxu0 0.0
    %1962 = vmatprep.subr.mxu0 0.0
    %1963 = vmatpush1.msra.mxu0 0.0
    %1964 = vmatprep.subr.mxu0 0.0
    %1965 = vmatpush1.msra.mxu0 0.0
    %1966 = vmatprep.subr.mxu0 0.0
    %1967 = vmatpush1.msra.mxu0 0.0
    %1968 = vmatprep.subr.mxu0 0.0
    %1969 = vmatpush1.msra.mxu0 0.0
    %1970 = vmatprep.subr.mxu0 0.0
    %1971 = vmatpush1.msra.mxu0 0.0
    %1972 = vmatprep.subr.mxu0 0.0
    %1973 = vmatpush1.msra.mxu0 0.0
    %1974 = vmatprep.subr.mxu0 0.0
    %1975 = vmatpush1.msra.mxu0 0.0
    %1976 = vmatprep.subr.mxu0 0.0
    %1977 = vmatpush1.msra.mxu0 0.0
    %1978 = vmatprep.subr.mxu0 0.0
    %1979 = vmatpush1.msra.mxu0 0.0
    %1980 = vmatprep.subr.mxu0 0.0
    %1981 = vmatpush1.msra.mxu0 0.0
    %1982 = vmatprep.subr.mxu0 0.0
    %1983 = vmatpush1.msra.mxu0 0.0
    %1984 = vmatprep.subr.mxu0 0.0
    %1985 = vmatpush1.msra.mxu0 0.0
    %1986 = vmatprep.subr.mxu0 0.0
    %1987 = vmatpush1.msra.mxu0 0.0
    %1988 = vmatprep.subr.mxu0 0.0
    %1989 = vmatpush1.msra.mxu0 0.0
    %1990 = vmatprep.subr.mxu0 0.0
    %1991 = vmatpush1.msra.mxu0 0.0
    %1992 = vmatprep.subr.mxu0 0.0
    %1993 = vmatpush1.msra.mxu0 0.0
    %1994 = vmatprep.subr.mxu0 0.0
    %1995 = vmatpush1.msra.mxu0 0.0
    %1996 = vmatprep.subr.mxu0 0.0
    %1997 = vmatpush1.msra.mxu0 0.0
    %1998 = vmatprep.subr.mxu0 0.0
    %1999 = vmatpush1.msra.mxu0 0.0
    %2000 = vmatprep.subr.mxu0 0.0
    %2001 = vmatpush1.msra.mxu0 0.0
    %2002 = vmatprep.subr.mxu0 0.0
    %2003 = vmatpush1.msra.mxu0 0.0
    %2004 = vmatprep.subr.mxu0 0.0
    %2005 = vmatpush1.msra.mxu0 0.0
    %2006 = vmatprep.subr.mxu0 0.0
    %2007 = vmatpush1.msra.mxu0 0.0
    %2008 = vmatprep.subr.mxu0 0.0
    %2009 = vmatpush1.msra.mxu0 0.0
    %2010 = vmatprep.subr.mxu0 0.0
    %2011 = vmatpush1.msra.mxu0 0.0
    %2012 = vmatprep.subr.mxu0 0.0
    %2013 = vmatpush1.msra.mxu0 0.0
    %2014 = vmatprep.subr.mxu0 0.0
    %2015 = vmatpush1.msra.mxu0 0.0
    %2016 = vmatprep.subr.mxu0 0.0
    %2017 = vmatpush1.msra.mxu0 0.0
    %2018 = vmatprep.subr.mxu0 0.0
    %2019 = vmatpush1.msra.mxu0 0.0
    %2020 = vmatprep.subr.mxu0 0.0
    %2021 = vmatpush1.msra.mxu0 0.0
    %2022 = vmatprep.mubr.f32.mxu0 0.0
    %2023 = vmatmul.mubr.f32.gmra.mrb[0].mxu0 %v1956
    %v2024 = vpop.f32.mrb[0].mxu0
    %v2025 = vadd.f32 0.0, %v2024
    %v2026 = vpop.f32.mrb[0].mxu0
    %2027 = vdwg.mxu0
    %2028 = vrot.lane.b32.xlu0 %v1527, 112
    %v2029 = vpop.permute.xlu0 %2028
    %2030 = vrot.lane.b32.xlu0 %v1527, 80
    %v2031 = vpop.permute.xlu0 %2030
    %v2032 = vsel %vm378, %v2029, 0
    %v2034 = vsel %vm378, %v2031, 0
    %2036 = vmatprep.subr.mxu0 0.0
    %2037 = vmatpush1.xpose.msra.mxu0 %v2034
    %2038 = vmatprep.subr.mxu0 0.0
    %2039 = vmatpush1.xpose.msra.mxu0 0.0
    %2040 = vmatprep.subr.mxu0 0.0
    %2041 = vmatpush1.xpose.msra.mxu0 0.0
    %2042 = vmatprep.subr.mxu0 0.0
    %2043 = vmatpush1.xpose.msra.mxu0 0.0
    %2044 = vmatprep.subr.mxu0 0.0
    %2045 = vmatpush1.xpose.msra.mxu0 0.0
    %2046 = vmatprep.subr.mxu0 0.0
    %2047 = vmatpush1.xpose.msra.mxu0 0.0
    %2048 = vmatprep.subr.mxu0 0.0
    %2049 = vmatpush1.xpose.msra.mxu0 0.0
    %2050 = vmatprep.subr.mxu0 0.0
    %2051 = vmatpush1.xpose.msra.mxu0 0.0
    %2052 = vmatprep.subr.mxu0 0.0
    %2053 = vmatpush1.xpose.msra.mxu0 0.0
    %2054 = vmatprep.subr.mxu0 0.0
    %2055 = vmatpush1.xpose.msra.mxu0 0.0
    %2056 = vmatprep.subr.mxu0 0.0
    %2057 = vmatpush1.xpose.msra.mxu0 0.0
    %2058 = vmatprep.subr.mxu0 0.0
    %2059 = vmatpush1.xpose.msra.mxu0 0.0
    %2060 = vmatprep.subr.mxu0 0.0
    %2061 = vmatpush1.xpose.msra.mxu0 0.0
    %2062 = vmatprep.subr.mxu0 0.0
    %2063 = vmatpush1.xpose.msra.mxu0 0.0
    %2064 = vmatprep.subr.mxu0 0.0
    %2065 = vmatpush1.xpose.msra.mxu0 0.0
    %2066 = vmatprep.subr.mxu0 0.0
    %2067 = vmatpush1.xpose.msra.mxu0 0.0
    %2068 = vmatprep.subr.mxu0 0.0
    %2069 = vmatpush1.xpose.msra.mxu0 0.0
    %2070 = vmatprep.subr.mxu0 0.0
    %2071 = vmatpush1.xpose.msra.mxu0 0.0
    %2072 = vmatprep.subr.mxu0 0.0
    %2073 = vmatpush1.xpose.msra.mxu0 0.0
    %2074 = vmatprep.subr.mxu0 0.0
    %2075 = vmatpush1.xpose.msra.mxu0 0.0
    %2076 = vmatprep.subr.mxu0 0.0
    %2077 = vmatpush1.xpose.msra.mxu0 0.0
    %2078 = vmatprep.subr.mxu0 0.0
    %2079 = vmatpush1.xpose.msra.mxu0 0.0
    %2080 = vmatprep.subr.mxu0 0.0
    %2081 = vmatpush1.xpose.msra.mxu0 0.0
    %2082 = vmatprep.subr.mxu0 0.0
    %2083 = vmatpush1.xpose.msra.mxu0 0.0
    %2084 = vmatprep.subr.mxu0 0.0
    %2085 = vmatpush1.xpose.msra.mxu0 0.0
    %2086 = vmatprep.subr.mxu0 0.0
    %2087 = vmatpush1.xpose.msra.mxu0 0.0
    %2088 = vmatprep.subr.mxu0 0.0
    %2089 = vmatpush1.xpose.msra.mxu0 0.0
    %2090 = vmatprep.subr.mxu0 0.0
    %2091 = vmatpush1.xpose.msra.mxu0 0.0
    %2092 = vmatprep.subr.mxu0 0.0
    %2093 = vmatpush1.xpose.msra.mxu0 0.0
    %2094 = vmatprep.subr.mxu0 0.0
    %2095 = vmatpush1.xpose.msra.mxu0 0.0
    %2096 = vmatprep.subr.mxu0 0.0
    %2097 = vmatpush1.xpose.msra.mxu0 0.0
    %2098 = vmatprep.subr.mxu0 0.0
    %2099 = vmatpush1.xpose.msra.mxu0 0.0
    %2100 = vmatprep.mubr.f32.mxu0 0.0
    %2101 = vmatmul.mubr.f32.gmra.mrb[0].mxu0 %v2032
    %v2102 = vpop.f32.mrb[0].mxu0
    %v2103 = vadd.f32 %v234, %v2102
    %v2104 = vpop.f32.mrb[0].mxu0
    %2105 = vdwg.mxu0
    %v2106 = vsel %vm453, %v2103, -inf
    %2107 = vmax.xlane.f32.xlu0 %v2106
    %v2108 = vpop.xlane.xlu0 %2107
    %v2109 = vsub.f32 %v2103, %v2108
    %v2110 = vmul.f32 %v2109, 1.442695
    %v2111 = vpow.pop %v2110
    %v2112 = vsel %vm453, %v2111, 0.0
    %2113 = vadd.xlane.f32.xlu0 %v2112
    %v2114 = vpop.xlane.xlu0 %2113
    %v2115 = vrcp.pop %v2114
    %v2116 = vmul.f32 %v2111, %v2115
    %2117 = vrot.lane.b32.xlu0 %v1527, 48
    %v2118 = vpop.permute.xlu0 %2117
    %v2121 = vsel %vm453, %v2116, 0
    %2123 = vmatprep.subr.mxu0 0.0
    %2124 = vmatpush1.msra.mxu0 %v2118
    %2125 = vmatprep.subr.mxu0 0.0
    %2126 = vmatpush1.msra.mxu0 0.0
    %2127 = vmatprep.subr.mxu0 0.0
    %2128 = vmatpush1.msra.mxu0 0.0
    %2129 = vmatprep.subr.mxu0 0.0
    %2130 = vmatpush1.msra.mxu0 0.0
    %2131 = vmatprep.subr.mxu0 0.0
    %2132 = vmatpush1.msra.mxu0 0.0
    %2133 = vmatprep.subr.mxu0 0.0
    %2134 = vmatpush1.msra.mxu0 0.0
    %2135 = vmatprep.subr.mxu0 0.0
    %2136 = vmatpush1.msra.mxu0 0.0
    %2137 = vmatprep.subr.mxu0 0.0
    %2138 = vmatpush1.msra.mxu0 0.0
    %2139 = vmatprep.subr.mxu0 0.0
    %2140 = vmatpush1.msra.mxu0 0.0
    %2141 = vmatprep.subr.mxu0 0.0
    %2142 = vmatpush1.msra.mxu0 0.0
    %2143 = vmatprep.subr.mxu0 0.0
    %2144 = vmatpush1.msra.mxu0 0.0
    %2145 = vmatprep.subr.mxu0 0.0
    %2146 = vmatpush1.msra.mxu0 0.0
    %2147 = vmatprep.subr.mxu0 0.0
    %2148 = vmatpush1.msra.mxu0 0.0
    %2149 = vmatprep.subr.mxu0 0.0
    %2150 = vmatpush1.msra.mxu0 0.0
    %2151 = vmatprep.subr.mxu0 0.0
    %2152 = vmatpush1.msra.mxu0 0.0
    %2153 = vmatprep.subr.mxu0 0.0
    %2154 = vmatpush1.msra.mxu0 0.0
    %2155 = vmatprep.subr.mxu0 0.0
    %2156 = vmatpush1.msra.mxu0 0.0
    %2157 = vmatprep.subr.mxu0 0.0
    %2158 = vmatpush1.msra.mxu0 0.0
    %2159 = vmatprep.subr.mxu0 0.0
    %2160 = vmatpush1.msra.mxu0 0.0
    %2161 = vmatprep.subr.mxu0 0.0
    %2162 = vmatpush1.msra.mxu0 0.0
    %2163 = vmatprep.subr.mxu0 0.0
    %2164 = vmatpush1.msra.mxu0 0.0
    %2165 = vmatprep.subr.mxu0 0.0
    %2166 = vmatpush1.msra.mxu0 0.0
    %2167 = vmatprep.subr.mxu0 0.0
    %2168 = vmatpush1.msra.mxu0 0.0
    %2169 = vmatprep.subr.mxu0 0.0
    %2170 = vmatpush1.msra.mxu0 0.0
    %2171 = vmatprep.subr.mxu0 0.0
    %2172 = vmatpush1.msra.mxu0 0.0
    %2173 = vmatprep.subr.mxu0 0.0
    %2174 = vmatpush1.msra.mxu0 0.0
    %2175 = vmatprep.subr.mxu0 0.0
    %2176 = vmatpush1.msra.mxu0 0.0
    %2177 = vmatprep.subr.mxu0 0.0
    %2178 = vmatpush1.msra.mxu0 0.0
    %2179 = vmatprep.subr.mxu0 0.0
    %2180 = vmatpush1.msra.mxu0 0.0
    %2181 = vmatprep.subr.mxu0 0.0
    %2182 = vmatpush1.msra.mxu0 0.0
    %2183 = vmatprep.subr.mxu0 0.0
    %2184 = vmatpush1.msra.mxu0 0.0
    %2185 = vmatprep.subr.mxu0 0.0
    %2186 = vmatpush1.msra.mxu0 0.0
    %2187 = vmatprep.mubr.f32.mxu0 0.0
    %2188 = vmatmul.mubr.f32.gmra.mrb[0].mxu0 %v2121
    %v2189 = vpop.f32.mrb[0].mxu0
    %v2190 = vadd.f32 0.0, %v2189
    %v2191 = vpop.f32.mrb[0].mxu0
    %2192 = vdwg.mxu0
    %2194 = vrot.lane.b32.xlu0 %v2190, 16
    %v2195 = vpop.permute.xlu0 %2194
    %v2197 = vsel %vm378, %v2025, %v2195
    %s2198 = scalar_lea.vmem %s6, 32
    %v2199 = vld [vmem:[%s2198] sm:$0xff]
    %v2200 = vld [vmem:[%s2198 + $0x8] sm:$0xff]
    %v2201 = vld [vmem:[%s2198 + $0x10] sm:$0xff]
    %v2202 = vld [vmem:[%s2198 + $0x18] sm:$0xff]
    %s2203 = scalar_lea.vmem [#allocation12], 1
    %v2204 = vld [vmem:[%s2203] sm:$0x1]
    %v2206 = vlaneseq
    %v2207 = vshrl.u32 %v2206, 7
    %v2208 = vsub.s32 0, %v2207
    %v2209 = vrot.slane %v2204, %v2208
    %v2212 = vsel %vm239, %v1863, 0
    %v2215 = vsel %vm239, %v2197, 0
    %2217 = vmatprep.subr.mxu0 0.0
    %2218 = vmatpush1.msra.mxu0 %v2199
    %2219 = vmatprep.subr.mxu0 0.0
    %2220 = vmatpush1.msra.mxu0 %v2200
    %2221 = vmatprep.subr.mxu0 0.0
    %2222 = vmatpush1.msra.mxu0 %v2201
    %2223 = vmatprep.subr.mxu0 0.0
    %2224 = vmatpush1.msra.mxu0 %v2202
    %2225 = vmatprep.subr.mxu0 0.0
    %2226 = vmatpush1.msra.mxu0 0.0
    %2227 = vmatprep.subr.mxu0 0.0
    %2228 = vmatpush1.msra.mxu0 0.0
    %2229 = vmatprep.subr.mxu0 0.0
    %2230 = vmatpush1.msra.mxu0 0.0
    %2231 = vmatprep.subr.mxu0 0.0
    %2232 = vmatpush1.msra.mxu0 0.0
    %2233 = vmatprep.subr.mxu0 0.0
    %2234 = vmatpush1.msra.mxu0 0.0
    %2235 = vmatprep.subr.mxu0 0.0
    %2236 = vmatpush1.msra.mxu0 0.0
    %2237 = vmatprep.subr.mxu0 0.0
    %2238 = vmatpush1.msra.mxu0 0.0
    %2239 = vmatprep.subr.mxu0 0.0
    %2240 = vmatpush1.msra.mxu0 0.0
    %2241 = vmatprep.subr.mxu0 0.0
    %2242 = vmatpush1.msra.mxu0 0.0
    %2243 = vmatprep.subr.mxu0 0.0
    %2244 = vmatpush1.msra.mxu0 0.0
    %2245 = vmatprep.subr.mxu0 0.0
    %2246 = vmatpush1.msra.mxu0 0.0
    %2247 = vmatprep.subr.mxu0 0.0
    %2248 = vmatpush1.msra.mxu0 0.0
    %2249 = vmatprep.subr.mxu0 0.0
    %2250 = vmatpush1.msra.mxu0 0.0
    %2251 = vmatprep.subr.mxu0 0.0
    %2252 = vmatpush1.msra.mxu0 0.0
    %2253 = vmatprep.subr.mxu0 0.0
    %2254 = vmatpush1.msra.mxu0 0.0
    %2255 = vmatprep.subr.mxu0 0.0
    %2256 = vmatpush1.msra.mxu0 0.0
    %2257 = vmatprep.subr.mxu0 0.0
    %2258 = vmatpush1.msra.mxu0 0.0
    %2259 = vmatprep.subr.mxu0 0.0
    %2260 = vmatpush1.msra.mxu0 0.0
    %2261 = vmatprep.subr.mxu0 0.0
    %2262 = vmatpush1.msra.mxu0 0.0
    %2263 = vmatprep.subr.mxu0 0.0
    %2264 = vmatpush1.msra.mxu0 0.0
    %2265 = vmatprep.subr.mxu0 0.0
    %2266 = vmatpush1.msra.mxu0 0.0
    %2267 = vmatprep.subr.mxu0 0.0
    %2268 = vmatpush1.msra.mxu0 0.0
    %2269 = vmatprep.subr.mxu0 0.0
    %2270 = vmatpush1.msra.mxu0 0.0
    %2271 = vmatprep.subr.mxu0 0.0
    %2272 = vmatpush1.msra.mxu0 0.0
    %2273 = vmatprep.subr.mxu0 0.0
    %2274 = vmatpush1.msra.mxu0 0.0
    %2275 = vmatprep.subr.mxu0 0.0
    %2276 = vmatpush1.msra.mxu0 0.0
    %2277 = vmatprep.subr.mxu0 0.0
    %2278 = vmatpush1.msra.mxu0 0.0
    %2279 = vmatprep.subr.mxu0 0.0
    %2280 = vmatpush1.msra.mxu0 0.0
    %2281 = vmatprep.mubr.f32.mxu0 0.0
    %2282 = vmatmul.mubr.f32.gmra.mrb[0].mxu0 %v2212
    %v2283 = vpop.f32.mrb[0].mxu0
    %v2284 = vadd.f32 %v2209, %v2283
    %v2285 = vpop.f32.mrb[0].mxu0
    %2286 = vmatprep.mubr.f32.mxu0 0.0
    %2287 = vmatmul.mubr.f32.gmra.mrb[0].mxu0 %v2215
    %v2288 = vpop.f32.mrb[0].mxu0
    %v2289 = vadd.f32 %v2209, %v2288
    %v2290 = vpop.f32.mrb[0].mxu0
    %2291 = vdwg.mxu0
    %v2292 = vadd.f32 %v1434, %v2284
    %v2293 = vadd.f32 %v1435, %v2289
    %s2294 = scalar_lea.vmem [#allocation13], 1
    %v2295 = vld [vmem:[%s2294] sm:$0x1]
    %s2296 = scalar_lea.vmem [#allocation15], 1
    %v2297 = vld [vmem:[%s2296] sm:$0x1]
    %v2298 = vsel %vm239, %v2292, 0.0
    %2299 = vadd.xlane.f32.xlu0 %v2298
    %v2300 = vpop.xlane.xlu0 %2299
    %v2301 = vsel %vm239, %v2293, 0.0
    %2302 = vadd.xlane.f32.xlu0 %v2301
    %v2303 = vpop.xlane.xlu0 %2302
    %v2304 = vmul.f32 %v2300, %v246
    %v2305 = vmul.f32 %v2303, %v246
    %v2306 = vsub.f32 %v2292, %v2304
    %v2307 = vsub.f32 %v2293, %v2305
    %v2308 = vmul.f32 %v2306, %v2306
    %v2309 = vmul.f32 %v2307, %v2307
    %v2310 = vsel %vm239, %v2308, 0.0
    %2311 = vadd.xlane.f32.xlu0 %v2310
    %v2312 = vpop.xlane.xlu0 %2311
    %v2313 = vsel %vm239, %v2309, 0.0
    %2314 = vadd.xlane.f32.xlu0 %v2313
    %v2315 = vpop.xlane.xlu0 %2314
    %v2316 = vmul.f32 %v2312, %v246
    %v2317 = vmul.f32 %v2315, %v246
    %v2318 = vadd.f32 %v2316, 1e-12
    %v2319 = vadd.f32 %v2317, 1e-12
    %v2320 = vrsqrt.pop %v2318
    %v2321 = vrsqrt.pop %v2319
    %v2322 = vmul.f32 %v2306, %v2320
    %v2323 = vmul.f32 %v2307, %v2321
    %v2325 = vlaneseq
    %v2326 = vshrl.u32 %v2325, 7
    %v2327 = vsub.s32 0, %v2326
    %v2328 = vrot.slane %v2295, %v2327
    %v2330 = vmul.f32 %v2322, %v2328
    %v2331 = vmul.f32 %v2323, %v2328
    %v2333 = vlaneseq
    %v2334 = vshrl.u32 %v2333, 7
    %v2335 = vsub.s32 0, %v2334
    %v2336 = vrot.slane %v2297, %v2335
    %v2338 = vadd.f32 %v2330, %v2336
    %v2339 = vadd.f32 %v2331, %v2336
    %s2340 = scalar_lea.vmem %s10, 32
    %v2341 = vld [vmem:[%s2340] sm:$0xff]
    %v2342 = vld [vmem:[%s2340 + $0x8] sm:$0xff]
    %v2343 = vld [vmem:[%s2340 + $0x10] sm:$0xff]
    %v2344 = vld [vmem:[%s2340 + $0x18] sm:$0xff]
    %s2345 = scalar_lea.vmem [#allocation16], 1
    %v2346 = vld [vmem:[%s2345] sm:$0x1]
    %v2348 = vlaneseq
    %v2349 = vshrl.u32 %v2348, 7
    %v2350 = vsub.s32 0, %v2349
    %v2351 = vrot.slane %v2346, %v2350
    %v2354 = vsel %vm239, %v2338, 0
    %v2357 = vsel %vm239, %v2339, 0
    %2359 = vmatprep.subr.mxu0 0.0
    %2360 = vmatpush1.msra.mxu0 %v2341
    %2361 = vmatprep.subr.mxu0 0.0
    %2362 = vmatpush1.msra.mxu0 %v2342
    %2363 = vmatprep.subr.mxu0 0.0
    %2364 = vmatpush1.msra.mxu0 %v2343
    %2365 = vmatprep.subr.mxu0 0.0
    %2366 = vmatpush1.msra.mxu0 %v2344
    %2367 = vmatprep.subr.mxu0 0.0
    %2368 = vmatpush1.msra.mxu0 0.0
    %2369 = vmatprep.subr.mxu0 0.0
    %2370 = vmatpush1.msra.mxu0 0.0
    %2371 = vmatprep.subr.mxu0 0.0
    %2372 = vmatpush1.msra.mxu0 0.0
    %2373 = vmatprep.subr.mxu0 0.0
    %2374 = vmatpush1.msra.mxu0 0.0
    %2375 = vmatprep.subr.mxu0 0.0
    %2376 = vmatpush1.msra.mxu0 0.0
    %2377 = vmatprep.subr.mxu0 0.0
    %2378 = vmatpush1.msra.mxu0 0.0
    %2379 = vmatprep.subr.mxu0 0.0
    %2380 = vmatpush1.msra.mxu0 0.0
    %2381 = vmatprep.subr.mxu0 0.0
    %2382 = vmatpush1.msra.mxu0 0.0
    %2383 = vmatprep.subr.mxu0 0.0
    %2384 = vmatpush1.msra.mxu0 0.0
    %2385 = vmatprep.subr.mxu0 0.0
    %2386 = vmatpush1.msra.mxu0 0.0
    %2387 = vmatprep.subr.mxu0 0.0
    %2388 = vmatpush1.msra.mxu0 0.0
    %2389 = vmatprep.subr.mxu0 0.0
    %2390 = vmatpush1.msra.mxu0 0.0
    %2391 = vmatprep.subr.mxu0 0.0
    %2392 = vmatpush1.msra.mxu0 0.0
    %2393 = vmatprep.subr.mxu0 0.0
    %2394 = vmatpush1.msra.mxu0 0.0
    %2395 = vmatprep.subr.mxu0 0.0
    %2396 = vmatpush1.msra.mxu0 0.0
    %2397 = vmatprep.subr.mxu0 0.0
    %2398 = vmatpush1.msra.mxu0 0.0
    %2399 = vmatprep.subr.mxu0 0.0
    %2400 = vmatpush1.msra.mxu0 0.0
    %2401 = vmatprep.subr.mxu0 0.0
    %2402 = vmatpush1.msra.mxu0 0.0
    %2403 = vmatprep.subr.mxu0 0.0
    %2404 = vmatpush1.msra.mxu0 0.0
    %2405 = vmatprep.subr.mxu0 0.0
    %2406 = vmatpush1.msra.mxu0 0.0
    %2407 = vmatprep.subr.mxu0 0.0
    %2408 = vmatpush1.msra.mxu0 0.0
    %2409 = vmatprep.subr.mxu0 0.0
    %2410 = vmatpush1.msra.mxu0 0.0
    %2411 = vmatprep.subr.mxu0 0.0
    %2412 = vmatpush1.msra.mxu0 0.0
    %2413 = vmatprep.subr.mxu0 0.0
    %2414 = vmatpush1.msra.mxu0 0.0
    %2415 = vmatprep.subr.mxu0 0.0
    %2416 = vmatpush1.msra.mxu0 0.0
    %2417 = vmatprep.subr.mxu0 0.0
    %2418 = vmatpush1.msra.mxu0 0.0
    %2419 = vmatprep.subr.mxu0 0.0
    %2420 = vmatpush1.msra.mxu0 0.0
    %2421 = vmatprep.subr.mxu0 0.0
    %2422 = vmatpush1.msra.mxu0 0.0
    %2423 = vmatprep.mubr.f32.mxu0 0.0
    %2424 = vmatmul.mubr.f32.gmra.mrb[0].mxu0 %v2354
    %v2425 = vpop.f32.mrb[0].mxu0
    %v2426 = vadd.f32 %v2351, %v2425
    %v2427 = vpop.f32.mrb[0].mxu0
    %2428 = vmatprep.mubr.f32.mxu0 0.0
    %2429 = vmatmul.mubr.f32.gmra.mrb[0].mxu0 %v2357
    %v2430 = vpop.f32.mrb[0].mxu0
    %v2431 = vadd.f32 %v2351, %v2430
    %v2432 = vpop.f32.mrb[0].mxu0
    %2433 = vdwg.mxu0
    %v2434 = vmul.f32 %v2426, 0.5
    %v2435 = vmul.f32 %v2431, 0.5
    %v2436 = vmul.f32 %v2426, 0.044715
    %v2437 = vmul.f32 %v2431, 0.044715
    %v2438 = vmul.f32 %v2436, %v2426
    %v2439 = vmul.f32 %v2437, %v2431
    %v2440 = vmul.f32 %v2438, %v2426
    %v2441 = vmul.f32 %v2439, %v2431
    %v2442 = vadd.f32 %v2426, %v2440
    %v2443 = vadd.f32 %v2431, %v2441
    %v2444 = vmul.f32 %v2442, 0.7978846
    %v2445 = vmul.f32 %v2443, 0.7978846
    %v2446 = vtanh.pop %v2444
    %v2447 = vtanh.pop %v2445
    %v2448 = vadd.f32 %v2446, 1.0
    %v2449 = vadd.f32 %v2447, 1.0
    %v2450 = vmul.f32 %v2434, %v2448
    %v2451 = vmul.f32 %v2435, %v2449
    %s2452 = scalar_lea.vmem %s12, 64
    %v2453 = vld [vmem:[%s2452] sm:$0xff]
    %v2454 = vld [vmem:[%s2452 + $0x8] sm:$0xff]
    %v2455 = vld [vmem:[%s2452 + $0x10] sm:$0xff]
    %v2456 = vld [vmem:[%s2452 + $0x18] sm:$0xff]
    %v2457 = vld [vmem:[%s2452 + $0x20] sm:$0xff]
    %v2458 = vld [vmem:[%s2452 + $0x28] sm:$0xff]
    %v2459 = vld [vmem:[%s2452 + $0x30] sm:$0xff]
    %v2460 = vld [vmem:[%s2452 + $0x38] sm:$0xff]
    %s2461 = scalar_lea.vmem [#allocation18], 1
    %v2462 = vld [vmem:[%s2461] sm:$0x1]
    %v2464 = vlaneseq
    %v2465 = vshrl.u32 %v2464, 7
    %v2466 = vsub.s32 0, %v2465
    %v2467 = vrot.slane %v2462, %v2466
    %v2470 = vsel %vm1308, %v2450, 0
    %v2473 = vsel %vm1308, %v2451, 0
    %2475 = vmatprep.subr.mxu0 0.0
    %2476 = vmatpush1.msra.mxu0 %v2453
    %2477 = vmatprep.subr.mxu0 0.0
    %2478 = vmatpush1.msra.mxu0 %v2454
    %2479 = vmatprep.subr.mxu0 0.0
    %2480 = vmatpush1.msra.mxu0 %v2455
    %2481 = vmatprep.subr.mxu0 0.0
    %2482 = vmatpush1.msra.mxu0 %v2456
    %2483 = vmatprep.subr.mxu0 0.0
    %2484 = vmatpush1.msra.mxu0 %v2457
    %2485 = vmatprep.subr.mxu0 0.0
    %2486 = vmatpush1.msra.mxu0 %v2458
    %2487 = vmatprep.subr.mxu0 0.0
    %2488 = vmatpush1.msra.mxu0 %v2459
    %2489 = vmatprep.subr.mxu0 0.0
    %2490 = vmatpush1.msra.mxu0 %v2460
    %2491 = vmatprep.subr.mxu0 0.0
    %2492 = vmatpush1.msra.mxu0 0.0
    %2493 = vmatprep.subr.mxu0 0.0
    %2494 = vmatpush1.msra.mxu0 0.0
    %2495 = vmatprep.subr.mxu0 0.0
    %2496 = vmatpush1.msra.mxu0 0.0
    %2497 = vmatprep.subr.mxu0 0.0
    %2498 = vmatpush1.msra.mxu0 0.0
    %2499 = vmatprep.subr.mxu0 0.0
    %2500 = vmatpush1.msra.mxu0 0.0
    %2501 = vmatprep.subr.mxu0 0.0
    %2502 = vmatpush1.msra.mxu0 0.0
    %2503 = vmatprep.subr.mxu0 0.0
    %2504 = vmatpush1.msra.mxu0 0.0
    %2505 = vmatprep.subr.mxu0 0.0
    %2506 = vmatpush1.msra.mxu0 0.0
    %2507 = vmatprep.subr.mxu0 0.0
    %2508 = vmatpush1.msra.mxu0 0.0
    %2509 = vmatprep.subr.mxu0 0.0
    %2510 = vmatpush1.msra.mxu0 0.0
    %2511 = vmatprep.subr.mxu0 0.0
    %2512 = vmatpush1.msra.mxu0 0.0
    %2513 = vmatprep.subr.mxu0 0.0
    %2514 = vmatpush1.msra.mxu0 0.0
    %2515 = vmatprep.subr.mxu0 0.0
    %2516 = vmatpush1.msra.mxu0 0.0
    %2517 = vmatprep.subr.mxu0 0.0
    %2518 = vmatpush1.msra.mxu0 0.0
    %2519 = vmatprep.subr.mxu0 0.0
    %2520 = vmatpush1.msra.mxu0 0.0
    %2521 = vmatprep.subr.mxu0 0.0
    %2522 = vmatpush1.msra.mxu0 0.0
    %2523 = vmatprep.subr.mxu0 0.0
    %2524 = vmatpush1.msra.mxu0 0.0
    %2525 = vmatprep.subr.mxu0 0.0
    %2526 = vmatpush1.msra.mxu0 0.0
    %2527 = vmatprep.subr.mxu0 0.0
    %2528 = vmatpush1.msra.mxu0 0.0
    %2529 = vmatprep.subr.mxu0 0.0
    %2530 = vmatpush1.msra.mxu0 0.0
    %2531 = vmatprep.subr.mxu0 0.0
    %2532 = vmatpush1.msra.mxu0 0.0
    %2533 = vmatprep.subr.mxu0 0.0
    %2534 = vmatpush1.msra.mxu0 0.0
    %2535 = vmatprep.subr.mxu0 0.0
    %2536 = vmatpush1.msra.mxu0 0.0
    %2537 = vmatprep.subr.mxu0 0.0
    %2538 = vmatpush1.msra.mxu0 0.0
    %2539 = vmatprep.mubr.f32.mxu0 0.0
    %2540 = vmatmul.mubr.f32.gmra.mrb[0].mxu0 %v2470
    %v2541 = vpop.f32.mrb[0].mxu0
    %v2542 = vadd.f32 %v2467, %v2541
    %v2543 = vpop.f32.mrb[0].mxu0
    %2544 = vmatprep.mubr.f32.mxu0 0.0
    %2545 = vmatmul.mubr.f32.gmra.mrb[0].mxu0 %v2473
    %v2546 = vpop.f32.mrb[0].mxu0
    %v2547 = vadd.f32 %v2467, %v2546
    %v2548 = vpop.f32.mrb[0].mxu0
    %2549 = vdwg.mxu0
    %v2550 = vadd.f32 %v2338, %v2542
    %v2551 = vadd.f32 %v2339, %v2547
    %s2552 = scalar_lea.vmem [#allocation19], 1
    %v2553 = vld [vmem:[%s2552] sm:$0x1]
    %s2554 = scalar_lea.vmem [#allocation21], 1
    %v2555 = vld [vmem:[%s2554] sm:$0x1]
    %v2556 = vsel %vm239, %v2550, 0.0
    %2557 = vadd.xlane.f32.xlu0 %v2556
    %v2558 = vpop.xlane.xlu0 %2557
    %v2559 = vsel %vm239, %v2551, 0.0
    %2560 = vadd.xlane.f32.xlu0 %v2559
    %v2561 = vpop.xlane.xlu0 %2560
    %v2562 = vmul.f32 %v2558, %v246
    %v2563 = vmul.f32 %v2561, %v246
    %v2564 = vsub.f32 %v2550, %v2562
    %v2565 = vsub.f32 %v2551, %v2563
    %v2566 = vmul.f32 %v2564, %v2564
    %v2567 = vmul.f32 %v2565, %v2565
    %v2568 = vsel %vm239, %v2566, 0.0
    %2569 = vadd.xlane.f32.xlu0 %v2568
    %v2570 = vpop.xlane.xlu0 %2569
    %v2571 = vsel %vm239, %v2567, 0.0
    %2572 = vadd.xlane.f32.xlu0 %v2571
    %v2573 = vpop.xlane.xlu0 %2572
    %v2574 = vmul.f32 %v2570, %v246
    %v2575 = vmul.f32 %v2573, %v246
    %v2576 = vadd.f32 %v2574, 1e-12
    %v2577 = vadd.f32 %v2575, 1e-12
    %v2578 = vrsqrt.pop %v2576
    %v2579 = vrsqrt.pop %v2577
    %v2580 = vmul.f32 %v2564, %v2578
    %v2581 = vmul.f32 %v2565, %v2579
    %v2583 = vlaneseq
    %v2584 = vshrl.u32 %v2583, 7
    %v2585 = vsub.s32 0, %v2584
    %v2586 = vrot.slane %v2553, %v2585
    %v2588 = vmul.f32 %v2580, %v2586
    %v2589 = vmul.f32 %v2581, %v2586
    %v2591 = vlaneseq
    %v2592 = vshrl.u32 %v2591, 7
    %v2593 = vsub.s32 0, %v2592
    %v2594 = vrot.slane %v2555, %v2593
    %v2596 = vadd.f32 %v2588, %v2594
    %v2597 = vadd.f32 %v2589, %v2594
    %v2599 = vrot.slane %v2597, 7
    %vm2601 = vcmask 1040384
    %v2602 = vsel %vm2601, %v2596, %v2599
    %v2603 = vld [vmem:[%s16] sm:$0xff]
    %v2604 = vld [vmem:[%s16 + $0x8] sm:$0xff]
    %v2605 = vld [vmem:[%s16 + $0x10] sm:$0xff]
    %v2606 = vld [vmem:[%s16 + $0x18] sm:$0xff]
    %v2607 = vld [vmem:[#allocation22] sm:$0x1]
    %v2609 = vlaneseq
    %v2610 = vshrl.u32 %v2609, 7
    %v2611 = vsub.s32 0, %v2610
    %v2612 = vrot.slane %v2607, %v2611
    %v2615 = vsel %vm239, %v2602, 0
    %2617 = vmatprep.subr.mxu0 0.0
    %2618 = vmatpush1.msra.mxu0 %v2603
    %2619 = vmatprep.subr.mxu0 0.0
    %2620 = vmatpush1.msra.mxu0 %v2604
    %2621 = vmatprep.subr.mxu0 0.0
    %2622 = vmatpush1.msra.mxu0 %v2605
    %2623 = vmatprep.subr.mxu0 0.0
    %2624 = vmatpush1.msra.mxu0 %v2606
    %2625 = vmatprep.subr.mxu0 0.0
    %2626 = vmatpush1.msra.mxu0 0.0
    %2627 = vmatprep.subr.mxu0 0.0
    %2628 = vmatpush1.msra.mxu0 0.0
    %2629 = vmatprep.subr.mxu0 0.0
    %2630 = vmatpush1.msra.mxu0 0.0
    %2631 = vmatprep.subr.mxu0 0.0
    %2632 = vmatpush1.msra.mxu0 0.0
    %2633 = vmatprep.subr.mxu0 0.0
    %2634 = vmatpush1.msra.mxu0 0.0
    %2635 = vmatprep.subr.mxu0 0.0
    %2636 = vmatpush1.msra.mxu0 0.0
    %2637 = vmatprep.subr.mxu0 0.0
    %2638 = vmatpush1.msra.mxu0 0.0
    %2639 = vmatprep.subr.mxu0 0.0
    %2640 = vmatpush1.msra.mxu0 0.0
    %2641 = vmatprep.subr.mxu0 0.0
    %2642 = vmatpush1.msra.mxu0 0.0
    %2643 = vmatprep.subr.mxu0 0.0
    %2644 = vmatpush1.msra.mxu0 0.0
    %2645 = vmatprep.subr.mxu0 0.0
    %2646 = vmatpush1.msra.mxu0 0.0
    %2647 = vmatprep.subr.mxu0 0.0
    %2648 = vmatpush1.msra.mxu0 0.0
    %2649 = vmatprep.subr.mxu0 0.0
    %2650 = vmatpush1.msra.mxu0 0.0
    %2651 = vmatprep.subr.mxu0 0.0
    %2652 = vmatpush1.msra.mxu0 0.0
    %2653 = vmatprep.subr.mxu0 0.0
    %2654 = vmatpush1.msra.mxu0 0.0
    %2655 = vmatprep.subr.mxu0 0.0
    %2656 = vmatpush1.msra.mxu0 0.0
    %2657 = vmatprep.subr.mxu0 0.0
    %2658 = vmatpush1.msra.mxu0 0.0
    %2659 = vmatprep.subr.mxu0 0.0
    %2660 = vmatpush1.msra.mxu0 0.0
    %2661 = vmatprep.subr.mxu0 0.0
    %2662 = vmatpush1.msra.mxu0 0.0
    %2663 = vmatprep.subr.mxu0 0.0
    %2664 = vmatpush1.msra.mxu0 0.0
    %2665 = vmatprep.subr.mxu0 0.0
    %2666 = vmatpush1.msra.mxu0 0.0
    %2667 = vmatprep.subr.mxu0 0.0
    %2668 = vmatpush1.msra.mxu0 0.0
    %2669 = vmatprep.subr.mxu0 0.0
    %2670 = vmatpush1.msra.mxu0 0.0
    %2671 = vmatprep.subr.mxu0 0.0
    %2672 = vmatpush1.msra.mxu0 0.0
    %2673 = vmatprep.subr.mxu0 0.0
    %2674 = vmatpush1.msra.mxu0 0.0
    %2675 = vmatprep.subr.mxu0 0.0
    %2676 = vmatpush1.msra.mxu0 0.0
    %2677 = vmatprep.subr.mxu0 0.0
    %2678 = vmatpush1.msra.mxu0 0.0
    %2679 = vmatprep.subr.mxu0 0.0
    %2680 = vmatpush1.msra.mxu0 0.0
    %2681 = vmatprep.mubr.f32.mxu0 0.0
    %2682 = vmatmul.mubr.f32.gmra.mrb[0].mxu0 %v2615
    %v2683 = vpop.f32.mrb[0].mxu0
    %v2684 = vadd.f32 %v2612, %v2683
    %v2685 = vpop.f32.mrb[0].mxu0
    %2686 = vdwg.mxu0
    %v2687 = vtanh.pop %v2684
    %v2688 = vld [vmem:[%s18] sm:$0xff]
    %v2689 = vld [vmem:[%s18 + $0x8] sm:$0xff]
    %v2690 = vld [vmem:[%s18 + $0x10] sm:$0xff]
    %v2691 = vld [vmem:[%s18 + $0x18] sm:$0xff]
    %v2692 = vld [vmem:[%s19] sm:$0x1]
    %v2694 = vlaneseq
    %v2695 = vshrl.u32 %v2694, 7
    %v2696 = vsub.s32 0, %v2695
    %v2697 = vrot.slane %v2692, %v2696
    %v2700 = vsel %vm239, %v2687, 0
    %2702 = vmatprep.subr.mxu0 0.0
    %2703 = vmatpush1.msra.mxu0 %v2688
    %2704 = vmatprep.subr.mxu0 0.0
    %2705 = vmatpush1.msra.mxu0 %v2689
    %2706 = vmatprep.subr.mxu0 0.0
    %2707 = vmatpush1.msra.mxu0 %v2690
    %2708 = vmatprep.subr.mxu0 0.0
    %2709 = vmatpush1.msra.mxu0 %v2691
    %2710 = vmatprep.subr.mxu0 0.0
    %2711 = vmatpush1.msra.mxu0 0.0
    %2712 = vmatprep.subr.mxu0 0.0
    %2713 = vmatpush1.msra.mxu0 0.0
    %2714 = vmatprep.subr.mxu0 0.0
    %2715 = vmatpush1.msra.mxu0 0.0
    %2716 = vmatprep.subr.mxu0 0.0
    %2717 = vmatpush1.msra.mxu0 0.0
    %2718 = vmatprep.subr.mxu0 0.0
    %2719 = vmatpush1.msra.mxu0 0.0
    %2720 = vmatprep.subr.mxu0 0.0
    %2721 = vmatpush1.msra.mxu0 0.0
    %2722 = vmatprep.subr.mxu0 0.0
    %2723 = vmatpush1.msra.mxu0 0.0
    %2724 = vmatprep.subr.mxu0 0.0
    %2725 = vmatpush1.msra.mxu0 0.0
    %2726 = vmatprep.subr.mxu0 0.0
    %2727 = vmatpush1.msra.mxu0 0.0
    %2728 = vmatprep.subr.mxu0 0.0
    %2729 = vmatpush1.msra.mxu0 0.0
    %2730 = vmatprep.subr.mxu0 0.0
    %2731 = vmatpush1.msra.mxu0 0.0
    %2732 = vmatprep.subr.mxu0 0.0
    %2733 = vmatpush1.msra.mxu0 0.0
    %2734 = vmatprep.subr.mxu0 0.0
    %2735 = vmatpush1.msra.mxu0 0.0
    %2736 = vmatprep.subr.mxu0 0.0
    %2737 = vmatpush1.msra.mxu0 0.0
    %2738 = vmatprep.subr.mxu0 0.0
    %2739 = vmatpush1.msra.mxu0 0.0
    %2740 = vmatprep.subr.mxu0 0.0
    %2741 = vmatpush1.msra.mxu0 0.0
    %2742 = vmatprep.subr.mxu0 0.0
    %2743 = vmatpush1.msra.mxu0 0.0
    %2744 = vmatprep.subr.mxu0 0.0
    %2745 = vmatpush1.msra.mxu0 0.0
    %2746 = vmatprep.subr.mxu0 0.0
    %2747 = vmatpush1.msra.mxu0 0.0
    %2748 = vmatprep.subr.mxu0 0.0
    %2749 = vmatpush1.msra.mxu0 0.0
    %2750 = vmatprep.subr.mxu0 0.0
    %2751 = vmatpush1.msra.mxu0 0.0
    %2752 = vmatprep.subr.mxu0 0.0
    %2753 = vmatpush1.msra.mxu0 0.0
    %2754 = vmatprep.subr.mxu0 0.0
    %2755 = vmatpush1.msra.mxu0 0.0
    %2756 = vmatprep.subr.mxu0 0.0
    %2757 = vmatpush1.msra.mxu0 0.0
    %2758 = vmatprep.subr.mxu0 0.0
    %2759 = vmatpush1.msra.mxu0 0.0
    %2760 = vmatprep.subr.mxu0 0.0
    %2761 = vmatpush1.msra.mxu0 0.0
    %2762 = vmatprep.subr.mxu0 0.0
    %2763 = vmatpush1.msra.mxu0 0.0
    %2764 = vmatprep.subr.mxu0 0.0
    %2765 = vmatpush1.msra.mxu0 0.0
    %2766 = vmatprep.mubr.f32.mxu0 0.0
    %2767 = vmatmul.mubr.f32.gmra.mrb[0].mxu0 %v2700
    %v2768 = vpop.f32.mrb[0].mxu0
    %v2769 = vadd.f32 %v2697, %v2768
    %v2770 = vpop.f32.mrb[0].mxu0
    %2771 = vdwg.mxu0
    %2772 = vst [vmem:[#allocation24] sm:$0x3] %v2769
    // Predicated region
    $region126: #{tpu_custom_call.1} parent=1 // pred_check
      _
    $region127: #{tpu_custom_call.1} parent=1 // pred_check_branch
      %2774 = sbr.rel (0) target = $region129
    $region128: #{tpu_custom_call.1} parent=1 // pred_region
      %s2776 = ssub.s32 32, 32
      %2777 = vsyncadd [#allocation6], %s2776
      %s2779 = sshll.u32 [#allocation24], 4
      %s2780 = int_to_ptr.vmem [resolvable:$true] %s2779
      %2782 = dma.vmem_to_hbm [thread:$0]  %s2780, 32, %s20, [#allocation6]
    $region129: #{tpu_custom_call.1} parent=1 // pred_fallthru
      _
    // Predicated region
    $region130: #{tpu_custom_call.1} parent=1 // pred_check
      _
    $region131: #{tpu_custom_call.1} parent=1 // pred_check_branch
      %2784 = sbr.rel (0) target = $region133
    $region132: #{tpu_custom_call.1} parent=1 // pred_region
      %2785 = dma.done [#allocation6], 32
    $region133: #{tpu_custom_call.1} parent=1 // pred_fallthru
      _
    %2786 = vsyncpa [#allocation5], 1
    %2787 = vsyncpa [#allocation8], 1
    %2788 = vsyncpa [#allocation11], 1
    %2789 = vsyncpa [#allocation14], 1
    %2790 = vsyncpa [#allocation17], 1
    %2791 = vsyncpa [#allocation20], 1
    %2792 = vsyncpa [#allocation23], 1
    %2793 = vsyncpa [#allocation6], 1

</llo_original>
